<compile_context>
chip_gen: v7x
topology: tpu7x:2x2x1
jax: 0.10.0
libtpu: 0.0.40
codegen_flags: <defaults>
</compile_context>

<pallas_src>
import functools

import jax
import jax.numpy as jnp
from jax.experimental import pallas as pl
from jax.experimental.pallas import tpu as pltpu


# Safe across v5e (16 MiB default / 128 MiB phys), v6e (32 / 128) and
# v7x (32 / 64): raise the scoped limit well above the defaults without
# exceeding v7x's physical 64 MiB.
_VMEM_LIMIT_BYTES = 48 * 1024 * 1024
_VMEM_CHUNK_BUDGET = 32 * 1024 * 1024   # what the Tc chooser may spend


def _choose_time_chunk(T, B, din, H, max_chunk=16):
    """Largest time chunk Tc dividing T whose pipelined blocks fit the budget."""
    def chunk_bytes(tc):
        rows = tc * B
        x_blk = 2 * rows * din * 4            # double-buffered input chunk
        y_blk = 2 * rows * H * 4              # double-buffered output chunk
        gi = rows * 3 * H * 4                 # in-kernel gi scratch
        w = (din + H) * 3 * H * 4 + 4 * H * 4  # resident weights + biases
        return x_blk + y_blk + gi + w + B * H * 4
    best = None
    for c in range(1, min(T, max_chunk) + 1):
        if T % c != 0:
            continue
        # (8,128) rule: a partial row block must have its sublane dim % 8 == 0.
        if c != T and (c * B) % 8 != 0:
            continue
        if chunk_bytes(c) <= _VMEM_CHUNK_BUDGET:
            best = c
    return best if best is not None else T


# -----------------------------------------------------------------------------
# Fused GRU layer kernel: one grid step = one time chunk of Tc steps.
#   gi  = x_chunk @ W_ih_cat + b_i          (one wide MXU matmul, hoisted)
#   per step:
#     gh = h @ W_hh_cat                     (one wide MXU matmul)
#     r  = sigmoid(gi_r + gh_r)             (b_ir + b_hr folded into b_i)
#     z  = sigmoid(gi_z + gh_z)
#     n  = tanh   (gi_n + r * (gh_n + b_hn))
#     h  = n + z * (h - n)
#   The FC head (h_T @ W_fc + b_fc) is fused into the last grid step of the
#   final layer.  Gate order (r, z, n) matches torch.nn.GRU.
# -----------------------------------------------------------------------------
def gru_layer_kernel(*refs, batch, emit_seq, fc_head, matmul_dtype):
    n_in = 7 if fc_head else 5
    x_ref, w_ih_ref, b_i_ref, w_hh_ref, b_hn_ref = refs[:5]
    fcw_ref = refs[5] if fc_head else None
    fcb_ref = refs[6] if fc_head else None
    rest = refs[n_in:]

    pos = 0
    y_ref = None
    if emit_seq:
        y_ref = rest[pos]
        pos += 1
    hn_ref = rest[pos]
    pos += 1
    out_ref = None
    if fc_head:
        out_ref = rest[pos]
        pos += 1
    h_scr, gi_scr = rest[pos], rest[pos + 1]

    B = batch
    H = w_hh_ref.shape[0]
    rows = x_ref.shape[0]
    Tc = rows // B

    c = pl.program_id(0)

    @pl.when(c == 0)
    def _():
        h_scr[...] = jnp.zeros_like(h_scr)

    # Hoisted input projection for the whole chunk: one (Tc*B, Din)x(Din, 3H)
    # MXU matmul (bf16 operands optional, f32 accumulation).
    gi_scr[...] = (
        jnp.dot(x_ref[...].astype(matmul_dtype), w_ih_ref[...],
                preferred_element_type=jnp.float32)
        + b_i_ref[...]
    )

    # Hoist invariant weight / bias loads out of the time loop.
    w_hh = w_hh_ref[...]
    b_hn = b_hn_ref[...]

    h = h_scr[...]
    # Static Python loop => all slices are static (robust lowering).  Tc is
    # kept small and VMEM-aware so the unrolled code stays bounded.
    # TODO(synk): at production tile sizes switch to lax.fori_loop(unroll=4..8).
    for i in range(Tc):
        gi_t = gi_scr[i * B:(i + 1) * B, :]                       # (B, 3H)
        gh = jnp.dot(h.astype(matmul_dtype), w_hh,
                     preferred_element_type=jnp.float32)          # (B, 3H)
        r = jax.nn.sigmoid(gi_t[:, 0:H] + gh[:, 0:H])
        z = jax.nn.sigmoid(gi_t[:, H:2 * H] + gh[:, H:2 * H])
        n = jnp.tanh(gi_t[:, 2 * H:3 * H] + r * (gh[:, 2 * H:3 * H] + b_hn))
        h = n + z * (h - n)                                       # (1-z)n + zh
        if emit_seq:
            y_ref[i * B:(i + 1) * B, :] = h.astype(y_ref.dtype)
    h_scr[...] = h

    @pl.when(c == pl.num_programs(0) - 1)
    def _():
        hn_ref[...] = h
        if fc_head:
            out_ref[...] = (
                jnp.dot(h.astype(matmul_dtype), fcw_ref[...],
                        preferred_element_type=jnp.float32)
                + fcb_ref[...]
            )


def run_gru_layer(x_flat, w_ih_cat, b_i, w_hh_cat, b_hn, *, batch, time_chunk,
                  emit_seq=True, fc_w=None, fc_b=None,
                  matmul_dtype=jnp.float32, out_dtype=jnp.float32):
    """x_flat: (T*B, Din) time-major-flattened; weights gate-concatenated.

    Returns (y_seq (T*B, H), hn (B, H)) when emit_seq, else (hn, fc_out)."""
    rows_total, din = x_flat.shape
    T = rows_total // batch
    H = w_hh_cat.shape[0]
    Tc = time_chunk
    assert T % Tc == 0
    n_chunks = T // Tc
    rows = Tc * batch
    fc_head = fc_w is not None

    kernel = functools.partial(gru_layer_kernel, batch=batch, emit_seq=emit_seq,
                               fc_head=fc_head, matmul_dtype=matmul_dtype)

    in_specs = [
        pl.BlockSpec((rows, din), lambda c: (c, 0)),
        pl.BlockSpec((din, 3 * H), lambda c: (0, 0)),
        pl.BlockSpec((1, 3 * H), lambda c: (0, 0)),
        pl.BlockSpec((H, 3 * H), lambda c: (0, 0)),
        pl.BlockSpec((1, H), lambda c: (0, 0)),
    ]
    inputs = [x_flat, w_ih_cat, b_i, w_hh_cat, b_hn]
    if fc_head:
        O = fc_w.shape[1]
        in_specs += [pl.BlockSpec((H, O), lambda c: (0, 0)),
                     pl.BlockSpec((1, O), lambda c: (0, 0))]
        inputs += [fc_w, fc_b]

    out_shapes, out_specs = [], []
    if emit_seq:
        out_shapes.append(jax.ShapeDtypeStruct((rows_total, H), out_dtype))
        out_specs.append(pl.BlockSpec((rows, H), lambda c: (c, 0)))
    out_shapes.append(jax.ShapeDtypeStruct((batch, H), jnp.float32))
    out_specs.append(pl.BlockSpec((batch, H), lambda c: (0, 0)))
    if fc_head:
        out_shapes.append(jax.ShapeDtypeStruct((batch, O), jnp.float32))
        out_specs.append(pl.BlockSpec((batch, O), lambda c: (0, 0)))

    return pl.pallas_call(
        kernel,
        out_shape=tuple(out_shapes),
        grid=(n_chunks,),
        in_specs=in_specs,
        out_specs=tuple(out_specs),
        scratch_shapes=[
            pltpu.VMEM((batch, H), jnp.float32),       # carried hidden state
            pltpu.VMEM((rows, 3 * H), jnp.float32),    # chunk's input gates
        ],
        compiler_params=pltpu.CompilerParams(
            dimension_semantics=("arbitrary",),        # sequential time chunks
            vmem_limit_bytes=_VMEM_LIMIT_BYTES),
    )(*inputs)


# -----------------------------------------------------------------------------
# Full forward: multi-layer GRU + fused Linear on the last timestep.
# -----------------------------------------------------------------------------
@functools.partial(jax.jit, static_argnames=("matmul_dtype",))
def rnn_forward(x_btd, params, matmul_dtype=jnp.float32):
    """x_btd: (B, T, input_size).  Returns (out (B, O), hn (L, B, H))."""
    B, T, Din = x_btd.shape

    # Single cheap transpose of the small raw input; everything downstream is
    # a time-major-flattened (T*B, D) slab (lane-dense, no further transposes).
    x_tb = jnp.transpose(x_btd, (1, 0, 2)).astype(jnp.float32)
    layer_in = x_tb.reshape(T * B, Din).astype(matmul_dtype)

    num_layers = len(params["layers"])
    h_finals = []
    out = None
    for li, lp in enumerate(params["layers"]):
        din = lp["w_ih_cat"].shape[0]
        H = lp["w_hh_cat"].shape[0]
        Tc = _choose_time_chunk(T, B, din, H)
        w_ih = lp["w_ih_cat"].astype(matmul_dtype)   # halves weight DMA in bf16
        w_hh = lp["w_hh_cat"].astype(matmul_dtype)
        is_last = li == num_layers - 1
        if is_last:
            hn_l, out = run_gru_layer(
                layer_in, w_ih, lp["b_i"], w_hh, lp["b_hn"],
                batch=B, time_chunk=Tc, emit_seq=False,
                fc_w=params["fc_w_t"].astype(matmul_dtype), fc_b=params["fc_b"],
                matmul_dtype=matmul_dtype)
        else:
            y, hn_l = run_gru_layer(
                layer_in, w_ih, lp["b_i"], w_hh, lp["b_hn"],
                batch=B, time_chunk=Tc, emit_seq=True,
                matmul_dtype=matmul_dtype, out_dtype=matmul_dtype)
            layer_in = y
        h_finals.append(hn_l)

    hn = jnp.stack(h_finals, axis=0)                 # (num_layers, B, H)
    return out, hn


# -----------------------------------------------------------------------------
# Parameter init (PyTorch-style uniform(-1/sqrt(H), 1/sqrt(H))).  Returns both
# the packed/folded kernel params and the raw PyTorch-layout tensors (used
# only by the pure-JAX reference, so the folding itself is validated).
# -----------------------------------------------------------------------------
def init_params(key, input_size, hidden_size, output_size, num_layers):
    H = hidden_size
    k = 1.0 / (H ** 0.5)
    keys = jax.random.split(key, num_layers * 4 + 2)
    layers, raw_layers = [], []
    for layer in range(num_layers):
        din = input_size if layer == 0 else H
        k0, k1, k2, k3 = keys[layer * 4: layer * 4 + 4]
        w_ih = jax.random.uniform(k0, (3 * H, din), jnp.float32, -k, k)
        w_hh = jax.random.uniform(k1, (3 * H, H), jnp.float32, -k, k)
        b_ih = jax.random.uniform(k2, (3 * H,), jnp.float32, -k, k)
        b_hh = jax.random.uniform(k3, (3 * H,), jnp.float32, -k, k)
        raw_layers.append(dict(w_ih=w_ih, w_hh=w_hh, b_ih=b_ih, b_hh=b_hh))
        # Fold b_hh[r] and b_hh[z] into the input bias; keep b_hh[n] separate
        # (it is multiplied by r inside the tanh gate).
        b_fold = b_ih + jnp.concatenate(
            [b_hh[:2 * H], jnp.zeros((H,), jnp.float32)])
        layers.append(dict(
            w_ih_cat=jnp.transpose(w_ih),            # (din, 3H), gates on lanes
            w_hh_cat=jnp.transpose(w_hh),            # (H, 3H)
            b_i=b_fold.reshape(1, 3 * H),
            b_hn=b_hh[2 * H:].reshape(1, H),
        ))
    kw, kb = keys[-2], keys[-1]
    fc_w = jax.random.uniform(kw, (output_size, H), jnp.float32, -k, k)
    fc_b = jax.random.uniform(kb, (output_size,), jnp.float32, -k, k)
    params = dict(layers=layers, fc_w_t=jnp.transpose(fc_w),
                  fc_b=fc_b.reshape(1, -1))
    raw = dict(layers=raw_layers, fc_w=fc_w, fc_b=fc_b)
    return params, raw


# -----------------------------------------------------------------------------
# Pure-JAX reference using the raw PyTorch-layout tensors and the canonical
# torch.nn.GRU equations (validates gate packing + bias folding + blend).
# -----------------------------------------------------------------------------
def rnn_forward_ref(x_btd, raw):
    x_tb = jnp.transpose(x_btd, (1, 0, 2)).astype(jnp.float32)
    T, B, _ = x_tb.shape
    h_finals = []
    layer_in = x_tb
    for lp in raw["layers"]:
        H = lp["w_hh"].shape[1]
        h = jnp.zeros((B, H), jnp.float32)
        ys = []
        for t in range(T):
            x_t = layer_in[t]
            gi = x_t @ lp["w_ih"].T + lp["b_ih"]
            gh = h @ lp["w_hh"].T + lp["b_hh"]
            r = jax.nn.sigmoid(gi[:, :H] + gh[:, :H])
            z = jax.nn.sigmoid(gi[:, H:2 * H] + gh[:, H:2 * H])
            n = jnp.tanh(gi[:, 2 * H:] + r * gh[:, 2 * H:])
            h = (1.0 - z) * n + z * h
            ys.append(h)
        layer_in = jnp.stack(ys, axis=0)
        h_finals.append(h)
    out = layer_in[-1] @ raw["fc_w"].T + raw["fc_b"]
    return out, jnp.stack(h_finals, axis=0)


if __name__ == "__main__":
    B, T = 2, 8
    input_size, hidden_size, output_size, num_layers = 16, 32, 8, 2

    key = jax.random.PRNGKey(0)
    pkey, xkey = jax.random.split(key)
    params, raw = init_params(pkey, input_size, hidden_size, output_size,
                              num_layers)
    x = jax.random.normal(xkey, (B, T, input_size), jnp.float32)

    # f32 path: exact-semantics check against the pure-JAX reference.
    out, hn = jax.block_until_ready(rnn_forward(x, params))
    out_ref, hn_ref = rnn_forward_ref(x, raw)
    assert out.shape == (B, output_size)
    assert hn.shape == (num_layers, B, hidden_size)
    assert jnp.allclose(out, out_ref, rtol=1e-5, atol=1e-5)
    assert jnp.allclose(hn, hn_ref, rtol=1e-5, atol=1e-5)

    # bf16 MXU-operand path (f32 accumulation, f32 carried state): sanity check.
    out_bf, hn_bf = jax.block_until_ready(
        rnn_forward(x, params, matmul_dtype=jnp.bfloat16))
    assert jnp.allclose(out_bf, out_ref, rtol=1e-1, atol=1e-1)
    assert jnp.allclose(hn_bf, hn_ref, rtol=1e-1, atol=1e-1)

    print("KERNEL_OK")
</pallas_src>

<mosaic_0001>
module attributes {stable_mosaic.version = 11 : i64} {
  func.func @gru_layer_kernel(%arg0: i32, %arg1: memref<16x32xf32, #tpu.memory_space<vmem>>, %arg2: memref<32x96xf32, #tpu.memory_space<vmem>>, %arg3: memref<1x96xf32, #tpu.memory_space<vmem>>, %arg4: memref<32x96xf32, #tpu.memory_space<vmem>>, %arg5: memref<1x32xf32, #tpu.memory_space<vmem>>, %arg6: memref<32x8xf32, #tpu.memory_space<vmem>>, %arg7: memref<1x8xf32, #tpu.memory_space<vmem>>, %arg8: memref<2x32xf32, #tpu.memory_space<vmem>>, %arg9: memref<2x8xf32, #tpu.memory_space<vmem>>, %arg10: memref<2x32xf32, #tpu.memory_space<vmem>>, %arg11: memref<16x96xf32, #tpu.memory_space<vmem>>) attributes {dimension_semantics = [#tpu.dimension_semantics<arbitrary>], iteration_bounds = array<i64: 1>, scalar_prefetch = 0 : i64, scratch_operands = 2 : i64, tpu.core_type = #tpu.core_type<tc>, window_params = [{transform_indices = @transform_0, window_bounds = array<i64: 16, 32>}, {pipeline_mode = #tpu.pipeline_mode<synchronous>, transform_indices = @transform_1, window_bounds = array<i64: 32, 96>}, {pipeline_mode = #tpu.pipeline_mode<synchronous>, transform_indices = @transform_2, window_bounds = array<i64: 1, 96>}, {pipeline_mode = #tpu.pipeline_mode<synchronous>, transform_indices = @transform_3, window_bounds = array<i64: 32, 96>}, {pipeline_mode = #tpu.pipeline_mode<synchronous>, transform_indices = @transform_4, window_bounds = array<i64: 1, 32>}, {pipeline_mode = #tpu.pipeline_mode<synchronous>, transform_indices = @transform_5, window_bounds = array<i64: 32, 8>}, {pipeline_mode = #tpu.pipeline_mode<synchronous>, transform_indices = @transform_6, window_bounds = array<i64: 1, 8>}, {pipeline_mode = #tpu.pipeline_mode<synchronous>, transform_indices = @transform_7, window_bounds = array<i64: 2, 32>}, {pipeline_mode = #tpu.pipeline_mode<synchronous>, transform_indices = @transform_8, window_bounds = array<i64: 2, 8>}]} {
    %c0_i32 = arith.constant 0 : i32
    %0 = arith.cmpi eq, %arg0, %c0_i32 : i32
    %1 = arith.extui %0 : i1 to i32
    %c0_i32_0 = arith.constant 0 : i32
    %2 = arith.cmpi ne, %1, %c0_i32_0 : i32
    scf.if %2 {
      %cst_51 = arith.constant 0.000000e+00 : f32
      %241 = vector.broadcast %cst_51 : f32 to vector<2x32xf32>
      %c0_52 = arith.constant 0 : index
      %c0_53 = arith.constant 0 : index
      %242 = vector.load %arg10[%c0_52, %c0_53] : memref<2x32xf32, #tpu.memory_space<vmem>>, vector<2x32xf32>
      tpu.vector_store %arg10[%c0_52, %c0_53], %241 {strides = array<i32>} : memref<2x32xf32, #tpu.memory_space<vmem>>, vector<2x32xf32>,
    } else {
    }
    %c0 = arith.constant 0 : index
    %c0_1 = arith.constant 0 : index
    %3 = vector.load %arg1[%c0, %c0_1] : memref<16x32xf32, #tpu.memory_space<vmem>>, vector<16x32xf32>
    %c0_2 = arith.constant 0 : index
    %c0_3 = arith.constant 0 : index
    %4 = vector.load %arg2[%c0_2, %c0_3] : memref<32x96xf32, #tpu.memory_space<vmem>>, vector<32x96xf32>
    %cst = arith.constant dense<0.000000e+00> : vector<16x96xf32>
    %5 = tpu.matmul %3, %4, %cst {dimension_numbers = #tpu.dot_dimension_numbers<[1], [0], [0], [1], [0, 0, 1, 1], [], []>} : vector<16x32xf32>, vector<32x96xf32>, vector<16x96xf32> -> vector<16x96xf32>
    %c0_4 = arith.constant 0 : index
    %c0_5 = arith.constant 0 : index
    %6 = vector.load %arg3[%c0_4, %c0_5] : memref<1x96xf32, #tpu.memory_space<vmem>>, vector<1x96xf32>
    %7 = vector.broadcast %6 : vector<1x96xf32> to vector<16x96xf32>
    %8 = arith.addf %5, %7 : vector<16x96xf32>
    %c0_6 = arith.constant 0 : index
    %c0_7 = arith.constant 0 : index
    %9 = vector.load %arg11[%c0_6, %c0_7] : memref<16x96xf32, #tpu.memory_space<vmem>>, vector<16x96xf32>
    tpu.vector_store %arg11[%c0_6, %c0_7], %8 {strides = array<i32>} : memref<16x96xf32, #tpu.memory_space<vmem>>, vector<16x96xf32>,
    %c0_8 = arith.constant 0 : index
    %c0_9 = arith.constant 0 : index
    %10 = vector.load %arg4[%c0_8, %c0_9] : memref<32x96xf32, #tpu.memory_space<vmem>>, vector<32x96xf32>
    %c0_10 = arith.constant 0 : index
    %c0_11 = arith.constant 0 : index
    %11 = vector.load %arg5[%c0_10, %c0_11] : memref<1x32xf32, #tpu.memory_space<vmem>>, vector<1x32xf32>
    %c0_12 = arith.constant 0 : index
    %c0_13 = arith.constant 0 : index
    %12 = vector.load %arg10[%c0_12, %c0_13] : memref<2x32xf32, #tpu.memory_space<vmem>>, vector<2x32xf32>
    %c0_14 = arith.constant 0 : index
    %c0_15 = arith.constant 0 : index
    %13 = vector.load %arg11[%c0_14, %c0_15] : memref<16x96xf32, #tpu.memory_space<vmem>>, vector<2x96xf32>
    %cst_16 = arith.constant dense<0.000000e+00> : vector<2x96xf32>
    %14 = tpu.matmul %12, %10, %cst_16 {dimension_numbers = #tpu.dot_dimension_numbers<[1], [0], [0], [1], [0, 0, 1, 1], [], []>} : vector<2x32xf32>, vector<32x96xf32>, vector<2x96xf32> -> vector<2x96xf32>
    %15 = vector.extract_strided_slice %13 {offsets = [0, 0], sizes = [2, 32], strides = [1, 1]} : vector<2x96xf32> to vector<2x32xf32>
    %16 = vector.extract_strided_slice %14 {offsets = [0, 0], sizes = [2, 32], strides = [1, 1]} : vector<2x96xf32> to vector<2x32xf32>
    %17 = arith.addf %15, %16 : vector<2x32xf32>
    %18 = arith.negf %17 : vector<2x32xf32>
    %19 = math.exp %18 : vector<2x32xf32>
    %cst_17 = arith.constant 1.000000e+00 : f32
    %20 = vector.broadcast %cst_17 : f32 to vector<2x32xf32>
    %21 = arith.addf %20, %19 : vector<2x32xf32>
    %22 = arith.divf %20, %21 : vector<2x32xf32>
    %23 = vector.extract_strided_slice %13 {offsets = [0, 32], sizes = [2, 32], strides = [1, 1]} : vector<2x96xf32> to vector<2x32xf32>
    %24 = vector.extract_strided_slice %14 {offsets = [0, 32], sizes = [2, 32], strides = [1, 1]} : vector<2x96xf32> to vector<2x32xf32>
    %25 = arith.addf %23, %24 : vector<2x32xf32>
    %26 = arith.negf %25 : vector<2x32xf32>
    %27 = math.exp %26 : vector<2x32xf32>
    %cst_18 = arith.constant 1.000000e+00 : f32
    %28 = vector.broadcast %cst_18 : f32 to vector<2x32xf32>
    %29 = arith.addf %28, %27 : vector<2x32xf32>
    %30 = arith.divf %28, %29 : vector<2x32xf32>
    %31 = vector.extract_strided_slice %13 {offsets = [0, 64], sizes = [2, 32], strides = [1, 1]} : vector<2x96xf32> to vector<2x32xf32>
    %32 = vector.extract_strided_slice %14 {offsets = [0, 64], sizes = [2, 32], strides = [1, 1]} : vector<2x96xf32> to vector<2x32xf32>
    %33 = vector.broadcast %11 : vector<1x32xf32> to vector<2x32xf32>
    %34 = arith.addf %32, %33 : vector<2x32xf32>
    %35 = arith.mulf %22, %34 : vector<2x32xf32>
    %36 = arith.addf %31, %35 : vector<2x32xf32>
    %37 = math.tanh %36 : vector<2x32xf32>
    %38 = arith.subf %12, %37 : vector<2x32xf32>
    %39 = arith.mulf %30, %38 : vector<2x32xf32>
    %40 = arith.addf %37, %39 : vector<2x32xf32>
    %c2 = arith.constant 2 : index
    %c0_19 = arith.constant 0 : index
    %41 = vector.load %arg11[%c2, %c0_19] : memref<16x96xf32, #tpu.memory_space<vmem>>, vector<2x96xf32>
    %cst_20 = arith.constant dense<0.000000e+00> : vector<2x96xf32>
    %42 = tpu.matmul %40, %10, %cst_20 {dimension_numbers = #tpu.dot_dimension_numbers<[1], [0], [0], [1], [0, 0, 1, 1], [], []>} : vector<2x32xf32>, vector<32x96xf32>, vector<2x96xf32> -> vector<2x96xf32>
    %43 = vector.extract_strided_slice %41 {offsets = [0, 0], sizes = [2, 32], strides = [1, 1]} : vector<2x96xf32> to vector<2x32xf32>
    %44 = vector.extract_strided_slice %42 {offsets = [0, 0], sizes = [2, 32], strides = [1, 1]} : vector<2x96xf32> to vector<2x32xf32>
    %45 = arith.addf %43, %44 : vector<2x32xf32>
    %46 = arith.negf %45 : vector<2x32xf32>
    %47 = math.exp %46 : vector<2x32xf32>
    %cst_21 = arith.constant 1.000000e+00 : f32
    %48 = vector.broadcast %cst_21 : f32 to vector<2x32xf32>
    %49 = arith.addf %48, %47 : vector<2x32xf32>
    %50 = arith.divf %48, %49 : vector<2x32xf32>
    %51 = vector.extract_strided_slice %41 {offsets = [0, 32], sizes = [2, 32], strides = [1, 1]} : vector<2x96xf32> to vector<2x32xf32>
    %52 = vector.extract_strided_slice %42 {offsets = [0, 32], sizes = [2, 32], strides = [1, 1]} : vector<2x96xf32> to vector<2x32xf32>
    %53 = arith.addf %51, %52 : vector<2x32xf32>
    %54 = arith.negf %53 : vector<2x32xf32>
    %55 = math.exp %54 : vector<2x32xf32>
    %cst_22 = arith.constant 1.000000e+00 : f32
    %56 = vector.broadcast %cst_22 : f32 to vector<2x32xf32>
    %57 = arith.addf %56, %55 : vector<2x32xf32>
    %58 = arith.divf %56, %57 : vector<2x32xf32>
    %59 = vector.extract_strided_slice %41 {offsets = [0, 64], sizes = [2, 32], strides = [1, 1]} : vector<2x96xf32> to vector<2x32xf32>
    %60 = vector.extract_strided_slice %42 {offsets = [0, 64], sizes = [2, 32], strides = [1, 1]} : vector<2x96xf32> to vector<2x32xf32>
    %61 = vector.broadcast %11 : vector<1x32xf32> to vector<2x32xf32>
    %62 = arith.addf %60, %61 : vector<2x32xf32>
    %63 = arith.mulf %50, %62 : vector<2x32xf32>
    %64 = arith.addf %59, %63 : vector<2x32xf32>
    %65 = math.tanh %64 : vector<2x32xf32>
    %66 = arith.subf %40, %65 : vector<2x32xf32>
    %67 = arith.mulf %58, %66 : vector<2x32xf32>
    %68 = arith.addf %65, %67 : vector<2x32xf32>
    %c4 = arith.constant 4 : index
    %c0_23 = arith.constant 0 : index
    %69 = vector.load %arg11[%c4, %c0_23] : memref<16x96xf32, #tpu.memory_space<vmem>>, vector<2x96xf32>
    %cst_24 = arith.constant dense<0.000000e+00> : vector<2x96xf32>
    %70 = tpu.matmul %68, %10, %cst_24 {dimension_numbers = #tpu.dot_dimension_numbers<[1], [0], [0], [1], [0, 0, 1, 1], [], []>} : vector<2x32xf32>, vector<32x96xf32>, vector<2x96xf32> -> vector<2x96xf32>
    %71 = vector.extract_strided_slice %69 {offsets = [0, 0], sizes = [2, 32], strides = [1, 1]} : vector<2x96xf32> to vector<2x32xf32>
    %72 = vector.extract_strided_slice %70 {offsets = [0, 0], sizes = [2, 32], strides = [1, 1]} : vector<2x96xf32> to vector<2x32xf32>
    %73 = arith.addf %71, %72 : vector<2x32xf32>
    %74 = arith.negf %73 : vector<2x32xf32>
    %75 = math.exp %74 : vector<2x32xf32>
    %cst_25 = arith.constant 1.000000e+00 : f32
    %76 = vector.broadcast %cst_25 : f32 to vector<2x32xf32>
    %77 = arith.addf %76, %75 : vector<2x32xf32>
    %78 = arith.divf %76, %77 : vector<2x32xf32>
    %79 = vector.extract_strided_slice %69 {offsets = [0, 32], sizes = [2, 32], strides = [1, 1]} : vector<2x96xf32> to vector<2x32xf32>
    %80 = vector.extract_strided_slice %70 {offsets = [0, 32], sizes = [2, 32], strides = [1, 1]} : vector<2x96xf32> to vector<2x32xf32>
    %81 = arith.addf %79, %80 : vector<2x32xf32>
    %82 = arith.negf %81 : vector<2x32xf32>
    %83 = math.exp %82 : vector<2x32xf32>
    %cst_26 = arith.constant 1.000000e+00 : f32
    %84 = vector.broadcast %cst_26 : f32 to vector<2x32xf32>
    %85 = arith.addf %84, %83 : vector<2x32xf32>
    %86 = arith.divf %84, %85 : vector<2x32xf32>
    %87 = vector.extract_strided_slice %69 {offsets = [0, 64], sizes = [2, 32], strides = [1, 1]} : vector<2x96xf32> to vector<2x32xf32>
    %88 = vector.extract_strided_slice %70 {offsets = [0, 64], sizes = [2, 32], strides = [1, 1]} : vector<2x96xf32> to vector<2x32xf32>
    %89 = vector.broadcast %11 : vector<1x32xf32> to vector<2x32xf32>
    %90 = arith.addf %88, %89 : vector<2x32xf32>
    %91 = arith.mulf %78, %90 : vector<2x32xf32>
    %92 = arith.addf %87, %91 : vector<2x32xf32>
    %93 = math.tanh %92 : vector<2x32xf32>
    %94 = arith.subf %68, %93 : vector<2x32xf32>
    %95 = arith.mulf %86, %94 : vector<2x32xf32>
    %96 = arith.addf %93, %95 : vector<2x32xf32>
    %c6 = arith.constant 6 : index
    %c0_27 = arith.constant 0 : index
    %97 = vector.load %arg11[%c6, %c0_27] : memref<16x96xf32, #tpu.memory_space<vmem>>, vector<2x96xf32>
    %cst_28 = arith.constant dense<0.000000e+00> : vector<2x96xf32>
    %98 = tpu.matmul %96, %10, %cst_28 {dimension_numbers = #tpu.dot_dimension_numbers<[1], [0], [0], [1], [0, 0, 1, 1], [], []>} : vector<2x32xf32>, vector<32x96xf32>, vector<2x96xf32> -> vector<2x96xf32>
    %99 = vector.extract_strided_slice %97 {offsets = [0, 0], sizes = [2, 32], strides = [1, 1]} : vector<2x96xf32> to vector<2x32xf32>
    %100 = vector.extract_strided_slice %98 {offsets = [0, 0], sizes = [2, 32], strides = [1, 1]} : vector<2x96xf32> to vector<2x32xf32>
    %101 = arith.addf %99, %100 : vector<2x32xf32>
    %102 = arith.negf %101 : vector<2x32xf32>
    %103 = math.exp %102 : vector<2x32xf32>
    %cst_29 = arith.constant 1.000000e+00 : f32
    %104 = vector.broadcast %cst_29 : f32 to vector<2x32xf32>
    %105 = arith.addf %104, %103 : vector<2x32xf32>
    %106 = arith.divf %104, %105 : vector<2x32xf32>
    %107 = vector.extract_strided_slice %97 {offsets = [0, 32], sizes = [2, 32], strides = [1, 1]} : vector<2x96xf32> to vector<2x32xf32>
    %108 = vector.extract_strided_slice %98 {offsets = [0, 32], sizes = [2, 32], strides = [1, 1]} : vector<2x96xf32> to vector<2x32xf32>
    %109 = arith.addf %107, %108 : vector<2x32xf32>
    %110 = arith.negf %109 : vector<2x32xf32>
    %111 = math.exp %110 : vector<2x32xf32>
    %cst_30 = arith.constant 1.000000e+00 : f32
    %112 = vector.broadcast %cst_30 : f32 to vector<2x32xf32>
    %113 = arith.addf %112, %111 : vector<2x32xf32>
    %114 = arith.divf %112, %113 : vector<2x32xf32>
    %115 = vector.extract_strided_slice %97 {offsets = [0, 64], sizes = [2, 32], strides = [1, 1]} : vector<2x96xf32> to vector<2x32xf32>
    %116 = vector.extract_strided_slice %98 {offsets = [0, 64], sizes = [2, 32], strides = [1, 1]} : vector<2x96xf32> to vector<2x32xf32>
    %117 = vector.broadcast %11 : vector<1x32xf32> to vector<2x32xf32>
    %118 = arith.addf %116, %117 : vector<2x32xf32>
    %119 = arith.mulf %106, %118 : vector<2x32xf32>
    %120 = arith.addf %115, %119 : vector<2x32xf32>
    %121 = math.tanh %120 : vector<2x32xf32>
    %122 = arith.subf %96, %121 : vector<2x32xf32>
    %123 = arith.mulf %114, %122 : vector<2x32xf32>
    %124 = arith.addf %121, %123 : vector<2x32xf32>
    %c8 = arith.constant 8 : index
    %c0_31 = arith.constant 0 : index
    %125 = vector.load %arg11[%c8, %c0_31] : memref<16x96xf32, #tpu.memory_space<vmem>>, vector<2x96xf32>
    %cst_32 = arith.constant dense<0.000000e+00> : vector<2x96xf32>
    %126 = tpu.matmul %124, %10, %cst_32 {dimension_numbers = #tpu.dot_dimension_numbers<[1], [0], [0], [1], [0, 0, 1, 1], [], []>} : vector<2x32xf32>, vector<32x96xf32>, vector<2x96xf32> -> vector<2x96xf32>
    %127 = vector.extract_strided_slice %125 {offsets = [0, 0], sizes = [2, 32], strides = [1, 1]} : vector<2x96xf32> to vector<2x32xf32>
    %128 = vector.extract_strided_slice %126 {offsets = [0, 0], sizes = [2, 32], strides = [1, 1]} : vector<2x96xf32> to vector<2x32xf32>
    %129 = arith.addf %127, %128 : vector<2x32xf32>
    %130 = arith.negf %129 : vector<2x32xf32>
    %131 = math.exp %130 : vector<2x32xf32>
    %cst_33 = arith.constant 1.000000e+00 : f32
    %132 = vector.broadcast %cst_33 : f32 to vector<2x32xf32>
    %133 = arith.addf %132, %131 : vector<2x32xf32>
    %134 = arith.divf %132, %133 : vector<2x32xf32>
    %135 = vector.extract_strided_slice %125 {offsets = [0, 32], sizes = [2, 32], strides = [1, 1]} : vector<2x96xf32> to vector<2x32xf32>
    %136 = vector.extract_strided_slice %126 {offsets = [0, 32], sizes = [2, 32], strides = [1, 1]} : vector<2x96xf32> to vector<2x32xf32>
    %137 = arith.addf %135, %136 : vector<2x32xf32>
    %138 = arith.negf %137 : vector<2x32xf32>
    %139 = math.exp %138 : vector<2x32xf32>
    %cst_34 = arith.constant 1.000000e+00 : f32
    %140 = vector.broadcast %cst_34 : f32 to vector<2x32xf32>
    %141 = arith.addf %140, %139 : vector<2x32xf32>
    %142 = arith.divf %140, %141 : vector<2x32xf32>
    %143 = vector.extract_strided_slice %125 {offsets = [0, 64], sizes = [2, 32], strides = [1, 1]} : vector<2x96xf32> to vector<2x32xf32>
    %144 = vector.extract_strided_slice %126 {offsets = [0, 64], sizes = [2, 32], strides = [1, 1]} : vector<2x96xf32> to vector<2x32xf32>
    %145 = vector.broadcast %11 : vector<1x32xf32> to vector<2x32xf32>
    %146 = arith.addf %144, %145 : vector<2x32xf32>
    %147 = arith.mulf %134, %146 : vector<2x32xf32>
    %148 = arith.addf %143, %147 : vector<2x32xf32>
    %149 = math.tanh %148 : vector<2x32xf32>
    %150 = arith.subf %124, %149 : vector<2x32xf32>
    %151 = arith.mulf %142, %150 : vector<2x32xf32>
    %152 = arith.addf %149, %151 : vector<2x32xf32>
    %c10 = arith.constant 10 : index
    %c0_35 = arith.constant 0 : index
    %153 = vector.load %arg11[%c10, %c0_35] : memref<16x96xf32, #tpu.memory_space<vmem>>, vector<2x96xf32>
    %cst_36 = arith.constant dense<0.000000e+00> : vector<2x96xf32>
    %154 = tpu.matmul %152, %10, %cst_36 {dimension_numbers = #tpu.dot_dimension_numbers<[1], [0], [0], [1], [0, 0, 1, 1], [], []>} : vector<2x32xf32>, vector<32x96xf32>, vector<2x96xf32> -> vector<2x96xf32>
    %155 = vector.extract_strided_slice %153 {offsets = [0, 0], sizes = [2, 32], strides = [1, 1]} : vector<2x96xf32> to vector<2x32xf32>
    %156 = vector.extract_strided_slice %154 {offsets = [0, 0], sizes = [2, 32], strides = [1, 1]} : vector<2x96xf32> to vector<2x32xf32>
    %157 = arith.addf %155, %156 : vector<2x32xf32>
    %158 = arith.negf %157 : vector<2x32xf32>
    %159 = math.exp %158 : vector<2x32xf32>
    %cst_37 = arith.constant 1.000000e+00 : f32
    %160 = vector.broadcast %cst_37 : f32 to vector<2x32xf32>
    %161 = arith.addf %160, %159 : vector<2x32xf32>
    %162 = arith.divf %160, %161 : vector<2x32xf32>
    %163 = vector.extract_strided_slice %153 {offsets = [0, 32], sizes = [2, 32], strides = [1, 1]} : vector<2x96xf32> to vector<2x32xf32>
    %164 = vector.extract_strided_slice %154 {offsets = [0, 32], sizes = [2, 32], strides = [1, 1]} : vector<2x96xf32> to vector<2x32xf32>
    %165 = arith.addf %163, %164 : vector<2x32xf32>
    %166 = arith.negf %165 : vector<2x32xf32>
    %167 = math.exp %166 : vector<2x32xf32>
    %cst_38 = arith.constant 1.000000e+00 : f32
    %168 = vector.broadcast %cst_38 : f32 to vector<2x32xf32>
    %169 = arith.addf %168, %167 : vector<2x32xf32>
    %170 = arith.divf %168, %169 : vector<2x32xf32>
    %171 = vector.extract_strided_slice %153 {offsets = [0, 64], sizes = [2, 32], strides = [1, 1]} : vector<2x96xf32> to vector<2x32xf32>
    %172 = vector.extract_strided_slice %154 {offsets = [0, 64], sizes = [2, 32], strides = [1, 1]} : vector<2x96xf32> to vector<2x32xf32>
    %173 = vector.broadcast %11 : vector<1x32xf32> to vector<2x32xf32>
    %174 = arith.addf %172, %173 : vector<2x32xf32>
    %175 = arith.mulf %162, %174 : vector<2x32xf32>
    %176 = arith.addf %171, %175 : vector<2x32xf32>
    %177 = math.tanh %176 : vector<2x32xf32>
    %178 = arith.subf %152, %177 : vector<2x32xf32>
    %179 = arith.mulf %170, %178 : vector<2x32xf32>
    %180 = arith.addf %177, %179 : vector<2x32xf32>
    %c12 = arith.constant 12 : index
    %c0_39 = arith.constant 0 : index
    %181 = vector.load %arg11[%c12, %c0_39] : memref<16x96xf32, #tpu.memory_space<vmem>>, vector<2x96xf32>
    %cst_40 = arith.constant dense<0.000000e+00> : vector<2x96xf32>
    %182 = tpu.matmul %180, %10, %cst_40 {dimension_numbers = #tpu.dot_dimension_numbers<[1], [0], [0], [1], [0, 0, 1, 1], [], []>} : vector<2x32xf32>, vector<32x96xf32>, vector<2x96xf32> -> vector<2x96xf32>
    %183 = vector.extract_strided_slice %181 {offsets = [0, 0], sizes = [2, 32], strides = [1, 1]} : vector<2x96xf32> to vector<2x32xf32>
    %184 = vector.extract_strided_slice %182 {offsets = [0, 0], sizes = [2, 32], strides = [1, 1]} : vector<2x96xf32> to vector<2x32xf32>
    %185 = arith.addf %183, %184 : vector<2x32xf32>
    %186 = arith.negf %185 : vector<2x32xf32>
    %187 = math.exp %186 : vector<2x32xf32>
    %cst_41 = arith.constant 1.000000e+00 : f32
    %188 = vector.broadcast %cst_41 : f32 to vector<2x32xf32>
    %189 = arith.addf %188, %187 : vector<2x32xf32>
    %190 = arith.divf %188, %189 : vector<2x32xf32>
    %191 = vector.extract_strided_slice %181 {offsets = [0, 32], sizes = [2, 32], strides = [1, 1]} : vector<2x96xf32> to vector<2x32xf32>
    %192 = vector.extract_strided_slice %182 {offsets = [0, 32], sizes = [2, 32], strides = [1, 1]} : vector<2x96xf32> to vector<2x32xf32>
    %193 = arith.addf %191, %192 : vector<2x32xf32>
    %194 = arith.negf %193 : vector<2x32xf32>
    %195 = math.exp %194 : vector<2x32xf32>
    %cst_42 = arith.constant 1.000000e+00 : f32
    %196 = vector.broadcast %cst_42 : f32 to vector<2x32xf32>
    %197 = arith.addf %196, %195 : vector<2x32xf32>
    %198 = arith.divf %196, %197 : vector<2x32xf32>
    %199 = vector.extract_strided_slice %181 {offsets = [0, 64], sizes = [2, 32], strides = [1, 1]} : vector<2x96xf32> to vector<2x32xf32>
    %200 = vector.extract_strided_slice %182 {offsets = [0, 64], sizes = [2, 32], strides = [1, 1]} : vector<2x96xf32> to vector<2x32xf32>
    %201 = vector.broadcast %11 : vector<1x32xf32> to vector<2x32xf32>
    %202 = arith.addf %200, %201 : vector<2x32xf32>
    %203 = arith.mulf %190, %202 : vector<2x32xf32>
    %204 = arith.addf %199, %203 : vector<2x32xf32>
    %205 = math.tanh %204 : vector<2x32xf32>
    %206 = arith.subf %180, %205 : vector<2x32xf32>
    %207 = arith.mulf %198, %206 : vector<2x32xf32>
    %208 = arith.addf %205, %207 : vector<2x32xf32>
    %c14 = arith.constant 14 : index
    %c0_43 = arith.constant 0 : index
    %209 = vector.load %arg11[%c14, %c0_43] : memref<16x96xf32, #tpu.memory_space<vmem>>, vector<2x96xf32>
    %cst_44 = arith.constant dense<0.000000e+00> : vector<2x96xf32>
    %210 = tpu.matmul %208, %10, %cst_44 {dimension_numbers = #tpu.dot_dimension_numbers<[1], [0], [0], [1], [0, 0, 1, 1], [], []>} : vector<2x32xf32>, vector<32x96xf32>, vector<2x96xf32> -> vector<2x96xf32>
    %211 = vector.extract_strided_slice %209 {offsets = [0, 0], sizes = [2, 32], strides = [1, 1]} : vector<2x96xf32> to vector<2x32xf32>
    %212 = vector.extract_strided_slice %210 {offsets = [0, 0], sizes = [2, 32], strides = [1, 1]} : vector<2x96xf32> to vector<2x32xf32>
    %213 = arith.addf %211, %212 : vector<2x32xf32>
    %214 = arith.negf %213 : vector<2x32xf32>
    %215 = math.exp %214 : vector<2x32xf32>
    %cst_45 = arith.constant 1.000000e+00 : f32
    %216 = vector.broadcast %cst_45 : f32 to vector<2x32xf32>
    %217 = arith.addf %216, %215 : vector<2x32xf32>
    %218 = arith.divf %216, %217 : vector<2x32xf32>
    %219 = vector.extract_strided_slice %209 {offsets = [0, 32], sizes = [2, 32], strides = [1, 1]} : vector<2x96xf32> to vector<2x32xf32>
    %220 = vector.extract_strided_slice %210 {offsets = [0, 32], sizes = [2, 32], strides = [1, 1]} : vector<2x96xf32> to vector<2x32xf32>
    %221 = arith.addf %219, %220 : vector<2x32xf32>
    %222 = arith.negf %221 : vector<2x32xf32>
    %223 = math.exp %222 : vector<2x32xf32>
    %cst_46 = arith.constant 1.000000e+00 : f32
    %224 = vector.broadcast %cst_46 : f32 to vector<2x32xf32>
    %225 = arith.addf %224, %223 : vector<2x32xf32>
    %226 = arith.divf %224, %225 : vector<2x32xf32>
    %227 = vector.extract_strided_slice %209 {offsets = [0, 64], sizes = [2, 32], strides = [1, 1]} : vector<2x96xf32> to vector<2x32xf32>
    %228 = vector.extract_strided_slice %210 {offsets = [0, 64], sizes = [2, 32], strides = [1, 1]} : vector<2x96xf32> to vector<2x32xf32>
    %229 = vector.broadcast %11 : vector<1x32xf32> to vector<2x32xf32>
    %230 = arith.addf %228, %229 : vector<2x32xf32>
    %231 = arith.mulf %218, %230 : vector<2x32xf32>
    %232 = arith.addf %227, %231 : vector<2x32xf32>
    %233 = math.tanh %232 : vector<2x32xf32>
    %234 = arith.subf %208, %233 : vector<2x32xf32>
    %235 = arith.mulf %226, %234 : vector<2x32xf32>
    %236 = arith.addf %233, %235 : vector<2x32xf32>
    %c0_47 = arith.constant 0 : index
    %c0_48 = arith.constant 0 : index
    %237 = vector.load %arg10[%c0_47, %c0_48] : memref<2x32xf32, #tpu.memory_space<vmem>>, vector<2x32xf32>
    tpu.vector_store %arg10[%c0_47, %c0_48], %236 {strides = array<i32>} : memref<2x32xf32, #tpu.memory_space<vmem>>, vector<2x32xf32>,
    %c0_i32_49 = arith.constant 0 : i32
    %238 = arith.cmpi eq, %arg0, %c0_i32_49 : i32
    %239 = arith.extui %238 : i1 to i32
    %c0_i32_50 = arith.constant 0 : i32
    %240 = arith.cmpi ne, %239, %c0_i32_50 : i32
    scf.if %240 {
      %c0_51 = arith.constant 0 : index
      %c0_52 = arith.constant 0 : index
      %241 = vector.load %arg8[%c0_51, %c0_52] : memref<2x32xf32, #tpu.memory_space<vmem>>, vector<2x32xf32>
      tpu.vector_store %arg8[%c0_51, %c0_52], %236 {strides = array<i32>} : memref<2x32xf32, #tpu.memory_space<vmem>>, vector<2x32xf32>,
      %c0_53 = arith.constant 0 : index
      %c0_54 = arith.constant 0 : index
      %242 = vector.load %arg6[%c0_53, %c0_54] : memref<32x8xf32, #tpu.memory_space<vmem>>, vector<32x8xf32>
      %cst_55 = arith.constant dense<0.000000e+00> : vector<2x8xf32>
      %243 = tpu.matmul %236, %242, %cst_55 {dimension_numbers = #tpu.dot_dimension_numbers<[1], [0], [0], [1], [0, 0, 1, 1], [], []>} : vector<2x32xf32>, vector<32x8xf32>, vector<2x8xf32> -> vector<2x8xf32>
      %c0_56 = arith.constant 0 : index
      %c0_57 = arith.constant 0 : index
      %244 = vector.load %arg7[%c0_56, %c0_57] : memref<1x8xf32, #tpu.memory_space<vmem>>, vector<1x8xf32>
      %245 = vector.broadcast %244 : vector<1x8xf32> to vector<2x8xf32>
      %246 = arith.addf %243, %245 : vector<2x8xf32>
      %c0_58 = arith.constant 0 : index
      %c0_59 = arith.constant 0 : index
      %247 = vector.load %arg9[%c0_58, %c0_59] : memref<2x8xf32, #tpu.memory_space<vmem>>, vector<2x8xf32>
      tpu.vector_store %arg9[%c0_58, %c0_59], %246 {strides = array<i32>} : memref<2x8xf32, #tpu.memory_space<vmem>>, vector<2x8xf32>,
    } else {
    }
    return
  }
  func.func @transform_0(%arg0: i32) -> (i32, i32) {
    %c0_i32 = arith.constant 0 : i32
    %c0_i32_0 = arith.constant 0 : i32
    return %arg0, %c0_i32 : i32, i32
  }
  func.func @transform_1(%arg0: i32) -> (i32, i32) {
    %c0_i32 = arith.constant 0 : i32
    %c0_i32_0 = arith.constant 0 : i32
    %c0_i32_1 = arith.constant 0 : i32
    return %c0_i32, %c0_i32_0 : i32, i32
  }
  func.func @transform_2(%arg0: i32) -> (i32, i32) {
    %c0_i32 = arith.constant 0 : i32
    %c0_i32_0 = arith.constant 0 : i32
    %c0_i32_1 = arith.constant 0 : i32
    return %c0_i32, %c0_i32_0 : i32, i32
  }
  func.func @transform_3(%arg0: i32) -> (i32, i32) {
    %c0_i32 = arith.constant 0 : i32
    %c0_i32_0 = arith.constant 0 : i32
    %c0_i32_1 = arith.constant 0 : i32
    return %c0_i32, %c0_i32_0 : i32, i32
  }
  func.func @transform_4(%arg0: i32) -> (i32, i32) {
    %c0_i32 = arith.constant 0 : i32
    %c0_i32_0 = arith.constant 0 : i32
    %c0_i32_1 = arith.constant 0 : i32
    return %c0_i32, %c0_i32_0 : i32, i32
  }
  func.func @transform_5(%arg0: i32) -> (i32, i32) {
    %c0_i32 = arith.constant 0 : i32
    %c0_i32_0 = arith.constant 0 : i32
    %c0_i32_1 = arith.constant 0 : i32
    return %c0_i32, %c0_i32_0 : i32, i32
  }
  func.func @transform_6(%arg0: i32) -> (i32, i32) {
    %c0_i32 = arith.constant 0 : i32
    %c0_i32_0 = arith.constant 0 : i32
    %c0_i32_1 = arith.constant 0 : i32
    return %c0_i32, %c0_i32_0 : i32, i32
  }
  func.func @transform_7(%arg0: i32) -> (i32, i32) {
    %c0_i32 = arith.constant 0 : i32
    %c0_i32_0 = arith.constant 0 : i32
    %c0_i32_1 = arith.constant 0 : i32
    return %c0_i32, %c0_i32_0 : i32, i32
  }
  func.func @transform_8(%arg0: i32) -> (i32, i32) {
    %c0_i32 = arith.constant 0 : i32
    %c0_i32_0 = arith.constant 0 : i32
    %c0_i32_1 = arith.constant 0 : i32
    return %c0_i32, %c0_i32_0 : i32, i32
  }
}

module attributes {stable_mosaic.version = 11 : i64} {
  func.func @gru_layer_kernel(%arg0: i32, %arg1: memref<16x16xf32, #tpu.memory_space<vmem>>, %arg2: memref<16x96xf32, #tpu.memory_space<vmem>>, %arg3: memref<1x96xf32, #tpu.memory_space<vmem>>, %arg4: memref<32x96xf32, #tpu.memory_space<vmem>>, %arg5: memref<1x32xf32, #tpu.memory_space<vmem>>, %arg6: memref<16x32xf32, #tpu.memory_space<vmem>>, %arg7: memref<2x32xf32, #tpu.memory_space<vmem>>, %arg8: memref<2x32xf32, #tpu.memory_space<vmem>>, %arg9: memref<16x96xf32, #tpu.memory_space<vmem>>) attributes {dimension_semantics = [#tpu.dimension_semantics<arbitrary>], iteration_bounds = array<i64: 1>, scalar_prefetch = 0 : i64, scratch_operands = 2 : i64, tpu.core_type = #tpu.core_type<tc>, window_params = [{transform_indices = @transform_0, window_bounds = array<i64: 16, 16>}, {pipeline_mode = #tpu.pipeline_mode<synchronous>, transform_indices = @transform_1, window_bounds = array<i64: 16, 96>}, {pipeline_mode = #tpu.pipeline_mode<synchronous>, transform_indices = @transform_2, window_bounds = array<i64: 1, 96>}, {pipeline_mode = #tpu.pipeline_mode<synchronous>, transform_indices = @transform_3, window_bounds = array<i64: 32, 96>}, {pipeline_mode = #tpu.pipeline_mode<synchronous>, transform_indices = @transform_4, window_bounds = array<i64: 1, 32>}, {transform_indices = @transform_5, window_bounds = array<i64: 16, 32>}, {pipeline_mode = #tpu.pipeline_mode<synchronous>, transform_indices = @transform_6, window_bounds = array<i64: 2, 32>}]} {
    %c0_i32 = arith.constant 0 : i32
    %0 = arith.cmpi eq, %arg0, %c0_i32 : i32
    %1 = arith.extui %0 : i1 to i32
    %c0_i32_0 = arith.constant 0 : i32
    %2 = arith.cmpi ne, %1, %c0_i32_0 : i32
    scf.if %2 {
      %cst_67 = arith.constant 0.000000e+00 : f32
      %249 = vector.broadcast %cst_67 : f32 to vector<2x32xf32>
      %c0_68 = arith.constant 0 : index
      %c0_69 = arith.constant 0 : index
      %250 = vector.load %arg8[%c0_68, %c0_69] : memref<2x32xf32, #tpu.memory_space<vmem>>, vector<2x32xf32>
      tpu.vector_store %arg8[%c0_68, %c0_69], %249 {strides = array<i32>} : memref<2x32xf32, #tpu.memory_space<vmem>>, vector<2x32xf32>,
    } else {
    }
    %c0 = arith.constant 0 : index
    %c0_1 = arith.constant 0 : index
    %3 = vector.load %arg1[%c0, %c0_1] : memref<16x16xf32, #tpu.memory_space<vmem>>, vector<16x16xf32>
    %c0_2 = arith.constant 0 : index
    %c0_3 = arith.constant 0 : index
    %4 = vector.load %arg2[%c0_2, %c0_3] : memref<16x96xf32, #tpu.memory_space<vmem>>, vector<16x96xf32>
    %cst = arith.constant dense<0.000000e+00> : vector<16x96xf32>
    %5 = tpu.matmul %3, %4, %cst {dimension_numbers = #tpu.dot_dimension_numbers<[1], [0], [0], [1], [0, 0, 1, 1], [], []>} : vector<16x16xf32>, vector<16x96xf32>, vector<16x96xf32> -> vector<16x96xf32>
    %c0_4 = arith.constant 0 : index
    %c0_5 = arith.constant 0 : index
    %6 = vector.load %arg3[%c0_4, %c0_5] : memref<1x96xf32, #tpu.memory_space<vmem>>, vector<1x96xf32>
    %7 = vector.broadcast %6 : vector<1x96xf32> to vector<16x96xf32>
    %8 = arith.addf %5, %7 : vector<16x96xf32>
    %c0_6 = arith.constant 0 : index
    %c0_7 = arith.constant 0 : index
    %9 = vector.load %arg9[%c0_6, %c0_7] : memref<16x96xf32, #tpu.memory_space<vmem>>, vector<16x96xf32>
    tpu.vector_store %arg9[%c0_6, %c0_7], %8 {strides = array<i32>} : memref<16x96xf32, #tpu.memory_space<vmem>>, vector<16x96xf32>,
    %c0_8 = arith.constant 0 : index
    %c0_9 = arith.constant 0 : index
    %10 = vector.load %arg4[%c0_8, %c0_9] : memref<32x96xf32, #tpu.memory_space<vmem>>, vector<32x96xf32>
    %c0_10 = arith.constant 0 : index
    %c0_11 = arith.constant 0 : index
    %11 = vector.load %arg5[%c0_10, %c0_11] : memref<1x32xf32, #tpu.memory_space<vmem>>, vector<1x32xf32>
    %c0_12 = arith.constant 0 : index
    %c0_13 = arith.constant 0 : index
    %12 = vector.load %arg8[%c0_12, %c0_13] : memref<2x32xf32, #tpu.memory_space<vmem>>, vector<2x32xf32>
    %c0_14 = arith.constant 0 : index
    %c0_15 = arith.constant 0 : index
    %13 = vector.load %arg9[%c0_14, %c0_15] : memref<16x96xf32, #tpu.memory_space<vmem>>, vector<2x96xf32>
    %cst_16 = arith.constant dense<0.000000e+00> : vector<2x96xf32>
    %14 = tpu.matmul %12, %10, %cst_16 {dimension_numbers = #tpu.dot_dimension_numbers<[1], [0], [0], [1], [0, 0, 1, 1], [], []>} : vector<2x32xf32>, vector<32x96xf32>, vector<2x96xf32> -> vector<2x96xf32>
    %15 = vector.extract_strided_slice %13 {offsets = [0, 0], sizes = [2, 32], strides = [1, 1]} : vector<2x96xf32> to vector<2x32xf32>
    %16 = vector.extract_strided_slice %14 {offsets = [0, 0], sizes = [2, 32], strides = [1, 1]} : vector<2x96xf32> to vector<2x32xf32>
    %17 = arith.addf %15, %16 : vector<2x32xf32>
    %18 = arith.negf %17 : vector<2x32xf32>
    %19 = math.exp %18 : vector<2x32xf32>
    %cst_17 = arith.constant 1.000000e+00 : f32
    %20 = vector.broadcast %cst_17 : f32 to vector<2x32xf32>
    %21 = arith.addf %20, %19 : vector<2x32xf32>
    %22 = arith.divf %20, %21 : vector<2x32xf32>
    %23 = vector.extract_strided_slice %13 {offsets = [0, 32], sizes = [2, 32], strides = [1, 1]} : vector<2x96xf32> to vector<2x32xf32>
    %24 = vector.extract_strided_slice %14 {offsets = [0, 32], sizes = [2, 32], strides = [1, 1]} : vector<2x96xf32> to vector<2x32xf32>
    %25 = arith.addf %23, %24 : vector<2x32xf32>
    %26 = arith.negf %25 : vector<2x32xf32>
    %27 = math.exp %26 : vector<2x32xf32>
    %cst_18 = arith.constant 1.000000e+00 : f32
    %28 = vector.broadcast %cst_18 : f32 to vector<2x32xf32>
    %29 = arith.addf %28, %27 : vector<2x32xf32>
    %30 = arith.divf %28, %29 : vector<2x32xf32>
    %31 = vector.extract_strided_slice %13 {offsets = [0, 64], sizes = [2, 32], strides = [1, 1]} : vector<2x96xf32> to vector<2x32xf32>
    %32 = vector.extract_strided_slice %14 {offsets = [0, 64], sizes = [2, 32], strides = [1, 1]} : vector<2x96xf32> to vector<2x32xf32>
    %33 = vector.broadcast %11 : vector<1x32xf32> to vector<2x32xf32>
    %34 = arith.addf %32, %33 : vector<2x32xf32>
    %35 = arith.mulf %22, %34 : vector<2x32xf32>
    %36 = arith.addf %31, %35 : vector<2x32xf32>
    %37 = math.tanh %36 : vector<2x32xf32>
    %38 = arith.subf %12, %37 : vector<2x32xf32>
    %39 = arith.mulf %30, %38 : vector<2x32xf32>
    %40 = arith.addf %37, %39 : vector<2x32xf32>
    %c0_19 = arith.constant 0 : index
    %c0_20 = arith.constant 0 : index
    %41 = vector.load %arg6[%c0_19, %c0_20] : memref<16x32xf32, #tpu.memory_space<vmem>>, vector<2x32xf32>
    tpu.vector_store %arg6[%c0_19, %c0_20], %40 {strides = array<i32>} : memref<16x32xf32, #tpu.memory_space<vmem>>, vector<2x32xf32>,
    %c2 = arith.constant 2 : index
    %c0_21 = arith.constant 0 : index
    %42 = vector.load %arg9[%c2, %c0_21] : memref<16x96xf32, #tpu.memory_space<vmem>>, vector<2x96xf32>
    %cst_22 = arith.constant dense<0.000000e+00> : vector<2x96xf32>
    %43 = tpu.matmul %40, %10, %cst_22 {dimension_numbers = #tpu.dot_dimension_numbers<[1], [0], [0], [1], [0, 0, 1, 1], [], []>} : vector<2x32xf32>, vector<32x96xf32>, vector<2x96xf32> -> vector<2x96xf32>
    %44 = vector.extract_strided_slice %42 {offsets = [0, 0], sizes = [2, 32], strides = [1, 1]} : vector<2x96xf32> to vector<2x32xf32>
    %45 = vector.extract_strided_slice %43 {offsets = [0, 0], sizes = [2, 32], strides = [1, 1]} : vector<2x96xf32> to vector<2x32xf32>
    %46 = arith.addf %44, %45 : vector<2x32xf32>
    %47 = arith.negf %46 : vector<2x32xf32>
    %48 = math.exp %47 : vector<2x32xf32>
    %cst_23 = arith.constant 1.000000e+00 : f32
    %49 = vector.broadcast %cst_23 : f32 to vector<2x32xf32>
    %50 = arith.addf %49, %48 : vector<2x32xf32>
    %51 = arith.divf %49, %50 : vector<2x32xf32>
    %52 = vector.extract_strided_slice %42 {offsets = [0, 32], sizes = [2, 32], strides = [1, 1]} : vector<2x96xf32> to vector<2x32xf32>
    %53 = vector.extract_strided_slice %43 {offsets = [0, 32], sizes = [2, 32], strides = [1, 1]} : vector<2x96xf32> to vector<2x32xf32>
    %54 = arith.addf %52, %53 : vector<2x32xf32>
    %55 = arith.negf %54 : vector<2x32xf32>
    %56 = math.exp %55 : vector<2x32xf32>
    %cst_24 = arith.constant 1.000000e+00 : f32
    %57 = vector.broadcast %cst_24 : f32 to vector<2x32xf32>
    %58 = arith.addf %57, %56 : vector<2x32xf32>
    %59 = arith.divf %57, %58 : vector<2x32xf32>
    %60 = vector.extract_strided_slice %42 {offsets = [0, 64], sizes = [2, 32], strides = [1, 1]} : vector<2x96xf32> to vector<2x32xf32>
    %61 = vector.extract_strided_slice %43 {offsets = [0, 64], sizes = [2, 32], strides = [1, 1]} : vector<2x96xf32> to vector<2x32xf32>
    %62 = vector.broadcast %11 : vector<1x32xf32> to vector<2x32xf32>
    %63 = arith.addf %61, %62 : vector<2x32xf32>
    %64 = arith.mulf %51, %63 : vector<2x32xf32>
    %65 = arith.addf %60, %64 : vector<2x32xf32>
    %66 = math.tanh %65 : vector<2x32xf32>
    %67 = arith.subf %40, %66 : vector<2x32xf32>
    %68 = arith.mulf %59, %67 : vector<2x32xf32>
    %69 = arith.addf %66, %68 : vector<2x32xf32>
    %c2_25 = arith.constant 2 : index
    %c0_26 = arith.constant 0 : index
    %70 = vector.load %arg6[%c2_25, %c0_26] : memref<16x32xf32, #tpu.memory_space<vmem>>, vector<2x32xf32>
    tpu.vector_store %arg6[%c2_25, %c0_26], %69 {strides = array<i32>} : memref<16x32xf32, #tpu.memory_space<vmem>>, vector<2x32xf32>,
    %c4 = arith.constant 4 : index
    %c0_27 = arith.constant 0 : index
    %71 = vector.load %arg9[%c4, %c0_27] : memref<16x96xf32, #tpu.memory_space<vmem>>, vector<2x96xf32>
    %cst_28 = arith.constant dense<0.000000e+00> : vector<2x96xf32>
    %72 = tpu.matmul %69, %10, %cst_28 {dimension_numbers = #tpu.dot_dimension_numbers<[1], [0], [0], [1], [0, 0, 1, 1], [], []>} : vector<2x32xf32>, vector<32x96xf32>, vector<2x96xf32> -> vector<2x96xf32>
    %73 = vector.extract_strided_slice %71 {offsets = [0, 0], sizes = [2, 32], strides = [1, 1]} : vector<2x96xf32> to vector<2x32xf32>
    %74 = vector.extract_strided_slice %72 {offsets = [0, 0], sizes = [2, 32], strides = [1, 1]} : vector<2x96xf32> to vector<2x32xf32>
    %75 = arith.addf %73, %74 : vector<2x32xf32>
    %76 = arith.negf %75 : vector<2x32xf32>
    %77 = math.exp %76 : vector<2x32xf32>
    %cst_29 = arith.constant 1.000000e+00 : f32
    %78 = vector.broadcast %cst_29 : f32 to vector<2x32xf32>
    %79 = arith.addf %78, %77 : vector<2x32xf32>
    %80 = arith.divf %78, %79 : vector<2x32xf32>
    %81 = vector.extract_strided_slice %71 {offsets = [0, 32], sizes = [2, 32], strides = [1, 1]} : vector<2x96xf32> to vector<2x32xf32>
    %82 = vector.extract_strided_slice %72 {offsets = [0, 32], sizes = [2, 32], strides = [1, 1]} : vector<2x96xf32> to vector<2x32xf32>
    %83 = arith.addf %81, %82 : vector<2x32xf32>
    %84 = arith.negf %83 : vector<2x32xf32>
    %85 = math.exp %84 : vector<2x32xf32>
    %cst_30 = arith.constant 1.000000e+00 : f32
    %86 = vector.broadcast %cst_30 : f32 to vector<2x32xf32>
    %87 = arith.addf %86, %85 : vector<2x32xf32>
    %88 = arith.divf %86, %87 : vector<2x32xf32>
    %89 = vector.extract_strided_slice %71 {offsets = [0, 64], sizes = [2, 32], strides = [1, 1]} : vector<2x96xf32> to vector<2x32xf32>
    %90 = vector.extract_strided_slice %72 {offsets = [0, 64], sizes = [2, 32], strides = [1, 1]} : vector<2x96xf32> to vector<2x32xf32>
    %91 = vector.broadcast %11 : vector<1x32xf32> to vector<2x32xf32>
    %92 = arith.addf %90, %91 : vector<2x32xf32>
    %93 = arith.mulf %80, %92 : vector<2x32xf32>
    %94 = arith.addf %89, %93 : vector<2x32xf32>
    %95 = math.tanh %94 : vector<2x32xf32>
    %96 = arith.subf %69, %95 : vector<2x32xf32>
    %97 = arith.mulf %88, %96 : vector<2x32xf32>
    %98 = arith.addf %95, %97 : vector<2x32xf32>
    %c4_31 = arith.constant 4 : index
    %c0_32 = arith.constant 0 : index
    %99 = vector.load %arg6[%c4_31, %c0_32] : memref<16x32xf32, #tpu.memory_space<vmem>>, vector<2x32xf32>
    tpu.vector_store %arg6[%c4_31, %c0_32], %98 {strides = array<i32>} : memref<16x32xf32, #tpu.memory_space<vmem>>, vector<2x32xf32>,
    %c6 = arith.constant 6 : index
    %c0_33 = arith.constant 0 : index
    %100 = vector.load %arg9[%c6, %c0_33] : memref<16x96xf32, #tpu.memory_space<vmem>>, vector<2x96xf32>
    %cst_34 = arith.constant dense<0.000000e+00> : vector<2x96xf32>
    %101 = tpu.matmul %98, %10, %cst_34 {dimension_numbers = #tpu.dot_dimension_numbers<[1], [0], [0], [1], [0, 0, 1, 1], [], []>} : vector<2x32xf32>, vector<32x96xf32>, vector<2x96xf32> -> vector<2x96xf32>
    %102 = vector.extract_strided_slice %100 {offsets = [0, 0], sizes = [2, 32], strides = [1, 1]} : vector<2x96xf32> to vector<2x32xf32>
    %103 = vector.extract_strided_slice %101 {offsets = [0, 0], sizes = [2, 32], strides = [1, 1]} : vector<2x96xf32> to vector<2x32xf32>
    %104 = arith.addf %102, %103 : vector<2x32xf32>
    %105 = arith.negf %104 : vector<2x32xf32>
    %106 = math.exp %105 : vector<2x32xf32>
    %cst_35 = arith.constant 1.000000e+00 : f32
    %107 = vector.broadcast %cst_35 : f32 to vector<2x32xf32>
    %108 = arith.addf %107, %106 : vector<2x32xf32>
    %109 = arith.divf %107, %108 : vector<2x32xf32>
    %110 = vector.extract_strided_slice %100 {offsets = [0, 32], sizes = [2, 32], strides = [1, 1]} : vector<2x96xf32> to vector<2x32xf32>
    %111 = vector.extract_strided_slice %101 {offsets = [0, 32], sizes = [2, 32], strides = [1, 1]} : vector<2x96xf32> to vector<2x32xf32>
    %112 = arith.addf %110, %111 : vector<2x32xf32>
    %113 = arith.negf %112 : vector<2x32xf32>
    %114 = math.exp %113 : vector<2x32xf32>
    %cst_36 = arith.constant 1.000000e+00 : f32
    %115 = vector.broadcast %cst_36 : f32 to vector<2x32xf32>
    %116 = arith.addf %115, %114 : vector<2x32xf32>
    %117 = arith.divf %115, %116 : vector<2x32xf32>
    %118 = vector.extract_strided_slice %100 {offsets = [0, 64], sizes = [2, 32], strides = [1, 1]} : vector<2x96xf32> to vector<2x32xf32>
    %119 = vector.extract_strided_slice %101 {offsets = [0, 64], sizes = [2, 32], strides = [1, 1]} : vector<2x96xf32> to vector<2x32xf32>
    %120 = vector.broadcast %11 : vector<1x32xf32> to vector<2x32xf32>
    %121 = arith.addf %119, %120 : vector<2x32xf32>
    %122 = arith.mulf %109, %121 : vector<2x32xf32>
    %123 = arith.addf %118, %122 : vector<2x32xf32>
    %124 = math.tanh %123 : vector<2x32xf32>
    %125 = arith.subf %98, %124 : vector<2x32xf32>
    %126 = arith.mulf %117, %125 : vector<2x32xf32>
    %127 = arith.addf %124, %126 : vector<2x32xf32>
    %c6_37 = arith.constant 6 : index
    %c0_38 = arith.constant 0 : index
    %128 = vector.load %arg6[%c6_37, %c0_38] : memref<16x32xf32, #tpu.memory_space<vmem>>, vector<2x32xf32>
    tpu.vector_store %arg6[%c6_37, %c0_38], %127 {strides = array<i32>} : memref<16x32xf32, #tpu.memory_space<vmem>>, vector<2x32xf32>,
    %c8 = arith.constant 8 : index
    %c0_39 = arith.constant 0 : index
    %129 = vector.load %arg9[%c8, %c0_39] : memref<16x96xf32, #tpu.memory_space<vmem>>, vector<2x96xf32>
    %cst_40 = arith.constant dense<0.000000e+00> : vector<2x96xf32>
    %130 = tpu.matmul %127, %10, %cst_40 {dimension_numbers = #tpu.dot_dimension_numbers<[1], [0], [0], [1], [0, 0, 1, 1], [], []>} : vector<2x32xf32>, vector<32x96xf32>, vector<2x96xf32> -> vector<2x96xf32>
    %131 = vector.extract_strided_slice %129 {offsets = [0, 0], sizes = [2, 32], strides = [1, 1]} : vector<2x96xf32> to vector<2x32xf32>
    %132 = vector.extract_strided_slice %130 {offsets = [0, 0], sizes = [2, 32], strides = [1, 1]} : vector<2x96xf32> to vector<2x32xf32>
    %133 = arith.addf %131, %132 : vector<2x32xf32>
    %134 = arith.negf %133 : vector<2x32xf32>
    %135 = math.exp %134 : vector<2x32xf32>
    %cst_41 = arith.constant 1.000000e+00 : f32
    %136 = vector.broadcast %cst_41 : f32 to vector<2x32xf32>
    %137 = arith.addf %136, %135 : vector<2x32xf32>
    %138 = arith.divf %136, %137 : vector<2x32xf32>
    %139 = vector.extract_strided_slice %129 {offsets = [0, 32], sizes = [2, 32], strides = [1, 1]} : vector<2x96xf32> to vector<2x32xf32>
    %140 = vector.extract_strided_slice %130 {offsets = [0, 32], sizes = [2, 32], strides = [1, 1]} : vector<2x96xf32> to vector<2x32xf32>
    %141 = arith.addf %139, %140 : vector<2x32xf32>
    %142 = arith.negf %141 : vector<2x32xf32>
    %143 = math.exp %142 : vector<2x32xf32>
    %cst_42 = arith.constant 1.000000e+00 : f32
    %144 = vector.broadcast %cst_42 : f32 to vector<2x32xf32>
    %145 = arith.addf %144, %143 : vector<2x32xf32>
    %146 = arith.divf %144, %145 : vector<2x32xf32>
    %147 = vector.extract_strided_slice %129 {offsets = [0, 64], sizes = [2, 32], strides = [1, 1]} : vector<2x96xf32> to vector<2x32xf32>
    %148 = vector.extract_strided_slice %130 {offsets = [0, 64], sizes = [2, 32], strides = [1, 1]} : vector<2x96xf32> to vector<2x32xf32>
    %149 = vector.broadcast %11 : vector<1x32xf32> to vector<2x32xf32>
    %150 = arith.addf %148, %149 : vector<2x32xf32>
    %151 = arith.mulf %138, %150 : vector<2x32xf32>
    %152 = arith.addf %147, %151 : vector<2x32xf32>
    %153 = math.tanh %152 : vector<2x32xf32>
    %154 = arith.subf %127, %153 : vector<2x32xf32>
    %155 = arith.mulf %146, %154 : vector<2x32xf32>
    %156 = arith.addf %153, %155 : vector<2x32xf32>
    %c8_43 = arith.constant 8 : index
    %c0_44 = arith.constant 0 : index
    %157 = vector.load %arg6[%c8_43, %c0_44] : memref<16x32xf32, #tpu.memory_space<vmem>>, vector<2x32xf32>
    tpu.vector_store %arg6[%c8_43, %c0_44], %156 {strides = array<i32>} : memref<16x32xf32, #tpu.memory_space<vmem>>, vector<2x32xf32>,
    %c10 = arith.constant 10 : index
    %c0_45 = arith.constant 0 : index
    %158 = vector.load %arg9[%c10, %c0_45] : memref<16x96xf32, #tpu.memory_space<vmem>>, vector<2x96xf32>
    %cst_46 = arith.constant dense<0.000000e+00> : vector<2x96xf32>
    %159 = tpu.matmul %156, %10, %cst_46 {dimension_numbers = #tpu.dot_dimension_numbers<[1], [0], [0], [1], [0, 0, 1, 1], [], []>} : vector<2x32xf32>, vector<32x96xf32>, vector<2x96xf32> -> vector<2x96xf32>
    %160 = vector.extract_strided_slice %158 {offsets = [0, 0], sizes = [2, 32], strides = [1, 1]} : vector<2x96xf32> to vector<2x32xf32>
    %161 = vector.extract_strided_slice %159 {offsets = [0, 0], sizes = [2, 32], strides = [1, 1]} : vector<2x96xf32> to vector<2x32xf32>
    %162 = arith.addf %160, %161 : vector<2x32xf32>
    %163 = arith.negf %162 : vector<2x32xf32>
    %164 = math.exp %163 : vector<2x32xf32>
    %cst_47 = arith.constant 1.000000e+00 : f32
    %165 = vector.broadcast %cst_47 : f32 to vector<2x32xf32>
    %166 = arith.addf %165, %164 : vector<2x32xf32>
    %167 = arith.divf %165, %166 : vector<2x32xf32>
    %168 = vector.extract_strided_slice %158 {offsets = [0, 32], sizes = [2, 32], strides = [1, 1]} : vector<2x96xf32> to vector<2x32xf32>
    %169 = vector.extract_strided_slice %159 {offsets = [0, 32], sizes = [2, 32], strides = [1, 1]} : vector<2x96xf32> to vector<2x32xf32>
    %170 = arith.addf %168, %169 : vector<2x32xf32>
    %171 = arith.negf %170 : vector<2x32xf32>
    %172 = math.exp %171 : vector<2x32xf32>
    %cst_48 = arith.constant 1.000000e+00 : f32
    %173 = vector.broadcast %cst_48 : f32 to vector<2x32xf32>
    %174 = arith.addf %173, %172 : vector<2x32xf32>
    %175 = arith.divf %173, %174 : vector<2x32xf32>
    %176 = vector.extract_strided_slice %158 {offsets = [0, 64], sizes = [2, 32], strides = [1, 1]} : vector<2x96xf32> to vector<2x32xf32>
    %177 = vector.extract_strided_slice %159 {offsets = [0, 64], sizes = [2, 32], strides = [1, 1]} : vector<2x96xf32> to vector<2x32xf32>
    %178 = vector.broadcast %11 : vector<1x32xf32> to vector<2x32xf32>
    %179 = arith.addf %177, %178 : vector<2x32xf32>
    %180 = arith.mulf %167, %179 : vector<2x32xf32>
    %181 = arith.addf %176, %180 : vector<2x32xf32>
    %182 = math.tanh %181 : vector<2x32xf32>
    %183 = arith.subf %156, %182 : vector<2x32xf32>
    %184 = arith.mulf %175, %183 : vector<2x32xf32>
    %185 = arith.addf %182, %184 : vector<2x32xf32>
    %c10_49 = arith.constant 10 : index
    %c0_50 = arith.constant 0 : index
    %186 = vector.load %arg6[%c10_49, %c0_50] : memref<16x32xf32, #tpu.memory_space<vmem>>, vector<2x32xf32>
    tpu.vector_store %arg6[%c10_49, %c0_50], %185 {strides = array<i32>} : memref<16x32xf32, #tpu.memory_space<vmem>>, vector<2x32xf32>,
    %c12 = arith.constant 12 : index
    %c0_51 = arith.constant 0 : index
    %187 = vector.load %arg9[%c12, %c0_51] : memref<16x96xf32, #tpu.memory_space<vmem>>, vector<2x96xf32>
    %cst_52 = arith.constant dense<0.000000e+00> : vector<2x96xf32>
    %188 = tpu.matmul %185, %10, %cst_52 {dimension_numbers = #tpu.dot_dimension_numbers<[1], [0], [0], [1], [0, 0, 1, 1], [], []>} : vector<2x32xf32>, vector<32x96xf32>, vector<2x96xf32> -> vector<2x96xf32>
    %189 = vector.extract_strided_slice %187 {offsets = [0, 0], sizes = [2, 32], strides = [1, 1]} : vector<2x96xf32> to vector<2x32xf32>
    %190 = vector.extract_strided_slice %188 {offsets = [0, 0], sizes = [2, 32], strides = [1, 1]} : vector<2x96xf32> to vector<2x32xf32>
    %191 = arith.addf %189, %190 : vector<2x32xf32>
    %192 = arith.negf %191 : vector<2x32xf32>
    %193 = math.exp %192 : vector<2x32xf32>
    %cst_53 = arith.constant 1.000000e+00 : f32
    %194 = vector.broadcast %cst_53 : f32 to vector<2x32xf32>
    %195 = arith.addf %194, %193 : vector<2x32xf32>
    %196 = arith.divf %194, %195 : vector<2x32xf32>
    %197 = vector.extract_strided_slice %187 {offsets = [0, 32], sizes = [2, 32], strides = [1, 1]} : vector<2x96xf32> to vector<2x32xf32>
    %198 = vector.extract_strided_slice %188 {offsets = [0, 32], sizes = [2, 32], strides = [1, 1]} : vector<2x96xf32> to vector<2x32xf32>
    %199 = arith.addf %197, %198 : vector<2x32xf32>
    %200 = arith.negf %199 : vector<2x32xf32>
    %201 = math.exp %200 : vector<2x32xf32>
    %cst_54 = arith.constant 1.000000e+00 : f32
    %202 = vector.broadcast %cst_54 : f32 to vector<2x32xf32>
    %203 = arith.addf %202, %201 : vector<2x32xf32>
    %204 = arith.divf %202, %203 : vector<2x32xf32>
    %205 = vector.extract_strided_slice %187 {offsets = [0, 64], sizes = [2, 32], strides = [1, 1]} : vector<2x96xf32> to vector<2x32xf32>
    %206 = vector.extract_strided_slice %188 {offsets = [0, 64], sizes = [2, 32], strides = [1, 1]} : vector<2x96xf32> to vector<2x32xf32>
    %207 = vector.broadcast %11 : vector<1x32xf32> to vector<2x32xf32>
    %208 = arith.addf %206, %207 : vector<2x32xf32>
    %209 = arith.mulf %196, %208 : vector<2x32xf32>
    %210 = arith.addf %205, %209 : vector<2x32xf32>
    %211 = math.tanh %210 : vector<2x32xf32>
    %212 = arith.subf %185, %211 : vector<2x32xf32>
    %213 = arith.mulf %204, %212 : vector<2x32xf32>
    %214 = arith.addf %211, %213 : vector<2x32xf32>
    %c12_55 = arith.constant 12 : index
    %c0_56 = arith.constant 0 : index
    %215 = vector.load %arg6[%c12_55, %c0_56] : memref<16x32xf32, #tpu.memory_space<vmem>>, vector<2x32xf32>
    tpu.vector_store %arg6[%c12_55, %c0_56], %214 {strides = array<i32>} : memref<16x32xf32, #tpu.memory_space<vmem>>, vector<2x32xf32>,
    %c14 = arith.constant 14 : index
    %c0_57 = arith.constant 0 : index
    %216 = vector.load %arg9[%c14, %c0_57] : memref<16x96xf32, #tpu.memory_space<vmem>>, vector<2x96xf32>
    %cst_58 = arith.constant dense<0.000000e+00> : vector<2x96xf32>
    %217 = tpu.matmul %214, %10, %cst_58 {dimension_numbers = #tpu.dot_dimension_numbers<[1], [0], [0], [1], [0, 0, 1, 1], [], []>} : vector<2x32xf32>, vector<32x96xf32>, vector<2x96xf32> -> vector<2x96xf32>
    %218 = vector.extract_strided_slice %216 {offsets = [0, 0], sizes = [2, 32], strides = [1, 1]} : vector<2x96xf32> to vector<2x32xf32>
    %219 = vector.extract_strided_slice %217 {offsets = [0, 0], sizes = [2, 32], strides = [1, 1]} : vector<2x96xf32> to vector<2x32xf32>
    %220 = arith.addf %218, %219 : vector<2x32xf32>
    %221 = arith.negf %220 : vector<2x32xf32>
    %222 = math.exp %221 : vector<2x32xf32>
    %cst_59 = arith.constant 1.000000e+00 : f32
    %223 = vector.broadcast %cst_59 : f32 to vector<2x32xf32>
    %224 = arith.addf %223, %222 : vector<2x32xf32>
    %225 = arith.divf %223, %224 : vector<2x32xf32>
    %226 = vector.extract_strided_slice %216 {offsets = [0, 32], sizes = [2, 32], strides = [1, 1]} : vector<2x96xf32> to vector<2x32xf32>
    %227 = vector.extract_strided_slice %217 {offsets = [0, 32], sizes = [2, 32], strides = [1, 1]} : vector<2x96xf32> to vector<2x32xf32>
    %228 = arith.addf %226, %227 : vector<2x32xf32>
    %229 = arith.negf %228 : vector<2x32xf32>
    %230 = math.exp %229 : vector<2x32xf32>
    %cst_60 = arith.constant 1.000000e+00 : f32
    %231 = vector.broadcast %cst_60 : f32 to vector<2x32xf32>
    %232 = arith.addf %231, %230 : vector<2x32xf32>
    %233 = arith.divf %231, %232 : vector<2x32xf32>
    %234 = vector.extract_strided_slice %216 {offsets = [0, 64], sizes = [2, 32], strides = [1, 1]} : vector<2x96xf32> to vector<2x32xf32>
    %235 = vector.extract_strided_slice %217 {offsets = [0, 64], sizes = [2, 32], strides = [1, 1]} : vector<2x96xf32> to vector<2x32xf32>
    %236 = vector.broadcast %11 : vector<1x32xf32> to vector<2x32xf32>
    %237 = arith.addf %235, %236 : vector<2x32xf32>
    %238 = arith.mulf %225, %237 : vector<2x32xf32>
    %239 = arith.addf %234, %238 : vector<2x32xf32>
    %240 = math.tanh %239 : vector<2x32xf32>
    %241 = arith.subf %214, %240 : vector<2x32xf32>
    %242 = arith.mulf %233, %241 : vector<2x32xf32>
    %243 = arith.addf %240, %242 : vector<2x32xf32>
    %c14_61 = arith.constant 14 : index
    %c0_62 = arith.constant 0 : index
    %244 = vector.load %arg6[%c14_61, %c0_62] : memref<16x32xf32, #tpu.memory_space<vmem>>, vector<2x32xf32>
    tpu.vector_store %arg6[%c14_61, %c0_62], %243 {strides = array<i32>} : memref<16x32xf32, #tpu.memory_space<vmem>>, vector<2x32xf32>,
    %c0_63 = arith.constant 0 : index
    %c0_64 = arith.constant 0 : index
    %245 = vector.load %arg8[%c0_63, %c0_64] : memref<2x32xf32, #tpu.memory_space<vmem>>, vector<2x32xf32>
    tpu.vector_store %arg8[%c0_63, %c0_64], %243 {strides = array<i32>} : memref<2x32xf32, #tpu.memory_space<vmem>>, vector<2x32xf32>,
    %c0_i32_65 = arith.constant 0 : i32
    %246 = arith.cmpi eq, %arg0, %c0_i32_65 : i32
    %247 = arith.extui %246 : i1 to i32
    %c0_i32_66 = arith.constant 0 : i32
    %248 = arith.cmpi ne, %247, %c0_i32_66 : i32
    scf.if %248 {
      %c0_67 = arith.constant 0 : index
      %c0_68 = arith.constant 0 : index
      %249 = vector.load %arg7[%c0_67, %c0_68] : memref<2x32xf32, #tpu.memory_space<vmem>>, vector<2x32xf32>
      tpu.vector_store %arg7[%c0_67, %c0_68], %243 {strides = array<i32>} : memref<2x32xf32, #tpu.memory_space<vmem>>, vector<2x32xf32>,
    } else {
    }
    return
  }
  func.func @transform_0(%arg0: i32) -> (i32, i32) {
    %c0_i32 = arith.constant 0 : i32
    %c0_i32_0 = arith.constant 0 : i32
    return %arg0, %c0_i32 : i32, i32
  }
  func.func @transform_1(%arg0: i32) -> (i32, i32) {
    %c0_i32 = arith.constant 0 : i32
    %c0_i32_0 = arith.constant 0 : i32
    %c0_i32_1 = arith.constant 0 : i32
    return %c0_i32, %c0_i32_0 : i32, i32
  }
  func.func @transform_2(%arg0: i32) -> (i32, i32) {
    %c0_i32 = arith.constant 0 : i32
    %c0_i32_0 = arith.constant 0 : i32
    %c0_i32_1 = arith.constant 0 : i32
    return %c0_i32, %c0_i32_0 : i32, i32
  }
  func.func @transform_3(%arg0: i32) -> (i32, i32) {
    %c0_i32 = arith.constant 0 : i32
    %c0_i32_0 = arith.constant 0 : i32
    %c0_i32_1 = arith.constant 0 : i32
    return %c0_i32, %c0_i32_0 : i32, i32
  }
  func.func @transform_4(%arg0: i32) -> (i32, i32) {
    %c0_i32 = arith.constant 0 : i32
    %c0_i32_0 = arith.constant 0 : i32
    %c0_i32_1 = arith.constant 0 : i32
    return %c0_i32, %c0_i32_0 : i32, i32
  }
  func.func @transform_5(%arg0: i32) -> (i32, i32) {
    %c0_i32 = arith.constant 0 : i32
    %c0_i32_0 = arith.constant 0 : i32
    return %arg0, %c0_i32 : i32, i32
  }
  func.func @transform_6(%arg0: i32) -> (i32, i32) {
    %c0_i32 = arith.constant 0 : i32
    %c0_i32_0 = arith.constant 0 : i32
    %c0_i32_1 = arith.constant 0 : i32
    return %c0_i32, %c0_i32_0 : i32, i32
  }
}

</mosaic_0001>

<llo_original>
// kernel: rnn_forward.3
$region0: #{rnn_forward.3}
  #allocation0 [shape = 'u32[]', space=smem, size = 0x4, offset = 0x4, fixed_abs, tag = 'smem constant byte address 0x4 - core index']
  #allocation1 [shape = 'u32[144,128]{1,0:T(1,128)}', space=vmem, size = 0x12000, scoped, tag = 'internal scratch']
  #allocation2 [shape = 'f32[2,32]{1,0:T(2,128)}', space=vmem, size = 0x400, scoped, tag = 'scratch operand']
  #allocation3 [shape = 'f32[16,96]{1,0:T(8,128)}', space=vmem, size = 0x2000, scoped, tag = 'scratch operand']
  %s0 = inlined_call_operand.vmem [shape: f32[16,32], index: 0, kind: input, shape index: {}]
  %s1 = inlined_call_operand.vmem [shape: f32[32,96], index: 1, kind: input, shape index: {}]
  %s2 = inlined_call_operand.vmem [shape: f32[1,96], index: 2, kind: input, shape index: {}]
  %s3 = inlined_call_operand.vmem [shape: f32[32,96], index: 3, kind: input, shape index: {}]
  %s4 = inlined_call_operand.vmem [shape: f32[1,32], index: 4, kind: input, shape index: {}]
  %s5 = inlined_call_operand.vmem [shape: f32[32,8], index: 5, kind: input, shape index: {}]
  %s6 = inlined_call_operand.vmem [shape: f32[1,8], index: 6, kind: input, shape index: {}]
  %s7 = inlined_call_operand.vmem [shape: f32[2,32], index: 7, kind: output, shape index: {0}]
  %s8 = inlined_call_operand.hbm [shape: f32[2,8], index: 8, kind: output, shape index: {1}]
  %9 = xla_tuple %s7, %s8
  %s10 = sld [smem:[#allocation0]]
  $region54: #{rnn_forward.3} parent=0
    _
  %s12 = ssub.s32 1, %s10
  %s13 = scalar_select 0, %s12, %s10
  $region1: #{rnn_forward.3} parent=0
    #allocation4 [shape = 'u8[1024]{0}', space=vmem, size = 0x400, scoped, tag = 'output window, operand 1, single buffered']
    #allocation5 [shape = 's32[1]{0}', space=sflag, size = 0x4, scoped, tag = 'scoped memory for rnn_forward.3']
    %14 = vsyncpa [#allocation5], 0
    // Predicated region
    $region2: #{rnn_forward.3} parent=1 // pred_check
      _
    $region3: #{rnn_forward.3} parent=1 // pred_check_branch
      %16 = sbr.rel (0) target = $region5
    $region4: #{rnn_forward.3} parent=1 // pred_region
      _
    $region5: #{rnn_forward.3} parent=1 // pred_fallthru
      _
    // Predicated region
    $region6: #{rnn_forward.3} parent=1 // pred_check
      _
    $region7: #{rnn_forward.3} parent=1 // pred_check_branch
      %18 = sbr.rel (0) target = $region9
    $region8: #{rnn_forward.3} parent=1 // pred_region
      _
    $region9: #{rnn_forward.3} parent=1 // pred_fallthru
      _
    // Predicated region
    $region10: #{rnn_forward.3} parent=1 // pred_check
      _
    $region11: #{rnn_forward.3} parent=1 // pred_check_branch
      %20 = sbr.rel (0) target = $region13
    $region12: #{rnn_forward.3} parent=1 // pred_region
      _
    $region13: #{rnn_forward.3} parent=1 // pred_fallthru
      _
    // Predicated region
    $region14: #{rnn_forward.3} parent=1 // pred_check
      _
    $region15: #{rnn_forward.3} parent=1 // pred_check_branch
      %22 = sbr.rel (0) target = $region17
    $region16: #{rnn_forward.3} parent=1 // pred_region
      _
    $region17: #{rnn_forward.3} parent=1 // pred_fallthru
      _
    // Predicated region
    $region18: #{rnn_forward.3} parent=1 // pred_check
      _
    $region19: #{rnn_forward.3} parent=1 // pred_check_branch
      %24 = sbr.rel (0) target = $region21
    $region20: #{rnn_forward.3} parent=1 // pred_region
      _
    $region21: #{rnn_forward.3} parent=1 // pred_fallthru
      _
    // Predicated region
    $region22: #{rnn_forward.3} parent=1 // pred_check
      _
    $region23: #{rnn_forward.3} parent=1 // pred_check_branch
      %26 = sbr.rel (0) target = $region25
    $region24: #{rnn_forward.3} parent=1 // pred_region
      _
    $region25: #{rnn_forward.3} parent=1 // pred_fallthru
      _
    // Predicated region
    $region26: #{rnn_forward.3} parent=1 // pred_check
      _
    $region27: #{rnn_forward.3} parent=1 // pred_check_branch
      %28 = sbr.rel (0) target = $region29
    $region28: #{rnn_forward.3} parent=1 // pred_region
      _
    $region29: #{rnn_forward.3} parent=1 // pred_fallthru
      _
    %p29 = scmp.eq.s32.totalorder 0, 0
    // Predicated region
    $region30: #{rnn_forward.3} parent=1 // pred_check
      %p30 = pneg %p29
    $region31: #{rnn_forward.3} parent=1 // pred_check_branch
      %32 = sbr.rel (%p30) target = $region33
    $region32: #{rnn_forward.3} parent=1 // pred_region
      %vm33 = vcmask 254976
      %34 = vst.msk [vmem:[#allocation2] sm:$0x3] %vm33, 0.0
    $region33: #{rnn_forward.3} parent=1 // pred_fallthru
      _
    %v35 = vld [vmem:[%s0] sm:$0xff]
    %v36 = vld [vmem:[%s0 + $0x8] sm:$0xff]
    %v37 = vld [vmem:[%s1] sm:$0xff]
    %v38 = vld [vmem:[%s1 + $0x8] sm:$0xff]
    %v39 = vld [vmem:[%s1 + $0x10] sm:$0xff]
    %v40 = vld [vmem:[%s1 + $0x18] sm:$0xff]
    %v41 = vld [vmem:[%s2] sm:$0x1]
    %v43 = vlaneseq
    %v44 = vshrl.u32 %v43, 7
    %v45 = vsub.s32 0, %v44
    %v46 = vrot.slane %v41, %v45
    %vm48 = vcmask 261120
    %v50 = vsel %vm48, %v35, 0
    %v53 = vsel %vm48, %v36, 0
    %55 = vmatprep.subr.mxu0 0.0
    %56 = vmatpush1.msra.mxu0 %v37
    %57 = vmatprep.subr.mxu0 0.0
    %58 = vmatpush1.msra.mxu0 %v38
    %59 = vmatprep.subr.mxu0 0.0
    %60 = vmatpush1.msra.mxu0 %v39
    %61 = vmatprep.subr.mxu0 0.0
    %62 = vmatpush1.msra.mxu0 %v40
    %63 = vmatprep.subr.mxu0 0.0
    %64 = vmatpush1.msra.mxu0 0.0
    %65 = vmatprep.subr.mxu0 0.0
    %66 = vmatpush1.msra.mxu0 0.0
    %67 = vmatprep.subr.mxu0 0.0
    %68 = vmatpush1.msra.mxu0 0.0
    %69 = vmatprep.subr.mxu0 0.0
    %70 = vmatpush1.msra.mxu0 0.0
    %71 = vmatprep.subr.mxu0 0.0
    %72 = vmatpush1.msra.mxu0 0.0
    %73 = vmatprep.subr.mxu0 0.0
    %74 = vmatpush1.msra.mxu0 0.0
    %75 = vmatprep.subr.mxu0 0.0
    %76 = vmatpush1.msra.mxu0 0.0
    %77 = vmatprep.subr.mxu0 0.0
    %78 = vmatpush1.msra.mxu0 0.0
    %79 = vmatprep.subr.mxu0 0.0
    %80 = vmatpush1.msra.mxu0 0.0
    %81 = vmatprep.subr.mxu0 0.0
    %82 = vmatpush1.msra.mxu0 0.0
    %83 = vmatprep.subr.mxu0 0.0
    %84 = vmatpush1.msra.mxu0 0.0
    %85 = vmatprep.subr.mxu0 0.0
    %86 = vmatpush1.msra.mxu0 0.0
    %87 = vmatprep.subr.mxu0 0.0
    %88 = vmatpush1.msra.mxu0 0.0
    %89 = vmatprep.subr.mxu0 0.0
    %90 = vmatpush1.msra.mxu0 0.0
    %91 = vmatprep.subr.mxu0 0.0
    %92 = vmatpush1.msra.mxu0 0.0
    %93 = vmatprep.subr.mxu0 0.0
    %94 = vmatpush1.msra.mxu0 0.0
    %95 = vmatprep.subr.mxu0 0.0
    %96 = vmatpush1.msra.mxu0 0.0
    %97 = vmatprep.subr.mxu0 0.0
    %98 = vmatpush1.msra.mxu0 0.0
    %99 = vmatprep.subr.mxu0 0.0
    %100 = vmatpush1.msra.mxu0 0.0
    %101 = vmatprep.subr.mxu0 0.0
    %102 = vmatpush1.msra.mxu0 0.0
    %103 = vmatprep.subr.mxu0 0.0
    %104 = vmatpush1.msra.mxu0 0.0
    %105 = vmatprep.subr.mxu0 0.0
    %106 = vmatpush1.msra.mxu0 0.0
    %107 = vmatprep.subr.mxu0 0.0
    %108 = vmatpush1.msra.mxu0 0.0
    %109 = vmatprep.subr.mxu0 0.0
    %110 = vmatpush1.msra.mxu0 0.0
    %111 = vmatprep.subr.mxu0 0.0
    %112 = vmatpush1.msra.mxu0 0.0
    %113 = vmatprep.subr.mxu0 0.0
    %114 = vmatpush1.msra.mxu0 0.0
    %115 = vmatprep.subr.mxu0 0.0
    %116 = vmatpush1.msra.mxu0 0.0
    %117 = vmatprep.subr.mxu0 0.0
    %118 = vmatpush1.msra.mxu0 0.0
    %119 = vmatprep.mubr.f32.mxu0 0.0
    %120 = vmatmul.mubr.f32.gmra.mrb[0].mxu0 %v50
    %v121 = vpop.f32.mrb[0].mxu0
    %v122 = vadd.f32 %v46, %v121
    %v123 = vpop.f32.mrb[0].mxu0
    %124 = vmatprep.mubr.f32.mxu0 0.0
    %125 = vmatmul.mubr.f32.gmra.mrb[0].mxu0 %v53
    %v126 = vpop.f32.mrb[0].mxu0
    %v127 = vadd.f32 %v46, %v126
    %v128 = vpop.f32.mrb[0].mxu0
    %129 = vdwg.mxu0
    %vm130 = vcmask 785408
    %131 = vst.msk [vmem:[#allocation3] sm:$0xff] %vm130, %v122
    %132 = vst.msk [vmem:[#allocation3 + $0x8] sm:$0xff] %vm130, %v127
    %v133 = vld [vmem:[%s3] sm:$0xff]
    %v134 = vld [vmem:[%s3 + $0x8] sm:$0xff]
    %v135 = vld [vmem:[%s3 + $0x10] sm:$0xff]
    %v136 = vld [vmem:[%s3 + $0x18] sm:$0xff]
    %v137 = vld [vmem:[%s4] sm:$0x1]
    %v138 = vld [vmem:[#allocation2] sm:$0x3]
    %v139 = vld [vmem:[#allocation3] sm:$0x3]
    %v141 = vsel %vm48, %v138, 0
    %143 = vmatprep.subr.mxu0 0.0
    %144 = vmatpush1.msra.mxu0 %v133
    %145 = vmatprep.subr.mxu0 0.0
    %146 = vmatpush1.msra.mxu0 %v134
    %147 = vmatprep.subr.mxu0 0.0
    %148 = vmatpush1.msra.mxu0 %v135
    %149 = vmatprep.subr.mxu0 0.0
    %150 = vmatpush1.msra.mxu0 %v136
    %151 = vmatprep.subr.mxu0 0.0
    %152 = vmatpush1.msra.mxu0 0.0
    %153 = vmatprep.subr.mxu0 0.0
    %154 = vmatpush1.msra.mxu0 0.0
    %155 = vmatprep.subr.mxu0 0.0
    %156 = vmatpush1.msra.mxu0 0.0
    %157 = vmatprep.subr.mxu0 0.0
    %158 = vmatpush1.msra.mxu0 0.0
    %159 = vmatprep.subr.mxu0 0.0
    %160 = vmatpush1.msra.mxu0 0.0
    %161 = vmatprep.subr.mxu0 0.0
    %162 = vmatpush1.msra.mxu0 0.0
    %163 = vmatprep.subr.mxu0 0.0
    %164 = vmatpush1.msra.mxu0 0.0
    %165 = vmatprep.subr.mxu0 0.0
    %166 = vmatpush1.msra.mxu0 0.0
    %167 = vmatprep.subr.mxu0 0.0
    %168 = vmatpush1.msra.mxu0 0.0
    %169 = vmatprep.subr.mxu0 0.0
    %170 = vmatpush1.msra.mxu0 0.0
    %171 = vmatprep.subr.mxu0 0.0
    %172 = vmatpush1.msra.mxu0 0.0
    %173 = vmatprep.subr.mxu0 0.0
    %174 = vmatpush1.msra.mxu0 0.0
    %175 = vmatprep.subr.mxu0 0.0
    %176 = vmatpush1.msra.mxu0 0.0
    %177 = vmatprep.subr.mxu0 0.0
    %178 = vmatpush1.msra.mxu0 0.0
    %179 = vmatprep.subr.mxu0 0.0
    %180 = vmatpush1.msra.mxu0 0.0
    %181 = vmatprep.subr.mxu0 0.0
    %182 = vmatpush1.msra.mxu0 0.0
    %183 = vmatprep.subr.mxu0 0.0
    %184 = vmatpush1.msra.mxu0 0.0
    %185 = vmatprep.subr.mxu0 0.0
    %186 = vmatpush1.msra.mxu0 0.0
    %187 = vmatprep.subr.mxu0 0.0
    %188 = vmatpush1.msra.mxu0 0.0
    %189 = vmatprep.subr.mxu0 0.0
    %190 = vmatpush1.msra.mxu0 0.0
    %191 = vmatprep.subr.mxu0 0.0
    %192 = vmatpush1.msra.mxu0 0.0
    %193 = vmatprep.subr.mxu0 0.0
    %194 = vmatpush1.msra.mxu0 0.0
    %195 = vmatprep.subr.mxu0 0.0
    %196 = vmatpush1.msra.mxu0 0.0
    %197 = vmatprep.subr.mxu0 0.0
    %198 = vmatpush1.msra.mxu0 0.0
    %199 = vmatprep.subr.mxu0 0.0
    %200 = vmatpush1.msra.mxu0 0.0
    %201 = vmatprep.subr.mxu0 0.0
    %202 = vmatpush1.msra.mxu0 0.0
    %203 = vmatprep.subr.mxu0 0.0
    %204 = vmatpush1.msra.mxu0 0.0
    %205 = vmatprep.subr.mxu0 0.0
    %206 = vmatpush1.msra.mxu0 0.0
    %207 = vmatprep.mubr.f32.mxu0 0.0
    %208 = vmatmul.mubr.f32.gmra.mrb[0].mxu0 %v141
    %v209 = vpop.f32.mrb[0].mxu0
    %v210 = vadd.f32 0.0, %v209
    %v211 = vpop.f32.mrb[0].mxu0
    %212 = vdwg.mxu0
    %v213 = vadd.f32 %v139, %v210
    %v214 = vxor.u32 %v213, 2147483648
    %v215 = vmul.f32 %v214, 1.442695
    %v216 = vpow.pop %v215
    %v217 = vadd.f32 %v216, 1.0
    %v218 = vrcp.pop %v217
    %v219 = vmul.f32 1.0, %v218
    %v221 = vlaneseq
    %v222 = vshrl.u32 %v221, 7
    %v223 = vsub.s32 0, %v222
    %v224 = vrot.slane %v137, %v223
    %225 = vrot.lane.b32.xlu0 %v224, 64
    %v226 = vpop.permute.xlu0 %225
    %v228 = vadd.f32 %v210, %v226
    %230 = vrot.lane.b32.xlu0 %v228, 64
    %v231 = vpop.permute.xlu0 %230
    %v233 = vmul.f32 %v219, %v231
    %235 = vrot.lane.b32.xlu0 %v233, 64
    %v236 = vpop.permute.xlu0 %235
    %v238 = vadd.f32 %v139, %v236
    %v239 = vtanh.pop %v238
    %241 = vrot.lane.b32.xlu0 %v239, 64
    %v242 = vpop.permute.xlu0 %241
    %v244 = vsub.f32 %v138, %v242
    %246 = vrot.lane.b32.xlu0 %v244, 32
    %v247 = vpop.permute.xlu0 %246
    %v249 = vmul.f32 %v219, %v247
    %251 = vrot.lane.b32.xlu0 %v249, 32
    %v252 = vpop.permute.xlu0 %251
    %v254 = vadd.f32 %v239, %v252
    %v255 = vld [vmem:[#allocation3 + $0x2] sm:$0x3]
    %257 = vrot.lane.b32.xlu0 %v254, 64
    %v258 = vpop.permute.xlu0 %257
    %v259 = vsel %vm48, %v258, 0
    %261 = vmatprep.subr.mxu0 0.0
    %262 = vmatpush1.msra.mxu0 %v133
    %263 = vmatprep.subr.mxu0 0.0
    %264 = vmatpush1.msra.mxu0 %v134
    %265 = vmatprep.subr.mxu0 0.0
    %266 = vmatpush1.msra.mxu0 %v135
    %267 = vmatprep.subr.mxu0 0.0
    %268 = vmatpush1.msra.mxu0 %v136
    %269 = vmatprep.subr.mxu0 0.0
    %270 = vmatpush1.msra.mxu0 0.0
    %271 = vmatprep.subr.mxu0 0.0
    %272 = vmatpush1.msra.mxu0 0.0
    %273 = vmatprep.subr.mxu0 0.0
    %274 = vmatpush1.msra.mxu0 0.0
    %275 = vmatprep.subr.mxu0 0.0
    %276 = vmatpush1.msra.mxu0 0.0
    %277 = vmatprep.subr.mxu0 0.0
    %278 = vmatpush1.msra.mxu0 0.0
    %279 = vmatprep.subr.mxu0 0.0
    %280 = vmatpush1.msra.mxu0 0.0
    %281 = vmatprep.subr.mxu0 0.0
    %282 = vmatpush1.msra.mxu0 0.0
    %283 = vmatprep.subr.mxu0 0.0
    %284 = vmatpush1.msra.mxu0 0.0
    %285 = vmatprep.subr.mxu0 0.0
    %286 = vmatpush1.msra.mxu0 0.0
    %287 = vmatprep.subr.mxu0 0.0
    %288 = vmatpush1.msra.mxu0 0.0
    %289 = vmatprep.subr.mxu0 0.0
    %290 = vmatpush1.msra.mxu0 0.0
    %291 = vmatprep.subr.mxu0 0.0
    %292 = vmatpush1.msra.mxu0 0.0
    %293 = vmatprep.subr.mxu0 0.0
    %294 = vmatpush1.msra.mxu0 0.0
    %295 = vmatprep.subr.mxu0 0.0
    %296 = vmatpush1.msra.mxu0 0.0
    %297 = vmatprep.subr.mxu0 0.0
    %298 = vmatpush1.msra.mxu0 0.0
    %299 = vmatprep.subr.mxu0 0.0
    %300 = vmatpush1.msra.mxu0 0.0
    %301 = vmatprep.subr.mxu0 0.0
    %302 = vmatpush1.msra.mxu0 0.0
    %303 = vmatprep.subr.mxu0 0.0
    %304 = vmatpush1.msra.mxu0 0.0
    %305 = vmatprep.subr.mxu0 0.0
    %306 = vmatpush1.msra.mxu0 0.0
    %307 = vmatprep.subr.mxu0 0.0
    %308 = vmatpush1.msra.mxu0 0.0
    %309 = vmatprep.subr.mxu0 0.0
    %310 = vmatpush1.msra.mxu0 0.0
    %311 = vmatprep.subr.mxu0 0.0
    %312 = vmatpush1.msra.mxu0 0.0
    %313 = vmatprep.subr.mxu0 0.0
    %314 = vmatpush1.msra.mxu0 0.0
    %315 = vmatprep.subr.mxu0 0.0
    %316 = vmatpush1.msra.mxu0 0.0
    %317 = vmatprep.subr.mxu0 0.0
    %318 = vmatpush1.msra.mxu0 0.0
    %319 = vmatprep.subr.mxu0 0.0
    %320 = vmatpush1.msra.mxu0 0.0
    %321 = vmatprep.subr.mxu0 0.0
    %322 = vmatpush1.msra.mxu0 0.0
    %323 = vmatprep.subr.mxu0 0.0
    %324 = vmatpush1.msra.mxu0 0.0
    %325 = vmatprep.mubr.f32.mxu0 0.0
    %326 = vmatmul.mubr.f32.gmra.mrb[0].mxu0 %v259
    %v327 = vpop.f32.mrb[0].mxu0
    %v328 = vadd.f32 0.0, %v327
    %v329 = vpop.f32.mrb[0].mxu0
    %330 = vdwg.mxu0
    %v331 = vadd.f32 %v255, %v328
    %v332 = vxor.u32 %v331, 2147483648
    %v333 = vmul.f32 %v332, 1.442695
    %v334 = vpow.pop %v333
    %v335 = vadd.f32 %v334, 1.0
    %v336 = vrcp.pop %v335
    %v337 = vmul.f32 1.0, %v336
    %v338 = vadd.f32 %v328, %v226
    %340 = vrot.lane.b32.xlu0 %v338, 64
    %v341 = vpop.permute.xlu0 %340
    %v343 = vmul.f32 %v337, %v341
    %345 = vrot.lane.b32.xlu0 %v343, 64
    %v346 = vpop.permute.xlu0 %345
    %v348 = vadd.f32 %v255, %v346
    %v349 = vtanh.pop %v348
    %v350 = vsub.f32 %v254, %v349
    %352 = vrot.lane.b32.xlu0 %v350, 96
    %v353 = vpop.permute.xlu0 %352
    %v355 = vmul.f32 %v337, %v353
    %357 = vrot.lane.b32.xlu0 %v355, 32
    %v358 = vpop.permute.xlu0 %357
    %v360 = vadd.f32 %v349, %v358
    %v361 = vld [vmem:[#allocation3 + $0x4] sm:$0x3]
    %363 = vrot.lane.b32.xlu0 %v360, 64
    %v364 = vpop.permute.xlu0 %363
    %v365 = vsel %vm48, %v364, 0
    %367 = vmatprep.subr.mxu0 0.0
    %368 = vmatpush1.msra.mxu0 %v133
    %369 = vmatprep.subr.mxu0 0.0
    %370 = vmatpush1.msra.mxu0 %v134
    %371 = vmatprep.subr.mxu0 0.0
    %372 = vmatpush1.msra.mxu0 %v135
    %373 = vmatprep.subr.mxu0 0.0
    %374 = vmatpush1.msra.mxu0 %v136
    %375 = vmatprep.subr.mxu0 0.0
    %376 = vmatpush1.msra.mxu0 0.0
    %377 = vmatprep.subr.mxu0 0.0
    %378 = vmatpush1.msra.mxu0 0.0
    %379 = vmatprep.subr.mxu0 0.0
    %380 = vmatpush1.msra.mxu0 0.0
    %381 = vmatprep.subr.mxu0 0.0
    %382 = vmatpush1.msra.mxu0 0.0
    %383 = vmatprep.subr.mxu0 0.0
    %384 = vmatpush1.msra.mxu0 0.0
    %385 = vmatprep.subr.mxu0 0.0
    %386 = vmatpush1.msra.mxu0 0.0
    %387 = vmatprep.subr.mxu0 0.0
    %388 = vmatpush1.msra.mxu0 0.0
    %389 = vmatprep.subr.mxu0 0.0
    %390 = vmatpush1.msra.mxu0 0.0
    %391 = vmatprep.subr.mxu0 0.0
    %392 = vmatpush1.msra.mxu0 0.0
    %393 = vmatprep.subr.mxu0 0.0
    %394 = vmatpush1.msra.mxu0 0.0
    %395 = vmatprep.subr.mxu0 0.0
    %396 = vmatpush1.msra.mxu0 0.0
    %397 = vmatprep.subr.mxu0 0.0
    %398 = vmatpush1.msra.mxu0 0.0
    %399 = vmatprep.subr.mxu0 0.0
    %400 = vmatpush1.msra.mxu0 0.0
    %401 = vmatprep.subr.mxu0 0.0
    %402 = vmatpush1.msra.mxu0 0.0
    %403 = vmatprep.subr.mxu0 0.0
    %404 = vmatpush1.msra.mxu0 0.0
    %405 = vmatprep.subr.mxu0 0.0
    %406 = vmatpush1.msra.mxu0 0.0
    %407 = vmatprep.subr.mxu0 0.0
    %408 = vmatpush1.msra.mxu0 0.0
    %409 = vmatprep.subr.mxu0 0.0
    %410 = vmatpush1.msra.mxu0 0.0
    %411 = vmatprep.subr.mxu0 0.0
    %412 = vmatpush1.msra.mxu0 0.0
    %413 = vmatprep.subr.mxu0 0.0
    %414 = vmatpush1.msra.mxu0 0.0
    %415 = vmatprep.subr.mxu0 0.0
    %416 = vmatpush1.msra.mxu0 0.0
    %417 = vmatprep.subr.mxu0 0.0
    %418 = vmatpush1.msra.mxu0 0.0
    %419 = vmatprep.subr.mxu0 0.0
    %420 = vmatpush1.msra.mxu0 0.0
    %421 = vmatprep.subr.mxu0 0.0
    %422 = vmatpush1.msra.mxu0 0.0
    %423 = vmatprep.subr.mxu0 0.0
    %424 = vmatpush1.msra.mxu0 0.0
    %425 = vmatprep.subr.mxu0 0.0
    %426 = vmatpush1.msra.mxu0 0.0
    %427 = vmatprep.subr.mxu0 0.0
    %428 = vmatpush1.msra.mxu0 0.0
    %429 = vmatprep.subr.mxu0 0.0
    %430 = vmatpush1.msra.mxu0 0.0
    %431 = vmatprep.mubr.f32.mxu0 0.0
    %432 = vmatmul.mubr.f32.gmra.mrb[0].mxu0 %v365
    %v433 = vpop.f32.mrb[0].mxu0
    %v434 = vadd.f32 0.0, %v433
    %v435 = vpop.f32.mrb[0].mxu0
    %436 = vdwg.mxu0
    %v437 = vadd.f32 %v361, %v434
    %v438 = vxor.u32 %v437, 2147483648
    %v439 = vmul.f32 %v438, 1.442695
    %v440 = vpow.pop %v439
    %v441 = vadd.f32 %v440, 1.0
    %v442 = vrcp.pop %v441
    %v443 = vmul.f32 1.0, %v442
    %v444 = vadd.f32 %v434, %v226
    %446 = vrot.lane.b32.xlu0 %v444, 64
    %v447 = vpop.permute.xlu0 %446
    %v449 = vmul.f32 %v443, %v447
    %451 = vrot.lane.b32.xlu0 %v449, 64
    %v452 = vpop.permute.xlu0 %451
    %v454 = vadd.f32 %v361, %v452
    %v455 = vtanh.pop %v454
    %v456 = vsub.f32 %v360, %v455
    %458 = vrot.lane.b32.xlu0 %v456, 96
    %v459 = vpop.permute.xlu0 %458
    %v461 = vmul.f32 %v443, %v459
    %463 = vrot.lane.b32.xlu0 %v461, 32
    %v464 = vpop.permute.xlu0 %463
    %v466 = vadd.f32 %v455, %v464
    %v467 = vld [vmem:[#allocation3 + $0x6] sm:$0x3]
    %469 = vrot.lane.b32.xlu0 %v466, 64
    %v470 = vpop.permute.xlu0 %469
    %v471 = vsel %vm48, %v470, 0
    %473 = vmatprep.subr.mxu0 0.0
    %474 = vmatpush1.msra.mxu0 %v133
    %475 = vmatprep.subr.mxu0 0.0
    %476 = vmatpush1.msra.mxu0 %v134
    %477 = vmatprep.subr.mxu0 0.0
    %478 = vmatpush1.msra.mxu0 %v135
    %479 = vmatprep.subr.mxu0 0.0
    %480 = vmatpush1.msra.mxu0 %v136
    %481 = vmatprep.subr.mxu0 0.0
    %482 = vmatpush1.msra.mxu0 0.0
    %483 = vmatprep.subr.mxu0 0.0
    %484 = vmatpush1.msra.mxu0 0.0
    %485 = vmatprep.subr.mxu0 0.0
    %486 = vmatpush1.msra.mxu0 0.0
    %487 = vmatprep.subr.mxu0 0.0
    %488 = vmatpush1.msra.mxu0 0.0
    %489 = vmatprep.subr.mxu0 0.0
    %490 = vmatpush1.msra.mxu0 0.0
    %491 = vmatprep.subr.mxu0 0.0
    %492 = vmatpush1.msra.mxu0 0.0
    %493 = vmatprep.subr.mxu0 0.0
    %494 = vmatpush1.msra.mxu0 0.0
    %495 = vmatprep.subr.mxu0 0.0
    %496 = vmatpush1.msra.mxu0 0.0
    %497 = vmatprep.subr.mxu0 0.0
    %498 = vmatpush1.msra.mxu0 0.0
    %499 = vmatprep.subr.mxu0 0.0
    %500 = vmatpush1.msra.mxu0 0.0
    %501 = vmatprep.subr.mxu0 0.0
    %502 = vmatpush1.msra.mxu0 0.0
    %503 = vmatprep.subr.mxu0 0.0
    %504 = vmatpush1.msra.mxu0 0.0
    %505 = vmatprep.subr.mxu0 0.0
    %506 = vmatpush1.msra.mxu0 0.0
    %507 = vmatprep.subr.mxu0 0.0
    %508 = vmatpush1.msra.mxu0 0.0
    %509 = vmatprep.subr.mxu0 0.0
    %510 = vmatpush1.msra.mxu0 0.0
    %511 = vmatprep.subr.mxu0 0.0
    %512 = vmatpush1.msra.mxu0 0.0
    %513 = vmatprep.subr.mxu0 0.0
    %514 = vmatpush1.msra.mxu0 0.0
    %515 = vmatprep.subr.mxu0 0.0
    %516 = vmatpush1.msra.mxu0 0.0
    %517 = vmatprep.subr.mxu0 0.0
    %518 = vmatpush1.msra.mxu0 0.0
    %519 = vmatprep.subr.mxu0 0.0
    %520 = vmatpush1.msra.mxu0 0.0
    %521 = vmatprep.subr.mxu0 0.0
    %522 = vmatpush1.msra.mxu0 0.0
    %523 = vmatprep.subr.mxu0 0.0
    %524 = vmatpush1.msra.mxu0 0.0
    %525 = vmatprep.subr.mxu0 0.0
    %526 = vmatpush1.msra.mxu0 0.0
    %527 = vmatprep.subr.mxu0 0.0
    %528 = vmatpush1.msra.mxu0 0.0
    %529 = vmatprep.subr.mxu0 0.0
    %530 = vmatpush1.msra.mxu0 0.0
    %531 = vmatprep.subr.mxu0 0.0
    %532 = vmatpush1.msra.mxu0 0.0
    %533 = vmatprep.subr.mxu0 0.0
    %534 = vmatpush1.msra.mxu0 0.0
    %535 = vmatprep.subr.mxu0 0.0
    %536 = vmatpush1.msra.mxu0 0.0
    %537 = vmatprep.mubr.f32.mxu0 0.0
    %538 = vmatmul.mubr.f32.gmra.mrb[0].mxu0 %v471
    %v539 = vpop.f32.mrb[0].mxu0
    %v540 = vadd.f32 0.0, %v539
    %v541 = vpop.f32.mrb[0].mxu0
    %542 = vdwg.mxu0
    %v543 = vadd.f32 %v467, %v540
    %v544 = vxor.u32 %v543, 2147483648
    %v545 = vmul.f32 %v544, 1.442695
    %v546 = vpow.pop %v545
    %v547 = vadd.f32 %v546, 1.0
    %v548 = vrcp.pop %v547
    %v549 = vmul.f32 1.0, %v548
    %v550 = vadd.f32 %v540, %v226
    %552 = vrot.lane.b32.xlu0 %v550, 64
    %v553 = vpop.permute.xlu0 %552
    %v555 = vmul.f32 %v549, %v553
    %557 = vrot.lane.b32.xlu0 %v555, 64
    %v558 = vpop.permute.xlu0 %557
    %v560 = vadd.f32 %v467, %v558
    %v561 = vtanh.pop %v560
    %v562 = vsub.f32 %v466, %v561
    %564 = vrot.lane.b32.xlu0 %v562, 96
    %v565 = vpop.permute.xlu0 %564
    %v567 = vmul.f32 %v549, %v565
    %569 = vrot.lane.b32.xlu0 %v567, 32
    %v570 = vpop.permute.xlu0 %569
    %v572 = vadd.f32 %v561, %v570
    %v573 = vld [vmem:[#allocation3 + $0x8] sm:$0x3]
    %575 = vrot.lane.b32.xlu0 %v572, 64
    %v576 = vpop.permute.xlu0 %575
    %v577 = vsel %vm48, %v576, 0
    %579 = vmatprep.subr.mxu0 0.0
    %580 = vmatpush1.msra.mxu0 %v133
    %581 = vmatprep.subr.mxu0 0.0
    %582 = vmatpush1.msra.mxu0 %v134
    %583 = vmatprep.subr.mxu0 0.0
    %584 = vmatpush1.msra.mxu0 %v135
    %585 = vmatprep.subr.mxu0 0.0
    %586 = vmatpush1.msra.mxu0 %v136
    %587 = vmatprep.subr.mxu0 0.0
    %588 = vmatpush1.msra.mxu0 0.0
    %589 = vmatprep.subr.mxu0 0.0
    %590 = vmatpush1.msra.mxu0 0.0
    %591 = vmatprep.subr.mxu0 0.0
    %592 = vmatpush1.msra.mxu0 0.0
    %593 = vmatprep.subr.mxu0 0.0
    %594 = vmatpush1.msra.mxu0 0.0
    %595 = vmatprep.subr.mxu0 0.0
    %596 = vmatpush1.msra.mxu0 0.0
    %597 = vmatprep.subr.mxu0 0.0
    %598 = vmatpush1.msra.mxu0 0.0
    %599 = vmatprep.subr.mxu0 0.0
    %600 = vmatpush1.msra.mxu0 0.0
    %601 = vmatprep.subr.mxu0 0.0
    %602 = vmatpush1.msra.mxu0 0.0
    %603 = vmatprep.subr.mxu0 0.0
    %604 = vmatpush1.msra.mxu0 0.0
    %605 = vmatprep.subr.mxu0 0.0
    %606 = vmatpush1.msra.mxu0 0.0
    %607 = vmatprep.subr.mxu0 0.0
    %608 = vmatpush1.msra.mxu0 0.0
    %609 = vmatprep.subr.mxu0 0.0
    %610 = vmatpush1.msra.mxu0 0.0
    %611 = vmatprep.subr.mxu0 0.0
    %612 = vmatpush1.msra.mxu0 0.0
    %613 = vmatprep.subr.mxu0 0.0
    %614 = vmatpush1.msra.mxu0 0.0
    %615 = vmatprep.subr.mxu0 0.0
    %616 = vmatpush1.msra.mxu0 0.0
    %617 = vmatprep.subr.mxu0 0.0
    %618 = vmatpush1.msra.mxu0 0.0
    %619 = vmatprep.subr.mxu0 0.0
    %620 = vmatpush1.msra.mxu0 0.0
    %621 = vmatprep.subr.mxu0 0.0
    %622 = vmatpush1.msra.mxu0 0.0
    %623 = vmatprep.subr.mxu0 0.0
    %624 = vmatpush1.msra.mxu0 0.0
    %625 = vmatprep.subr.mxu0 0.0
    %626 = vmatpush1.msra.mxu0 0.0
    %627 = vmatprep.subr.mxu0 0.0
    %628 = vmatpush1.msra.mxu0 0.0
    %629 = vmatprep.subr.mxu0 0.0
    %630 = vmatpush1.msra.mxu0 0.0
    %631 = vmatprep.subr.mxu0 0.0
    %632 = vmatpush1.msra.mxu0 0.0
    %633 = vmatprep.subr.mxu0 0.0
    %634 = vmatpush1.msra.mxu0 0.0
    %635 = vmatprep.subr.mxu0 0.0
    %636 = vmatpush1.msra.mxu0 0.0
    %637 = vmatprep.subr.mxu0 0.0
    %638 = vmatpush1.msra.mxu0 0.0
    %639 = vmatprep.subr.mxu0 0.0
    %640 = vmatpush1.msra.mxu0 0.0
    %641 = vmatprep.subr.mxu0 0.0
    %642 = vmatpush1.msra.mxu0 0.0
    %643 = vmatprep.mubr.f32.mxu0 0.0
    %644 = vmatmul.mubr.f32.gmra.mrb[0].mxu0 %v577
    %v645 = vpop.f32.mrb[0].mxu0
    %v646 = vadd.f32 0.0, %v645
    %v647 = vpop.f32.mrb[0].mxu0
    %648 = vdwg.mxu0
    %v649 = vadd.f32 %v573, %v646
    %v650 = vxor.u32 %v649, 2147483648
    %v651 = vmul.f32 %v650, 1.442695
    %v652 = vpow.pop %v651
    %v653 = vadd.f32 %v652, 1.0
    %v654 = vrcp.pop %v653
    %v655 = vmul.f32 1.0, %v654
    %v656 = vadd.f32 %v646, %v226
    %658 = vrot.lane.b32.xlu0 %v656, 64
    %v659 = vpop.permute.xlu0 %658
    %v661 = vmul.f32 %v655, %v659
    %663 = vrot.lane.b32.xlu0 %v661, 64
    %v664 = vpop.permute.xlu0 %663
    %v666 = vadd.f32 %v573, %v664
    %v667 = vtanh.pop %v666
    %v668 = vsub.f32 %v572, %v667
    %670 = vrot.lane.b32.xlu0 %v668, 96
    %v671 = vpop.permute.xlu0 %670
    %v673 = vmul.f32 %v655, %v671
    %675 = vrot.lane.b32.xlu0 %v673, 32
    %v676 = vpop.permute.xlu0 %675
    %v678 = vadd.f32 %v667, %v676
    %v679 = vld [vmem:[#allocation3 + $0xa] sm:$0x3]
    %681 = vrot.lane.b32.xlu0 %v678, 64
    %v682 = vpop.permute.xlu0 %681
    %v683 = vsel %vm48, %v682, 0
    %685 = vmatprep.subr.mxu0 0.0
    %686 = vmatpush1.msra.mxu0 %v133
    %687 = vmatprep.subr.mxu0 0.0
    %688 = vmatpush1.msra.mxu0 %v134
    %689 = vmatprep.subr.mxu0 0.0
    %690 = vmatpush1.msra.mxu0 %v135
    %691 = vmatprep.subr.mxu0 0.0
    %692 = vmatpush1.msra.mxu0 %v136
    %693 = vmatprep.subr.mxu0 0.0
    %694 = vmatpush1.msra.mxu0 0.0
    %695 = vmatprep.subr.mxu0 0.0
    %696 = vmatpush1.msra.mxu0 0.0
    %697 = vmatprep.subr.mxu0 0.0
    %698 = vmatpush1.msra.mxu0 0.0
    %699 = vmatprep.subr.mxu0 0.0
    %700 = vmatpush1.msra.mxu0 0.0
    %701 = vmatprep.subr.mxu0 0.0
    %702 = vmatpush1.msra.mxu0 0.0
    %703 = vmatprep.subr.mxu0 0.0
    %704 = vmatpush1.msra.mxu0 0.0
    %705 = vmatprep.subr.mxu0 0.0
    %706 = vmatpush1.msra.mxu0 0.0
    %707 = vmatprep.subr.mxu0 0.0
    %708 = vmatpush1.msra.mxu0 0.0
    %709 = vmatprep.subr.mxu0 0.0
    %710 = vmatpush1.msra.mxu0 0.0
    %711 = vmatprep.subr.mxu0 0.0
    %712 = vmatpush1.msra.mxu0 0.0
    %713 = vmatprep.subr.mxu0 0.0
    %714 = vmatpush1.msra.mxu0 0.0
    %715 = vmatprep.subr.mxu0 0.0
    %716 = vmatpush1.msra.mxu0 0.0
    %717 = vmatprep.subr.mxu0 0.0
    %718 = vmatpush1.msra.mxu0 0.0
    %719 = vmatprep.subr.mxu0 0.0
    %720 = vmatpush1.msra.mxu0 0.0
    %721 = vmatprep.subr.mxu0 0.0
    %722 = vmatpush1.msra.mxu0 0.0
    %723 = vmatprep.subr.mxu0 0.0
    %724 = vmatpush1.msra.mxu0 0.0
    %725 = vmatprep.subr.mxu0 0.0
    %726 = vmatpush1.msra.mxu0 0.0
    %727 = vmatprep.subr.mxu0 0.0
    %728 = vmatpush1.msra.mxu0 0.0
    %729 = vmatprep.subr.mxu0 0.0
    %730 = vmatpush1.msra.mxu0 0.0
    %731 = vmatprep.subr.mxu0 0.0
    %732 = vmatpush1.msra.mxu0 0.0
    %733 = vmatprep.subr.mxu0 0.0
    %734 = vmatpush1.msra.mxu0 0.0
    %735 = vmatprep.subr.mxu0 0.0
    %736 = vmatpush1.msra.mxu0 0.0
    %737 = vmatprep.subr.mxu0 0.0
    %738 = vmatpush1.msra.mxu0 0.0
    %739 = vmatprep.subr.mxu0 0.0
    %740 = vmatpush1.msra.mxu0 0.0
    %741 = vmatprep.subr.mxu0 0.0
    %742 = vmatpush1.msra.mxu0 0.0
    %743 = vmatprep.subr.mxu0 0.0
    %744 = vmatpush1.msra.mxu0 0.0
    %745 = vmatprep.subr.mxu0 0.0
    %746 = vmatpush1.msra.mxu0 0.0
    %747 = vmatprep.subr.mxu0 0.0
    %748 = vmatpush1.msra.mxu0 0.0
    %749 = vmatprep.mubr.f32.mxu0 0.0
    %750 = vmatmul.mubr.f32.gmra.mrb[0].mxu0 %v683
    %v751 = vpop.f32.mrb[0].mxu0
    %v752 = vadd.f32 0.0, %v751
    %v753 = vpop.f32.mrb[0].mxu0
    %754 = vdwg.mxu0
    %v755 = vadd.f32 %v679, %v752
    %v756 = vxor.u32 %v755, 2147483648
    %v757 = vmul.f32 %v756, 1.442695
    %v758 = vpow.pop %v757
    %v759 = vadd.f32 %v758, 1.0
    %v760 = vrcp.pop %v759
    %v761 = vmul.f32 1.0, %v760
    %v762 = vadd.f32 %v752, %v226
    %764 = vrot.lane.b32.xlu0 %v762, 64
    %v765 = vpop.permute.xlu0 %764
    %v767 = vmul.f32 %v761, %v765
    %769 = vrot.lane.b32.xlu0 %v767, 64
    %v770 = vpop.permute.xlu0 %769
    %v772 = vadd.f32 %v679, %v770
    %v773 = vtanh.pop %v772
    %v774 = vsub.f32 %v678, %v773
    %776 = vrot.lane.b32.xlu0 %v774, 96
    %v777 = vpop.permute.xlu0 %776
    %v779 = vmul.f32 %v761, %v777
    %781 = vrot.lane.b32.xlu0 %v779, 32
    %v782 = vpop.permute.xlu0 %781
    %v784 = vadd.f32 %v773, %v782
    %v785 = vld [vmem:[#allocation3 + $0xc] sm:$0x3]
    %787 = vrot.lane.b32.xlu0 %v784, 64
    %v788 = vpop.permute.xlu0 %787
    %v789 = vsel %vm48, %v788, 0
    %791 = vmatprep.subr.mxu0 0.0
    %792 = vmatpush1.msra.mxu0 %v133
    %793 = vmatprep.subr.mxu0 0.0
    %794 = vmatpush1.msra.mxu0 %v134
    %795 = vmatprep.subr.mxu0 0.0
    %796 = vmatpush1.msra.mxu0 %v135
    %797 = vmatprep.subr.mxu0 0.0
    %798 = vmatpush1.msra.mxu0 %v136
    %799 = vmatprep.subr.mxu0 0.0
    %800 = vmatpush1.msra.mxu0 0.0
    %801 = vmatprep.subr.mxu0 0.0
    %802 = vmatpush1.msra.mxu0 0.0
    %803 = vmatprep.subr.mxu0 0.0
    %804 = vmatpush1.msra.mxu0 0.0
    %805 = vmatprep.subr.mxu0 0.0
    %806 = vmatpush1.msra.mxu0 0.0
    %807 = vmatprep.subr.mxu0 0.0
    %808 = vmatpush1.msra.mxu0 0.0
    %809 = vmatprep.subr.mxu0 0.0
    %810 = vmatpush1.msra.mxu0 0.0
    %811 = vmatprep.subr.mxu0 0.0
    %812 = vmatpush1.msra.mxu0 0.0
    %813 = vmatprep.subr.mxu0 0.0
    %814 = vmatpush1.msra.mxu0 0.0
    %815 = vmatprep.subr.mxu0 0.0
    %816 = vmatpush1.msra.mxu0 0.0
    %817 = vmatprep.subr.mxu0 0.0
    %818 = vmatpush1.msra.mxu0 0.0
    %819 = vmatprep.subr.mxu0 0.0
    %820 = vmatpush1.msra.mxu0 0.0
    %821 = vmatprep.subr.mxu0 0.0
    %822 = vmatpush1.msra.mxu0 0.0
    %823 = vmatprep.subr.mxu0 0.0
    %824 = vmatpush1.msra.mxu0 0.0
    %825 = vmatprep.subr.mxu0 0.0
    %826 = vmatpush1.msra.mxu0 0.0
    %827 = vmatprep.subr.mxu0 0.0
    %828 = vmatpush1.msra.mxu0 0.0
    %829 = vmatprep.subr.mxu0 0.0
    %830 = vmatpush1.msra.mxu0 0.0
    %831 = vmatprep.subr.mxu0 0.0
    %832 = vmatpush1.msra.mxu0 0.0
    %833 = vmatprep.subr.mxu0 0.0
    %834 = vmatpush1.msra.mxu0 0.0
    %835 = vmatprep.subr.mxu0 0.0
    %836 = vmatpush1.msra.mxu0 0.0
    %837 = vmatprep.subr.mxu0 0.0
    %838 = vmatpush1.msra.mxu0 0.0
    %839 = vmatprep.subr.mxu0 0.0
    %840 = vmatpush1.msra.mxu0 0.0
    %841 = vmatprep.subr.mxu0 0.0
    %842 = vmatpush1.msra.mxu0 0.0
    %843 = vmatprep.subr.mxu0 0.0
    %844 = vmatpush1.msra.mxu0 0.0
    %845 = vmatprep.subr.mxu0 0.0
    %846 = vmatpush1.msra.mxu0 0.0
    %847 = vmatprep.subr.mxu0 0.0
    %848 = vmatpush1.msra.mxu0 0.0
    %849 = vmatprep.subr.mxu0 0.0
    %850 = vmatpush1.msra.mxu0 0.0
    %851 = vmatprep.subr.mxu0 0.0
    %852 = vmatpush1.msra.mxu0 0.0
    %853 = vmatprep.subr.mxu0 0.0
    %854 = vmatpush1.msra.mxu0 0.0
    %855 = vmatprep.mubr.f32.mxu0 0.0
    %856 = vmatmul.mubr.f32.gmra.mrb[0].mxu0 %v789
    %v857 = vpop.f32.mrb[0].mxu0
    %v858 = vadd.f32 0.0, %v857
    %v859 = vpop.f32.mrb[0].mxu0
    %860 = vdwg.mxu0
    %v861 = vadd.f32 %v785, %v858
    %v862 = vxor.u32 %v861, 2147483648
    %v863 = vmul.f32 %v862, 1.442695
    %v864 = vpow.pop %v863
    %v865 = vadd.f32 %v864, 1.0
    %v866 = vrcp.pop %v865
    %v867 = vmul.f32 1.0, %v866
    %v868 = vadd.f32 %v858, %v226
    %870 = vrot.lane.b32.xlu0 %v868, 64
    %v871 = vpop.permute.xlu0 %870
    %v873 = vmul.f32 %v867, %v871
    %875 = vrot.lane.b32.xlu0 %v873, 64
    %v876 = vpop.permute.xlu0 %875
    %v878 = vadd.f32 %v785, %v876
    %v879 = vtanh.pop %v878
    %v880 = vsub.f32 %v784, %v879
    %882 = vrot.lane.b32.xlu0 %v880, 96
    %v883 = vpop.permute.xlu0 %882
    %v885 = vmul.f32 %v867, %v883
    %887 = vrot.lane.b32.xlu0 %v885, 32
    %v888 = vpop.permute.xlu0 %887
    %v890 = vadd.f32 %v879, %v888
    %v891 = vld [vmem:[#allocation3 + $0xe] sm:$0x3]
    %893 = vrot.lane.b32.xlu0 %v890, 64
    %v894 = vpop.permute.xlu0 %893
    %v895 = vsel %vm48, %v894, 0
    %897 = vmatprep.subr.mxu0 0.0
    %898 = vmatpush1.msra.mxu0 %v133
    %899 = vmatprep.subr.mxu0 0.0
    %900 = vmatpush1.msra.mxu0 %v134
    %901 = vmatprep.subr.mxu0 0.0
    %902 = vmatpush1.msra.mxu0 %v135
    %903 = vmatprep.subr.mxu0 0.0
    %904 = vmatpush1.msra.mxu0 %v136
    %905 = vmatprep.subr.mxu0 0.0
    %906 = vmatpush1.msra.mxu0 0.0
    %907 = vmatprep.subr.mxu0 0.0
    %908 = vmatpush1.msra.mxu0 0.0
    %909 = vmatprep.subr.mxu0 0.0
    %910 = vmatpush1.msra.mxu0 0.0
    %911 = vmatprep.subr.mxu0 0.0
    %912 = vmatpush1.msra.mxu0 0.0
    %913 = vmatprep.subr.mxu0 0.0
    %914 = vmatpush1.msra.mxu0 0.0
    %915 = vmatprep.subr.mxu0 0.0
    %916 = vmatpush1.msra.mxu0 0.0
    %917 = vmatprep.subr.mxu0 0.0
    %918 = vmatpush1.msra.mxu0 0.0
    %919 = vmatprep.subr.mxu0 0.0
    %920 = vmatpush1.msra.mxu0 0.0
    %921 = vmatprep.subr.mxu0 0.0
    %922 = vmatpush1.msra.mxu0 0.0
    %923 = vmatprep.subr.mxu0 0.0
    %924 = vmatpush1.msra.mxu0 0.0
    %925 = vmatprep.subr.mxu0 0.0
    %926 = vmatpush1.msra.mxu0 0.0
    %927 = vmatprep.subr.mxu0 0.0
    %928 = vmatpush1.msra.mxu0 0.0
    %929 = vmatprep.subr.mxu0 0.0
    %930 = vmatpush1.msra.mxu0 0.0
    %931 = vmatprep.subr.mxu0 0.0
    %932 = vmatpush1.msra.mxu0 0.0
    %933 = vmatprep.subr.mxu0 0.0
    %934 = vmatpush1.msra.mxu0 0.0
    %935 = vmatprep.subr.mxu0 0.0
    %936 = vmatpush1.msra.mxu0 0.0
    %937 = vmatprep.subr.mxu0 0.0
    %938 = vmatpush1.msra.mxu0 0.0
    %939 = vmatprep.subr.mxu0 0.0
    %940 = vmatpush1.msra.mxu0 0.0
    %941 = vmatprep.subr.mxu0 0.0
    %942 = vmatpush1.msra.mxu0 0.0
    %943 = vmatprep.subr.mxu0 0.0
    %944 = vmatpush1.msra.mxu0 0.0
    %945 = vmatprep.subr.mxu0 0.0
    %946 = vmatpush1.msra.mxu0 0.0
    %947 = vmatprep.subr.mxu0 0.0
    %948 = vmatpush1.msra.mxu0 0.0
    %949 = vmatprep.subr.mxu0 0.0
    %950 = vmatpush1.msra.mxu0 0.0
    %951 = vmatprep.subr.mxu0 0.0
    %952 = vmatpush1.msra.mxu0 0.0
    %953 = vmatprep.subr.mxu0 0.0
    %954 = vmatpush1.msra.mxu0 0.0
    %955 = vmatprep.subr.mxu0 0.0
    %956 = vmatpush1.msra.mxu0 0.0
    %957 = vmatprep.subr.mxu0 0.0
    %958 = vmatpush1.msra.mxu0 0.0
    %959 = vmatprep.subr.mxu0 0.0
    %960 = vmatpush1.msra.mxu0 0.0
    %961 = vmatprep.mubr.f32.mxu0 0.0
    %962 = vmatmul.mubr.f32.gmra.mrb[0].mxu0 %v895
    %v963 = vpop.f32.mrb[0].mxu0
    %v964 = vadd.f32 0.0, %v963
    %v965 = vpop.f32.mrb[0].mxu0
    %966 = vdwg.mxu0
    %v967 = vadd.f32 %v891, %v964
    %v968 = vxor.u32 %v967, 2147483648
    %v969 = vmul.f32 %v968, 1.442695
    %v970 = vpow.pop %v969
    %v971 = vadd.f32 %v970, 1.0
    %v972 = vrcp.pop %v971
    %v973 = vmul.f32 1.0, %v972
    %v974 = vadd.f32 %v964, %v226
    %976 = vrot.lane.b32.xlu0 %v974, 64
    %v977 = vpop.permute.xlu0 %976
    %v979 = vmul.f32 %v973, %v977
    %981 = vrot.lane.b32.xlu0 %v979, 64
    %v982 = vpop.permute.xlu0 %981
    %v984 = vadd.f32 %v891, %v982
    %v985 = vtanh.pop %v984
    %v986 = vsub.f32 %v890, %v985
    %988 = vrot.lane.b32.xlu0 %v986, 96
    %v989 = vpop.permute.xlu0 %988
    %v991 = vmul.f32 %v973, %v989
    %993 = vrot.lane.b32.xlu0 %v991, 32
    %v994 = vpop.permute.xlu0 %993
    %v996 = vadd.f32 %v985, %v994
    %998 = vrot.lane.b32.xlu0 %v996, 64
    %v999 = vpop.permute.xlu0 %998
    %vm1001 = vcmask 254976
    %1002 = vst.msk [vmem:[#allocation2] sm:$0x3] %vm1001, %v999
    // Predicated region
    $region34: #{rnn_forward.3} parent=1 // pred_check
      %p1003 = pneg %p29
    $region35: #{rnn_forward.3} parent=1 // pred_check_branch
      %1005 = sbr.rel (%p1003) target = $region37
    $region36: #{rnn_forward.3} parent=1 // pred_region
      %1006 = vst.msk [vmem:[%s7] sm:$0x3] %vm1001, %v999
      %v1007 = vld [vmem:[%s5] sm:$0xff]
      %v1008 = vld [vmem:[%s5 + $0x8] sm:$0xff]
      %v1009 = vld [vmem:[%s5 + $0x10] sm:$0xff]
      %v1010 = vld [vmem:[%s5 + $0x18] sm:$0xff]
      %v1011 = vld [vmem:[%s6] sm:$0x1]
      %v1013 = vlaneseq
      %v1014 = vshrl.u32 %v1013, 7
      %v1015 = vsub.s32 0, %v1014
      %v1016 = vrot.slane %v1011, %v1015
      %v1018 = vsel %vm48, %v999, 0
      %1020 = vmatprep.subr.mxu0 0.0
      %1021 = vmatpush1.msra.mxu0 %v1007
      %1022 = vmatprep.subr.mxu0 0.0
      %1023 = vmatpush1.msra.mxu0 %v1008
      %1024 = vmatprep.subr.mxu0 0.0
      %1025 = vmatpush1.msra.mxu0 %v1009
      %1026 = vmatprep.subr.mxu0 0.0
      %1027 = vmatpush1.msra.mxu0 %v1010
      %1028 = vmatprep.subr.mxu0 0.0
      %1029 = vmatpush1.msra.mxu0 0.0
      %1030 = vmatprep.subr.mxu0 0.0
      %1031 = vmatpush1.msra.mxu0 0.0
      %1032 = vmatprep.subr.mxu0 0.0
      %1033 = vmatpush1.msra.mxu0 0.0
      %1034 = vmatprep.subr.mxu0 0.0
      %1035 = vmatpush1.msra.mxu0 0.0
      %1036 = vmatprep.subr.mxu0 0.0
      %1037 = vmatpush1.msra.mxu0 0.0
      %1038 = vmatprep.subr.mxu0 0.0
      %1039 = vmatpush1.msra.mxu0 0.0
      %1040 = vmatprep.subr.mxu0 0.0
      %1041 = vmatpush1.msra.mxu0 0.0
      %1042 = vmatprep.subr.mxu0 0.0
      %1043 = vmatpush1.msra.mxu0 0.0
      %1044 = vmatprep.subr.mxu0 0.0
      %1045 = vmatpush1.msra.mxu0 0.0
      %1046 = vmatprep.subr.mxu0 0.0
      %1047 = vmatpush1.msra.mxu0 0.0
      %1048 = vmatprep.subr.mxu0 0.0
      %1049 = vmatpush1.msra.mxu0 0.0
      %1050 = vmatprep.subr.mxu0 0.0
      %1051 = vmatpush1.msra.mxu0 0.0
      %1052 = vmatprep.subr.mxu0 0.0
      %1053 = vmatpush1.msra.mxu0 0.0
      %1054 = vmatprep.subr.mxu0 0.0
      %1055 = vmatpush1.msra.mxu0 0.0
      %1056 = vmatprep.subr.mxu0 0.0
      %1057 = vmatpush1.msra.mxu0 0.0
      %1058 = vmatprep.subr.mxu0 0.0
      %1059 = vmatpush1.msra.mxu0 0.0
      %1060 = vmatprep.subr.mxu0 0.0
      %1061 = vmatpush1.msra.mxu0 0.0
      %1062 = vmatprep.subr.mxu0 0.0
      %1063 = vmatpush1.msra.mxu0 0.0
      %1064 = vmatprep.subr.mxu0 0.0
      %1065 = vmatpush1.msra.mxu0 0.0
      %1066 = vmatprep.subr.mxu0 0.0
      %1067 = vmatpush1.msra.mxu0 0.0
      %1068 = vmatprep.subr.mxu0 0.0
      %1069 = vmatpush1.msra.mxu0 0.0
      %1070 = vmatprep.subr.mxu0 0.0
      %1071 = vmatpush1.msra.mxu0 0.0
      %1072 = vmatprep.subr.mxu0 0.0
      %1073 = vmatpush1.msra.mxu0 0.0
      %1074 = vmatprep.subr.mxu0 0.0
      %1075 = vmatpush1.msra.mxu0 0.0
      %1076 = vmatprep.subr.mxu0 0.0
      %1077 = vmatpush1.msra.mxu0 0.0
      %1078 = vmatprep.subr.mxu0 0.0
      %1079 = vmatpush1.msra.mxu0 0.0
      %1080 = vmatprep.subr.mxu0 0.0
      %1081 = vmatpush1.msra.mxu0 0.0
      %1082 = vmatprep.subr.mxu0 0.0
      %1083 = vmatpush1.msra.mxu0 0.0
      %1084 = vmatprep.mubr.f32.mxu0 0.0
      %1085 = vmatmul.mubr.f32.gmra.mrb[0].mxu0 %v1018
      %v1086 = vpop.f32.mrb[0].mxu0
      %v1087 = vadd.f32 %v1016, %v1086
      %v1088 = vpop.f32.mrb[0].mxu0
      %1089 = vdwg.mxu0
      %vm1090 = vcmask 58368
      %1091 = vst.msk [vmem:[#allocation4] sm:$0x3] %vm1090, %v1087
    $region37: #{rnn_forward.3} parent=1 // pred_fallthru
      _
    // Predicated region
    $region38: #{rnn_forward.3} parent=1 // pred_check
      _
    $region39: #{rnn_forward.3} parent=1 // pred_check_branch
      %1093 = sbr.rel (0) target = $region41
    $region40: #{rnn_forward.3} parent=1 // pred_region
      _
    $region41: #{rnn_forward.3} parent=1 // pred_fallthru
      _
    // Predicated region
    $region42: #{rnn_forward.3} parent=1 // pred_check
      _
    $region43: #{rnn_forward.3} parent=1 // pred_check_branch
      %1095 = sbr.rel (0) target = $region45
    $region44: #{rnn_forward.3} parent=1 // pred_region
      %s1097 = ssub.s32 32, 32
      %1098 = vsyncadd [#allocation5], %s1097
      %s1100 = sshll.u32 [#allocation4], 4
      %s1101 = int_to_ptr.vmem [resolvable:$true] %s1100
      %1103 = dma.vmem_to_hbm [thread:$0]  %s1101, 32, %s8, [#allocation5]
    $region45: #{rnn_forward.3} parent=1 // pred_fallthru
      _
    // Predicated region
    $region46: #{rnn_forward.3} parent=1 // pred_check
      _
    $region47: #{rnn_forward.3} parent=1 // pred_check_branch
      %1105 = sbr.rel (0) target = $region49
    $region48: #{rnn_forward.3} parent=1 // pred_region
      _
    $region49: #{rnn_forward.3} parent=1 // pred_fallthru
      _
    // Predicated region
    $region50: #{rnn_forward.3} parent=1 // pred_check
      _
    $region51: #{rnn_forward.3} parent=1 // pred_check_branch
      %1107 = sbr.rel (0) target = $region53
    $region52: #{rnn_forward.3} parent=1 // pred_region
      %1108 = dma.done [#allocation5], 32
    $region53: #{rnn_forward.3} parent=1 // pred_fallthru
      _
    %1109 = vsyncpa [#allocation5], 1

// kernel: rnn_forward.2
$region0: #{rnn_forward.2}
  #allocation0 [shape = 'u32[]', space=smem, size = 0x4, offset = 0x4, fixed_abs, tag = 'smem constant byte address 0x4 - core index']
  #allocation1 [shape = 'u32[144,128]{1,0:T(1,128)}', space=vmem, size = 0x12000, scoped, tag = 'internal scratch']
  #allocation2 [shape = 'f32[2,32]{1,0:T(2,128)}', space=vmem, size = 0x400, scoped, tag = 'scratch operand']
  #allocation3 [shape = 'f32[16,96]{1,0:T(8,128)}', space=vmem, size = 0x2000, scoped, tag = 'scratch operand']
  %s0 = inlined_call_operand.vmem [shape: f32[16,16], index: 0, kind: input, shape index: {}]
  %s1 = inlined_call_operand.vmem [shape: f32[16,96], index: 1, kind: input, shape index: {}]
  %s2 = inlined_call_operand.vmem [shape: f32[1,96], index: 2, kind: input, shape index: {}]
  %s3 = inlined_call_operand.vmem [shape: f32[32,96], index: 3, kind: input, shape index: {}]
  %s4 = inlined_call_operand.vmem [shape: f32[1,32], index: 4, kind: input, shape index: {}]
  %s5 = inlined_call_operand.vmem [shape: f32[16,32], index: 5, kind: output, shape index: {0}]
  %s6 = inlined_call_operand.vmem [shape: f32[2,32], index: 6, kind: output, shape index: {1}]
  %7 = xla_tuple %s5, %s6
  %s8 = sld [smem:[#allocation0]]
  $region46: #{rnn_forward.2} parent=0
    _
  %s10 = ssub.s32 1, %s8
  %s11 = scalar_select 0, %s10, %s8
  // Predicated region
  $region2: #{rnn_forward.2} parent=0 // pred_check
    _
  $region3: #{rnn_forward.2} parent=0 // pred_check_branch
    %13 = sbr.rel (0) target = $region5
  $region4: #{rnn_forward.2} parent=0 // pred_region
    _
  $region5: #{rnn_forward.2} parent=0 // pred_fallthru
    _
  // Predicated region
  $region6: #{rnn_forward.2} parent=0 // pred_check
    _
  $region7: #{rnn_forward.2} parent=0 // pred_check_branch
    %15 = sbr.rel (0) target = $region9
  $region8: #{rnn_forward.2} parent=0 // pred_region
    _
  $region9: #{rnn_forward.2} parent=0 // pred_fallthru
    _
  // Predicated region
  $region10: #{rnn_forward.2} parent=0 // pred_check
    _
  $region11: #{rnn_forward.2} parent=0 // pred_check_branch
    %17 = sbr.rel (0) target = $region13
  $region12: #{rnn_forward.2} parent=0 // pred_region
    _
  $region13: #{rnn_forward.2} parent=0 // pred_fallthru
    _
  // Predicated region
  $region14: #{rnn_forward.2} parent=0 // pred_check
    _
  $region15: #{rnn_forward.2} parent=0 // pred_check_branch
    %19 = sbr.rel (0) target = $region17
  $region16: #{rnn_forward.2} parent=0 // pred_region
    _
  $region17: #{rnn_forward.2} parent=0 // pred_fallthru
    _
  // Predicated region
  $region18: #{rnn_forward.2} parent=0 // pred_check
    _
  $region19: #{rnn_forward.2} parent=0 // pred_check_branch
    %21 = sbr.rel (0) target = $region21
  $region20: #{rnn_forward.2} parent=0 // pred_region
    _
  $region21: #{rnn_forward.2} parent=0 // pred_fallthru
    _
  %p22 = scmp.eq.s32.totalorder 0, 0
  // Predicated region
  $region22: #{rnn_forward.2} parent=0 // pred_check
    %p23 = pneg %p22
  $region23: #{rnn_forward.2} parent=0 // pred_check_branch
    %25 = sbr.rel (%p23) target = $region25
  $region24: #{rnn_forward.2} parent=0 // pred_region
    %vm26 = vcmask 254976
    %27 = vst.msk [vmem:[#allocation2] sm:$0x3] %vm26, 0.0
  $region25: #{rnn_forward.2} parent=0 // pred_fallthru
    _
  %v28 = vld [vmem:[%s0] sm:$0xff]
  %v29 = vld [vmem:[%s0 + $0x8] sm:$0xff]
  %v30 = vld [vmem:[%s1] sm:$0xff]
  %v31 = vld [vmem:[%s1 + $0x8] sm:$0xff]
  %v32 = vld [vmem:[%s2] sm:$0x1]
  %v34 = vlaneseq
  %v35 = vshrl.u32 %v34, 7
  %v36 = vsub.s32 0, %v35
  %v37 = vrot.slane %v32, %v36
  %vm39 = vcmask 130048
  %v41 = vsel %vm39, %v28, 0
  %v44 = vsel %vm39, %v29, 0
  %46 = vmatprep.subr.mxu0 0.0
  %47 = vmatpush1.msra.mxu0 %v30
  %48 = vmatprep.subr.mxu0 0.0
  %49 = vmatpush1.msra.mxu0 %v31
  %50 = vmatprep.subr.mxu0 0.0
  %51 = vmatpush1.msra.mxu0 0.0
  %52 = vmatprep.subr.mxu0 0.0
  %53 = vmatpush1.msra.mxu0 0.0
  %54 = vmatprep.subr.mxu0 0.0
  %55 = vmatpush1.msra.mxu0 0.0
  %56 = vmatprep.subr.mxu0 0.0
  %57 = vmatpush1.msra.mxu0 0.0
  %58 = vmatprep.subr.mxu0 0.0
  %59 = vmatpush1.msra.mxu0 0.0
  %60 = vmatprep.subr.mxu0 0.0
  %61 = vmatpush1.msra.mxu0 0.0
  %62 = vmatprep.subr.mxu0 0.0
  %63 = vmatpush1.msra.mxu0 0.0
  %64 = vmatprep.subr.mxu0 0.0
  %65 = vmatpush1.msra.mxu0 0.0
  %66 = vmatprep.subr.mxu0 0.0
  %67 = vmatpush1.msra.mxu0 0.0
  %68 = vmatprep.subr.mxu0 0.0
  %69 = vmatpush1.msra.mxu0 0.0
  %70 = vmatprep.subr.mxu0 0.0
  %71 = vmatpush1.msra.mxu0 0.0
  %72 = vmatprep.subr.mxu0 0.0
  %73 = vmatpush1.msra.mxu0 0.0
  %74 = vmatprep.subr.mxu0 0.0
  %75 = vmatpush1.msra.mxu0 0.0
  %76 = vmatprep.subr.mxu0 0.0
  %77 = vmatpush1.msra.mxu0 0.0
  %78 = vmatprep.subr.mxu0 0.0
  %79 = vmatpush1.msra.mxu0 0.0
  %80 = vmatprep.subr.mxu0 0.0
  %81 = vmatpush1.msra.mxu0 0.0
  %82 = vmatprep.subr.mxu0 0.0
  %83 = vmatpush1.msra.mxu0 0.0
  %84 = vmatprep.subr.mxu0 0.0
  %85 = vmatpush1.msra.mxu0 0.0
  %86 = vmatprep.subr.mxu0 0.0
  %87 = vmatpush1.msra.mxu0 0.0
  %88 = vmatprep.subr.mxu0 0.0
  %89 = vmatpush1.msra.mxu0 0.0
  %90 = vmatprep.subr.mxu0 0.0
  %91 = vmatpush1.msra.mxu0 0.0
  %92 = vmatprep.subr.mxu0 0.0
  %93 = vmatpush1.msra.mxu0 0.0
  %94 = vmatprep.subr.mxu0 0.0
  %95 = vmatpush1.msra.mxu0 0.0
  %96 = vmatprep.subr.mxu0 0.0
  %97 = vmatpush1.msra.mxu0 0.0
  %98 = vmatprep.subr.mxu0 0.0
  %99 = vmatpush1.msra.mxu0 0.0
  %100 = vmatprep.subr.mxu0 0.0
  %101 = vmatpush1.msra.mxu0 0.0
  %102 = vmatprep.subr.mxu0 0.0
  %103 = vmatpush1.msra.mxu0 0.0
  %104 = vmatprep.subr.mxu0 0.0
  %105 = vmatpush1.msra.mxu0 0.0
  %106 = vmatprep.subr.mxu0 0.0
  %107 = vmatpush1.msra.mxu0 0.0
  %108 = vmatprep.subr.mxu0 0.0
  %109 = vmatpush1.msra.mxu0 0.0
  %110 = vmatprep.mubr.f32.mxu0 0.0
  %111 = vmatmul.mubr.f32.gmra.mrb[0].mxu0 %v41
  %v112 = vpop.f32.mrb[0].mxu0
  %v113 = vadd.f32 %v37, %v112
  %v114 = vpop.f32.mrb[0].mxu0
  %115 = vmatprep.mubr.f32.mxu0 0.0
  %116 = vmatmul.mubr.f32.gmra.mrb[0].mxu0 %v44
  %v117 = vpop.f32.mrb[0].mxu0
  %v118 = vadd.f32 %v37, %v117
  %v119 = vpop.f32.mrb[0].mxu0
  %120 = vdwg.mxu0
  %vm121 = vcmask 785408
  %122 = vst.msk [vmem:[#allocation3] sm:$0xff] %vm121, %v113
  %123 = vst.msk [vmem:[#allocation3 + $0x8] sm:$0xff] %vm121, %v118
  %v124 = vld [vmem:[%s3] sm:$0xff]
  %v125 = vld [vmem:[%s3 + $0x8] sm:$0xff]
  %v126 = vld [vmem:[%s3 + $0x10] sm:$0xff]
  %v127 = vld [vmem:[%s3 + $0x18] sm:$0xff]
  %v128 = vld [vmem:[%s4] sm:$0x1]
  %v129 = vld [vmem:[#allocation2] sm:$0x3]
  %v130 = vld [vmem:[#allocation3] sm:$0x3]
  %vm131 = vcmask 261120
  %v133 = vsel %vm131, %v129, 0
  %135 = vmatprep.subr.mxu0 0.0
  %136 = vmatpush1.msra.mxu0 %v124
  %137 = vmatprep.subr.mxu0 0.0
  %138 = vmatpush1.msra.mxu0 %v125
  %139 = vmatprep.subr.mxu0 0.0
  %140 = vmatpush1.msra.mxu0 %v126
  %141 = vmatprep.subr.mxu0 0.0
  %142 = vmatpush1.msra.mxu0 %v127
  %143 = vmatprep.subr.mxu0 0.0
  %144 = vmatpush1.msra.mxu0 0.0
  %145 = vmatprep.subr.mxu0 0.0
  %146 = vmatpush1.msra.mxu0 0.0
  %147 = vmatprep.subr.mxu0 0.0
  %148 = vmatpush1.msra.mxu0 0.0
  %149 = vmatprep.subr.mxu0 0.0
  %150 = vmatpush1.msra.mxu0 0.0
  %151 = vmatprep.subr.mxu0 0.0
  %152 = vmatpush1.msra.mxu0 0.0
  %153 = vmatprep.subr.mxu0 0.0
  %154 = vmatpush1.msra.mxu0 0.0
  %155 = vmatprep.subr.mxu0 0.0
  %156 = vmatpush1.msra.mxu0 0.0
  %157 = vmatprep.subr.mxu0 0.0
  %158 = vmatpush1.msra.mxu0 0.0
  %159 = vmatprep.subr.mxu0 0.0
  %160 = vmatpush1.msra.mxu0 0.0
  %161 = vmatprep.subr.mxu0 0.0
  %162 = vmatpush1.msra.mxu0 0.0
  %163 = vmatprep.subr.mxu0 0.0
  %164 = vmatpush1.msra.mxu0 0.0
  %165 = vmatprep.subr.mxu0 0.0
  %166 = vmatpush1.msra.mxu0 0.0
  %167 = vmatprep.subr.mxu0 0.0
  %168 = vmatpush1.msra.mxu0 0.0
  %169 = vmatprep.subr.mxu0 0.0
  %170 = vmatpush1.msra.mxu0 0.0
  %171 = vmatprep.subr.mxu0 0.0
  %172 = vmatpush1.msra.mxu0 0.0
  %173 = vmatprep.subr.mxu0 0.0
  %174 = vmatpush1.msra.mxu0 0.0
  %175 = vmatprep.subr.mxu0 0.0
  %176 = vmatpush1.msra.mxu0 0.0
  %177 = vmatprep.subr.mxu0 0.0
  %178 = vmatpush1.msra.mxu0 0.0
  %179 = vmatprep.subr.mxu0 0.0
  %180 = vmatpush1.msra.mxu0 0.0
  %181 = vmatprep.subr.mxu0 0.0
  %182 = vmatpush1.msra.mxu0 0.0
  %183 = vmatprep.subr.mxu0 0.0
  %184 = vmatpush1.msra.mxu0 0.0
  %185 = vmatprep.subr.mxu0 0.0
  %186 = vmatpush1.msra.mxu0 0.0
  %187 = vmatprep.subr.mxu0 0.0
  %188 = vmatpush1.msra.mxu0 0.0
  %189 = vmatprep.subr.mxu0 0.0
  %190 = vmatpush1.msra.mxu0 0.0
  %191 = vmatprep.subr.mxu0 0.0
  %192 = vmatpush1.msra.mxu0 0.0
  %193 = vmatprep.subr.mxu0 0.0
  %194 = vmatpush1.msra.mxu0 0.0
  %195 = vmatprep.subr.mxu0 0.0
  %196 = vmatpush1.msra.mxu0 0.0
  %197 = vmatprep.subr.mxu0 0.0
  %198 = vmatpush1.msra.mxu0 0.0
  %199 = vmatprep.mubr.f32.mxu0 0.0
  %200 = vmatmul.mubr.f32.gmra.mrb[0].mxu0 %v133
  %v201 = vpop.f32.mrb[0].mxu0
  %v202 = vadd.f32 0.0, %v201
  %v203 = vpop.f32.mrb[0].mxu0
  %204 = vdwg.mxu0
  %v205 = vadd.f32 %v130, %v202
  %v206 = vxor.u32 %v205, 2147483648
  %v207 = vmul.f32 %v206, 1.442695
  %v208 = vpow.pop %v207
  %v209 = vadd.f32 %v208, 1.0
  %v210 = vrcp.pop %v209
  %v211 = vmul.f32 1.0, %v210
  %v213 = vlaneseq
  %v214 = vshrl.u32 %v213, 7
  %v215 = vsub.s32 0, %v214
  %v216 = vrot.slane %v128, %v215
  %217 = vrot.lane.b32.xlu0 %v216, 64
  %v218 = vpop.permute.xlu0 %217
  %v220 = vadd.f32 %v202, %v218
  %222 = vrot.lane.b32.xlu0 %v220, 64
  %v223 = vpop.permute.xlu0 %222
  %v225 = vmul.f32 %v211, %v223
  %227 = vrot.lane.b32.xlu0 %v225, 64
  %v228 = vpop.permute.xlu0 %227
  %v230 = vadd.f32 %v130, %v228
  %v231 = vtanh.pop %v230
  %233 = vrot.lane.b32.xlu0 %v231, 64
  %v234 = vpop.permute.xlu0 %233
  %v236 = vsub.f32 %v129, %v234
  %238 = vrot.lane.b32.xlu0 %v236, 32
  %v239 = vpop.permute.xlu0 %238
  %v241 = vmul.f32 %v211, %v239
  %243 = vrot.lane.b32.xlu0 %v241, 32
  %v244 = vpop.permute.xlu0 %243
  %v246 = vadd.f32 %v231, %v244
  %248 = vrot.lane.b32.xlu0 %v246, 64
  %v249 = vpop.permute.xlu0 %248
  %vm251 = vcmask 254976
  %252 = vst.msk [vmem:[%s5] sm:$0x3] %vm251, %v249
  %v253 = vld [vmem:[#allocation3 + $0x2] sm:$0x3]
  %v254 = vsel %vm131, %v249, 0
  %256 = vmatprep.subr.mxu0 0.0
  %257 = vmatpush1.msra.mxu0 %v124
  %258 = vmatprep.subr.mxu0 0.0
  %259 = vmatpush1.msra.mxu0 %v125
  %260 = vmatprep.subr.mxu0 0.0
  %261 = vmatpush1.msra.mxu0 %v126
  %262 = vmatprep.subr.mxu0 0.0
  %263 = vmatpush1.msra.mxu0 %v127
  %264 = vmatprep.subr.mxu0 0.0
  %265 = vmatpush1.msra.mxu0 0.0
  %266 = vmatprep.subr.mxu0 0.0
  %267 = vmatpush1.msra.mxu0 0.0
  %268 = vmatprep.subr.mxu0 0.0
  %269 = vmatpush1.msra.mxu0 0.0
  %270 = vmatprep.subr.mxu0 0.0
  %271 = vmatpush1.msra.mxu0 0.0
  %272 = vmatprep.subr.mxu0 0.0
  %273 = vmatpush1.msra.mxu0 0.0
  %274 = vmatprep.subr.mxu0 0.0
  %275 = vmatpush1.msra.mxu0 0.0
  %276 = vmatprep.subr.mxu0 0.0
  %277 = vmatpush1.msra.mxu0 0.0
  %278 = vmatprep.subr.mxu0 0.0
  %279 = vmatpush1.msra.mxu0 0.0
  %280 = vmatprep.subr.mxu0 0.0
  %281 = vmatpush1.msra.mxu0 0.0
  %282 = vmatprep.subr.mxu0 0.0
  %283 = vmatpush1.msra.mxu0 0.0
  %284 = vmatprep.subr.mxu0 0.0
  %285 = vmatpush1.msra.mxu0 0.0
  %286 = vmatprep.subr.mxu0 0.0
  %287 = vmatpush1.msra.mxu0 0.0
  %288 = vmatprep.subr.mxu0 0.0
  %289 = vmatpush1.msra.mxu0 0.0
  %290 = vmatprep.subr.mxu0 0.0
  %291 = vmatpush1.msra.mxu0 0.0
  %292 = vmatprep.subr.mxu0 0.0
  %293 = vmatpush1.msra.mxu0 0.0
  %294 = vmatprep.subr.mxu0 0.0
  %295 = vmatpush1.msra.mxu0 0.0
  %296 = vmatprep.subr.mxu0 0.0
  %297 = vmatpush1.msra.mxu0 0.0
  %298 = vmatprep.subr.mxu0 0.0
  %299 = vmatpush1.msra.mxu0 0.0
  %300 = vmatprep.subr.mxu0 0.0
  %301 = vmatpush1.msra.mxu0 0.0
  %302 = vmatprep.subr.mxu0 0.0
  %303 = vmatpush1.msra.mxu0 0.0
  %304 = vmatprep.subr.mxu0 0.0
  %305 = vmatpush1.msra.mxu0 0.0
  %306 = vmatprep.subr.mxu0 0.0
  %307 = vmatpush1.msra.mxu0 0.0
  %308 = vmatprep.subr.mxu0 0.0
  %309 = vmatpush1.msra.mxu0 0.0
  %310 = vmatprep.subr.mxu0 0.0
  %311 = vmatpush1.msra.mxu0 0.0
  %312 = vmatprep.subr.mxu0 0.0
  %313 = vmatpush1.msra.mxu0 0.0
  %314 = vmatprep.subr.mxu0 0.0
  %315 = vmatpush1.msra.mxu0 0.0
  %316 = vmatprep.subr.mxu0 0.0
  %317 = vmatpush1.msra.mxu0 0.0
  %318 = vmatprep.subr.mxu0 0.0
  %319 = vmatpush1.msra.mxu0 0.0
  %320 = vmatprep.mubr.f32.mxu0 0.0
  %321 = vmatmul.mubr.f32.gmra.mrb[0].mxu0 %v254
  %v322 = vpop.f32.mrb[0].mxu0
  %v323 = vadd.f32 0.0, %v322
  %v324 = vpop.f32.mrb[0].mxu0
  %325 = vdwg.mxu0
  %v326 = vadd.f32 %v253, %v323
  %v327 = vxor.u32 %v326, 2147483648
  %v328 = vmul.f32 %v327, 1.442695
  %v329 = vpow.pop %v328
  %v330 = vadd.f32 %v329, 1.0
  %v331 = vrcp.pop %v330
  %v332 = vmul.f32 1.0, %v331
  %v333 = vadd.f32 %v323, %v218
  %335 = vrot.lane.b32.xlu0 %v333, 64
  %v336 = vpop.permute.xlu0 %335
  %v338 = vmul.f32 %v332, %v336
  %340 = vrot.lane.b32.xlu0 %v338, 64
  %v341 = vpop.permute.xlu0 %340
  %v343 = vadd.f32 %v253, %v341
  %v344 = vtanh.pop %v343
  %v345 = vsub.f32 %v246, %v344
  %347 = vrot.lane.b32.xlu0 %v345, 96
  %v348 = vpop.permute.xlu0 %347
  %v350 = vmul.f32 %v332, %v348
  %352 = vrot.lane.b32.xlu0 %v350, 32
  %v353 = vpop.permute.xlu0 %352
  %v355 = vadd.f32 %v344, %v353
  %357 = vrot.lane.b32.xlu0 %v355, 64
  %v358 = vpop.permute.xlu0 %357
  %360 = vst.msk [vmem:[%s5 + $0x2] sm:$0x3] %vm251, %v358
  %v361 = vld [vmem:[#allocation3 + $0x4] sm:$0x3]
  %v362 = vsel %vm131, %v358, 0
  %364 = vmatprep.subr.mxu0 0.0
  %365 = vmatpush1.msra.mxu0 %v124
  %366 = vmatprep.subr.mxu0 0.0
  %367 = vmatpush1.msra.mxu0 %v125
  %368 = vmatprep.subr.mxu0 0.0
  %369 = vmatpush1.msra.mxu0 %v126
  %370 = vmatprep.subr.mxu0 0.0
  %371 = vmatpush1.msra.mxu0 %v127
  %372 = vmatprep.subr.mxu0 0.0
  %373 = vmatpush1.msra.mxu0 0.0
  %374 = vmatprep.subr.mxu0 0.0
  %375 = vmatpush1.msra.mxu0 0.0
  %376 = vmatprep.subr.mxu0 0.0
  %377 = vmatpush1.msra.mxu0 0.0
  %378 = vmatprep.subr.mxu0 0.0
  %379 = vmatpush1.msra.mxu0 0.0
  %380 = vmatprep.subr.mxu0 0.0
  %381 = vmatpush1.msra.mxu0 0.0
  %382 = vmatprep.subr.mxu0 0.0
  %383 = vmatpush1.msra.mxu0 0.0
  %384 = vmatprep.subr.mxu0 0.0
  %385 = vmatpush1.msra.mxu0 0.0
  %386 = vmatprep.subr.mxu0 0.0
  %387 = vmatpush1.msra.mxu0 0.0
  %388 = vmatprep.subr.mxu0 0.0
  %389 = vmatpush1.msra.mxu0 0.0
  %390 = vmatprep.subr.mxu0 0.0
  %391 = vmatpush1.msra.mxu0 0.0
  %392 = vmatprep.subr.mxu0 0.0
  %393 = vmatpush1.msra.mxu0 0.0
  %394 = vmatprep.subr.mxu0 0.0
  %395 = vmatpush1.msra.mxu0 0.0
  %396 = vmatprep.subr.mxu0 0.0
  %397 = vmatpush1.msra.mxu0 0.0
  %398 = vmatprep.subr.mxu0 0.0
  %399 = vmatpush1.msra.mxu0 0.0
  %400 = vmatprep.subr.mxu0 0.0
  %401 = vmatpush1.msra.mxu0 0.0
  %402 = vmatprep.subr.mxu0 0.0
  %403 = vmatpush1.msra.mxu0 0.0
  %404 = vmatprep.subr.mxu0 0.0
  %405 = vmatpush1.msra.mxu0 0.0
  %406 = vmatprep.subr.mxu0 0.0
  %407 = vmatpush1.msra.mxu0 0.0
  %408 = vmatprep.subr.mxu0 0.0
  %409 = vmatpush1.msra.mxu0 0.0
  %410 = vmatprep.subr.mxu0 0.0
  %411 = vmatpush1.msra.mxu0 0.0
  %412 = vmatprep.subr.mxu0 0.0
  %413 = vmatpush1.msra.mxu0 0.0
  %414 = vmatprep.subr.mxu0 0.0
  %415 = vmatpush1.msra.mxu0 0.0
  %416 = vmatprep.subr.mxu0 0.0
  %417 = vmatpush1.msra.mxu0 0.0
  %418 = vmatprep.subr.mxu0 0.0
  %419 = vmatpush1.msra.mxu0 0.0
  %420 = vmatprep.subr.mxu0 0.0
  %421 = vmatpush1.msra.mxu0 0.0
  %422 = vmatprep.subr.mxu0 0.0
  %423 = vmatpush1.msra.mxu0 0.0
  %424 = vmatprep.subr.mxu0 0.0
  %425 = vmatpush1.msra.mxu0 0.0
  %426 = vmatprep.subr.mxu0 0.0
  %427 = vmatpush1.msra.mxu0 0.0
  %428 = vmatprep.mubr.f32.mxu0 0.0
  %429 = vmatmul.mubr.f32.gmra.mrb[0].mxu0 %v362
  %v430 = vpop.f32.mrb[0].mxu0
  %v431 = vadd.f32 0.0, %v430
  %v432 = vpop.f32.mrb[0].mxu0
  %433 = vdwg.mxu0
  %v434 = vadd.f32 %v361, %v431
  %v435 = vxor.u32 %v434, 2147483648
  %v436 = vmul.f32 %v435, 1.442695
  %v437 = vpow.pop %v436
  %v438 = vadd.f32 %v437, 1.0
  %v439 = vrcp.pop %v438
  %v440 = vmul.f32 1.0, %v439
  %v441 = vadd.f32 %v431, %v218
  %443 = vrot.lane.b32.xlu0 %v441, 64
  %v444 = vpop.permute.xlu0 %443
  %v446 = vmul.f32 %v440, %v444
  %448 = vrot.lane.b32.xlu0 %v446, 64
  %v449 = vpop.permute.xlu0 %448
  %v451 = vadd.f32 %v361, %v449
  %v452 = vtanh.pop %v451
  %v453 = vsub.f32 %v355, %v452
  %455 = vrot.lane.b32.xlu0 %v453, 96
  %v456 = vpop.permute.xlu0 %455
  %v458 = vmul.f32 %v440, %v456
  %460 = vrot.lane.b32.xlu0 %v458, 32
  %v461 = vpop.permute.xlu0 %460
  %v463 = vadd.f32 %v452, %v461
  %465 = vrot.lane.b32.xlu0 %v463, 64
  %v466 = vpop.permute.xlu0 %465
  %468 = vst.msk [vmem:[%s5 + $0x4] sm:$0x3] %vm251, %v466
  %v469 = vld [vmem:[#allocation3 + $0x6] sm:$0x3]
  %v470 = vsel %vm131, %v466, 0
  %472 = vmatprep.subr.mxu0 0.0
  %473 = vmatpush1.msra.mxu0 %v124
  %474 = vmatprep.subr.mxu0 0.0
  %475 = vmatpush1.msra.mxu0 %v125
  %476 = vmatprep.subr.mxu0 0.0
  %477 = vmatpush1.msra.mxu0 %v126
  %478 = vmatprep.subr.mxu0 0.0
  %479 = vmatpush1.msra.mxu0 %v127
  %480 = vmatprep.subr.mxu0 0.0
  %481 = vmatpush1.msra.mxu0 0.0
  %482 = vmatprep.subr.mxu0 0.0
  %483 = vmatpush1.msra.mxu0 0.0
  %484 = vmatprep.subr.mxu0 0.0
  %485 = vmatpush1.msra.mxu0 0.0
  %486 = vmatprep.subr.mxu0 0.0
  %487 = vmatpush1.msra.mxu0 0.0
  %488 = vmatprep.subr.mxu0 0.0
  %489 = vmatpush1.msra.mxu0 0.0
  %490 = vmatprep.subr.mxu0 0.0
  %491 = vmatpush1.msra.mxu0 0.0
  %492 = vmatprep.subr.mxu0 0.0
  %493 = vmatpush1.msra.mxu0 0.0
  %494 = vmatprep.subr.mxu0 0.0
  %495 = vmatpush1.msra.mxu0 0.0
  %496 = vmatprep.subr.mxu0 0.0
  %497 = vmatpush1.msra.mxu0 0.0
  %498 = vmatprep.subr.mxu0 0.0
  %499 = vmatpush1.msra.mxu0 0.0
  %500 = vmatprep.subr.mxu0 0.0
  %501 = vmatpush1.msra.mxu0 0.0
  %502 = vmatprep.subr.mxu0 0.0
  %503 = vmatpush1.msra.mxu0 0.0
  %504 = vmatprep.subr.mxu0 0.0
  %505 = vmatpush1.msra.mxu0 0.0
  %506 = vmatprep.subr.mxu0 0.0
  %507 = vmatpush1.msra.mxu0 0.0
  %508 = vmatprep.subr.mxu0 0.0
  %509 = vmatpush1.msra.mxu0 0.0
  %510 = vmatprep.subr.mxu0 0.0
  %511 = vmatpush1.msra.mxu0 0.0
  %512 = vmatprep.subr.mxu0 0.0
  %513 = vmatpush1.msra.mxu0 0.0
  %514 = vmatprep.subr.mxu0 0.0
  %515 = vmatpush1.msra.mxu0 0.0
  %516 = vmatprep.subr.mxu0 0.0
  %517 = vmatpush1.msra.mxu0 0.0
  %518 = vmatprep.subr.mxu0 0.0
  %519 = vmatpush1.msra.mxu0 0.0
  %520 = vmatprep.subr.mxu0 0.0
  %521 = vmatpush1.msra.mxu0 0.0
  %522 = vmatprep.subr.mxu0 0.0
  %523 = vmatpush1.msra.mxu0 0.0
  %524 = vmatprep.subr.mxu0 0.0
  %525 = vmatpush1.msra.mxu0 0.0
  %526 = vmatprep.subr.mxu0 0.0
  %527 = vmatpush1.msra.mxu0 0.0
  %528 = vmatprep.subr.mxu0 0.0
  %529 = vmatpush1.msra.mxu0 0.0
  %530 = vmatprep.subr.mxu0 0.0
  %531 = vmatpush1.msra.mxu0 0.0
  %532 = vmatprep.subr.mxu0 0.0
  %533 = vmatpush1.msra.mxu0 0.0
  %534 = vmatprep.subr.mxu0 0.0
  %535 = vmatpush1.msra.mxu0 0.0
  %536 = vmatprep.mubr.f32.mxu0 0.0
  %537 = vmatmul.mubr.f32.gmra.mrb[0].mxu0 %v470
  %v538 = vpop.f32.mrb[0].mxu0
  %v539 = vadd.f32 0.0, %v538
  %v540 = vpop.f32.mrb[0].mxu0
  %541 = vdwg.mxu0
  %v542 = vadd.f32 %v469, %v539
  %v543 = vxor.u32 %v542, 2147483648
  %v544 = vmul.f32 %v543, 1.442695
  %v545 = vpow.pop %v544
  %v546 = vadd.f32 %v545, 1.0
  %v547 = vrcp.pop %v546
  %v548 = vmul.f32 1.0, %v547
  %v549 = vadd.f32 %v539, %v218
  %551 = vrot.lane.b32.xlu0 %v549, 64
  %v552 = vpop.permute.xlu0 %551
  %v554 = vmul.f32 %v548, %v552
  %556 = vrot.lane.b32.xlu0 %v554, 64
  %v557 = vpop.permute.xlu0 %556
  %v559 = vadd.f32 %v469, %v557
  %v560 = vtanh.pop %v559
  %v561 = vsub.f32 %v463, %v560
  %563 = vrot.lane.b32.xlu0 %v561, 96
  %v564 = vpop.permute.xlu0 %563
  %v566 = vmul.f32 %v548, %v564
  %568 = vrot.lane.b32.xlu0 %v566, 32
  %v569 = vpop.permute.xlu0 %568
  %v571 = vadd.f32 %v560, %v569
  %573 = vrot.lane.b32.xlu0 %v571, 64
  %v574 = vpop.permute.xlu0 %573
  %576 = vst.msk [vmem:[%s5 + $0x6] sm:$0x3] %vm251, %v574
  %v577 = vld [vmem:[#allocation3 + $0x8] sm:$0x3]
  %v578 = vsel %vm131, %v574, 0
  %580 = vmatprep.subr.mxu0 0.0
  %581 = vmatpush1.msra.mxu0 %v124
  %582 = vmatprep.subr.mxu0 0.0
  %583 = vmatpush1.msra.mxu0 %v125
  %584 = vmatprep.subr.mxu0 0.0
  %585 = vmatpush1.msra.mxu0 %v126
  %586 = vmatprep.subr.mxu0 0.0
  %587 = vmatpush1.msra.mxu0 %v127
  %588 = vmatprep.subr.mxu0 0.0
  %589 = vmatpush1.msra.mxu0 0.0
  %590 = vmatprep.subr.mxu0 0.0
  %591 = vmatpush1.msra.mxu0 0.0
  %592 = vmatprep.subr.mxu0 0.0
  %593 = vmatpush1.msra.mxu0 0.0
  %594 = vmatprep.subr.mxu0 0.0
  %595 = vmatpush1.msra.mxu0 0.0
  %596 = vmatprep.subr.mxu0 0.0
  %597 = vmatpush1.msra.mxu0 0.0
  %598 = vmatprep.subr.mxu0 0.0
  %599 = vmatpush1.msra.mxu0 0.0
  %600 = vmatprep.subr.mxu0 0.0
  %601 = vmatpush1.msra.mxu0 0.0
  %602 = vmatprep.subr.mxu0 0.0
  %603 = vmatpush1.msra.mxu0 0.0
  %604 = vmatprep.subr.mxu0 0.0
  %605 = vmatpush1.msra.mxu0 0.0
  %606 = vmatprep.subr.mxu0 0.0
  %607 = vmatpush1.msra.mxu0 0.0
  %608 = vmatprep.subr.mxu0 0.0
  %609 = vmatpush1.msra.mxu0 0.0
  %610 = vmatprep.subr.mxu0 0.0
  %611 = vmatpush1.msra.mxu0 0.0
  %612 = vmatprep.subr.mxu0 0.0
  %613 = vmatpush1.msra.mxu0 0.0
  %614 = vmatprep.subr.mxu0 0.0
  %615 = vmatpush1.msra.mxu0 0.0
  %616 = vmatprep.subr.mxu0 0.0
  %617 = vmatpush1.msra.mxu0 0.0
  %618 = vmatprep.subr.mxu0 0.0
  %619 = vmatpush1.msra.mxu0 0.0
  %620 = vmatprep.subr.mxu0 0.0
  %621 = vmatpush1.msra.mxu0 0.0
  %622 = vmatprep.subr.mxu0 0.0
  %623 = vmatpush1.msra.mxu0 0.0
  %624 = vmatprep.subr.mxu0 0.0
  %625 = vmatpush1.msra.mxu0 0.0
  %626 = vmatprep.subr.mxu0 0.0
  %627 = vmatpush1.msra.mxu0 0.0
  %628 = vmatprep.subr.mxu0 0.0
  %629 = vmatpush1.msra.mxu0 0.0
  %630 = vmatprep.subr.mxu0 0.0
  %631 = vmatpush1.msra.mxu0 0.0
  %632 = vmatprep.subr.mxu0 0.0
  %633 = vmatpush1.msra.mxu0 0.0
  %634 = vmatprep.subr.mxu0 0.0
  %635 = vmatpush1.msra.mxu0 0.0
  %636 = vmatprep.subr.mxu0 0.0
  %637 = vmatpush1.msra.mxu0 0.0
  %638 = vmatprep.subr.mxu0 0.0
  %639 = vmatpush1.msra.mxu0 0.0
  %640 = vmatprep.subr.mxu0 0.0
  %641 = vmatpush1.msra.mxu0 0.0
  %642 = vmatprep.subr.mxu0 0.0
  %643 = vmatpush1.msra.mxu0 0.0
  %644 = vmatprep.mubr.f32.mxu0 0.0
  %645 = vmatmul.mubr.f32.gmra.mrb[0].mxu0 %v578
  %v646 = vpop.f32.mrb[0].mxu0
  %v647 = vadd.f32 0.0, %v646
  %v648 = vpop.f32.mrb[0].mxu0
  %649 = vdwg.mxu0
  %v650 = vadd.f32 %v577, %v647
  %v651 = vxor.u32 %v650, 2147483648
  %v652 = vmul.f32 %v651, 1.442695
  %v653 = vpow.pop %v652
  %v654 = vadd.f32 %v653, 1.0
  %v655 = vrcp.pop %v654
  %v656 = vmul.f32 1.0, %v655
  %v657 = vadd.f32 %v647, %v218
  %659 = vrot.lane.b32.xlu0 %v657, 64
  %v660 = vpop.permute.xlu0 %659
  %v662 = vmul.f32 %v656, %v660
  %664 = vrot.lane.b32.xlu0 %v662, 64
  %v665 = vpop.permute.xlu0 %664
  %v667 = vadd.f32 %v577, %v665
  %v668 = vtanh.pop %v667
  %v669 = vsub.f32 %v571, %v668
  %671 = vrot.lane.b32.xlu0 %v669, 96
  %v672 = vpop.permute.xlu0 %671
  %v674 = vmul.f32 %v656, %v672
  %676 = vrot.lane.b32.xlu0 %v674, 32
  %v677 = vpop.permute.xlu0 %676
  %v679 = vadd.f32 %v668, %v677
  %681 = vrot.lane.b32.xlu0 %v679, 64
  %v682 = vpop.permute.xlu0 %681
  %684 = vst.msk [vmem:[%s5 + $0x8] sm:$0x3] %vm251, %v682
  %v685 = vld [vmem:[#allocation3 + $0xa] sm:$0x3]
  %v686 = vsel %vm131, %v682, 0
  %688 = vmatprep.subr.mxu0 0.0
  %689 = vmatpush1.msra.mxu0 %v124
  %690 = vmatprep.subr.mxu0 0.0
  %691 = vmatpush1.msra.mxu0 %v125
  %692 = vmatprep.subr.mxu0 0.0
  %693 = vmatpush1.msra.mxu0 %v126
  %694 = vmatprep.subr.mxu0 0.0
  %695 = vmatpush1.msra.mxu0 %v127
  %696 = vmatprep.subr.mxu0 0.0
  %697 = vmatpush1.msra.mxu0 0.0
  %698 = vmatprep.subr.mxu0 0.0
  %699 = vmatpush1.msra.mxu0 0.0
  %700 = vmatprep.subr.mxu0 0.0
  %701 = vmatpush1.msra.mxu0 0.0
  %702 = vmatprep.subr.mxu0 0.0
  %703 = vmatpush1.msra.mxu0 0.0
  %704 = vmatprep.subr.mxu0 0.0
  %705 = vmatpush1.msra.mxu0 0.0
  %706 = vmatprep.subr.mxu0 0.0
  %707 = vmatpush1.msra.mxu0 0.0
  %708 = vmatprep.subr.mxu0 0.0
  %709 = vmatpush1.msra.mxu0 0.0
  %710 = vmatprep.subr.mxu0 0.0
  %711 = vmatpush1.msra.mxu0 0.0
  %712 = vmatprep.subr.mxu0 0.0
  %713 = vmatpush1.msra.mxu0 0.0
  %714 = vmatprep.subr.mxu0 0.0
  %715 = vmatpush1.msra.mxu0 0.0
  %716 = vmatprep.subr.mxu0 0.0
  %717 = vmatpush1.msra.mxu0 0.0
  %718 = vmatprep.subr.mxu0 0.0
  %719 = vmatpush1.msra.mxu0 0.0
  %720 = vmatprep.subr.mxu0 0.0
  %721 = vmatpush1.msra.mxu0 0.0
  %722 = vmatprep.subr.mxu0 0.0
  %723 = vmatpush1.msra.mxu0 0.0
  %724 = vmatprep.subr.mxu0 0.0
  %725 = vmatpush1.msra.mxu0 0.0
  %726 = vmatprep.subr.mxu0 0.0
  %727 = vmatpush1.msra.mxu0 0.0
  %728 = vmatprep.subr.mxu0 0.0
  %729 = vmatpush1.msra.mxu0 0.0
  %730 = vmatprep.subr.mxu0 0.0
  %731 = vmatpush1.msra.mxu0 0.0
  %732 = vmatprep.subr.mxu0 0.0
  %733 = vmatpush1.msra.mxu0 0.0
  %734 = vmatprep.subr.mxu0 0.0
  %735 = vmatpush1.msra.mxu0 0.0
  %736 = vmatprep.subr.mxu0 0.0
  %737 = vmatpush1.msra.mxu0 0.0
  %738 = vmatprep.subr.mxu0 0.0
  %739 = vmatpush1.msra.mxu0 0.0
  %740 = vmatprep.subr.mxu0 0.0
  %741 = vmatpush1.msra.mxu0 0.0
  %742 = vmatprep.subr.mxu0 0.0
  %743 = vmatpush1.msra.mxu0 0.0
  %744 = vmatprep.subr.mxu0 0.0
  %745 = vmatpush1.msra.mxu0 0.0
  %746 = vmatprep.subr.mxu0 0.0
  %747 = vmatpush1.msra.mxu0 0.0
  %748 = vmatprep.subr.mxu0 0.0
  %749 = vmatpush1.msra.mxu0 0.0
  %750 = vmatprep.subr.mxu0 0.0
  %751 = vmatpush1.msra.mxu0 0.0
  %752 = vmatprep.mubr.f32.mxu0 0.0
  %753 = vmatmul.mubr.f32.gmra.mrb[0].mxu0 %v686
  %v754 = vpop.f32.mrb[0].mxu0
  %v755 = vadd.f32 0.0, %v754
  %v756 = vpop.f32.mrb[0].mxu0
  %757 = vdwg.mxu0
  %v758 = vadd.f32 %v685, %v755
  %v759 = vxor.u32 %v758, 2147483648
  %v760 = vmul.f32 %v759, 1.442695
  %v761 = vpow.pop %v760
  %v762 = vadd.f32 %v761, 1.0
  %v763 = vrcp.pop %v762
  %v764 = vmul.f32 1.0, %v763
  %v765 = vadd.f32 %v755, %v218
  %767 = vrot.lane.b32.xlu0 %v765, 64
  %v768 = vpop.permute.xlu0 %767
  %v770 = vmul.f32 %v764, %v768
  %772 = vrot.lane.b32.xlu0 %v770, 64
  %v773 = vpop.permute.xlu0 %772
  %v775 = vadd.f32 %v685, %v773
  %v776 = vtanh.pop %v775
  %v777 = vsub.f32 %v679, %v776
  %779 = vrot.lane.b32.xlu0 %v777, 96
  %v780 = vpop.permute.xlu0 %779
  %v782 = vmul.f32 %v764, %v780
  %784 = vrot.lane.b32.xlu0 %v782, 32
  %v785 = vpop.permute.xlu0 %784
  %v787 = vadd.f32 %v776, %v785
  %789 = vrot.lane.b32.xlu0 %v787, 64
  %v790 = vpop.permute.xlu0 %789
  %792 = vst.msk [vmem:[%s5 + $0xa] sm:$0x3] %vm251, %v790
  %v793 = vld [vmem:[#allocation3 + $0xc] sm:$0x3]
  %v794 = vsel %vm131, %v790, 0
  %796 = vmatprep.subr.mxu0 0.0
  %797 = vmatpush1.msra.mxu0 %v124
  %798 = vmatprep.subr.mxu0 0.0
  %799 = vmatpush1.msra.mxu0 %v125
  %800 = vmatprep.subr.mxu0 0.0
  %801 = vmatpush1.msra.mxu0 %v126
  %802 = vmatprep.subr.mxu0 0.0
  %803 = vmatpush1.msra.mxu0 %v127
  %804 = vmatprep.subr.mxu0 0.0
  %805 = vmatpush1.msra.mxu0 0.0
  %806 = vmatprep.subr.mxu0 0.0
  %807 = vmatpush1.msra.mxu0 0.0
  %808 = vmatprep.subr.mxu0 0.0
  %809 = vmatpush1.msra.mxu0 0.0
  %810 = vmatprep.subr.mxu0 0.0
  %811 = vmatpush1.msra.mxu0 0.0
  %812 = vmatprep.subr.mxu0 0.0
  %813 = vmatpush1.msra.mxu0 0.0
  %814 = vmatprep.subr.mxu0 0.0
  %815 = vmatpush1.msra.mxu0 0.0
  %816 = vmatprep.subr.mxu0 0.0
  %817 = vmatpush1.msra.mxu0 0.0
  %818 = vmatprep.subr.mxu0 0.0
  %819 = vmatpush1.msra.mxu0 0.0
  %820 = vmatprep.subr.mxu0 0.0
  %821 = vmatpush1.msra.mxu0 0.0
  %822 = vmatprep.subr.mxu0 0.0
  %823 = vmatpush1.msra.mxu0 0.0
  %824 = vmatprep.subr.mxu0 0.0
  %825 = vmatpush1.msra.mxu0 0.0
  %826 = vmatprep.subr.mxu0 0.0
  %827 = vmatpush1.msra.mxu0 0.0
  %828 = vmatprep.subr.mxu0 0.0
  %829 = vmatpush1.msra.mxu0 0.0
  %830 = vmatprep.subr.mxu0 0.0
  %831 = vmatpush1.msra.mxu0 0.0
  %832 = vmatprep.subr.mxu0 0.0
  %833 = vmatpush1.msra.mxu0 0.0
  %834 = vmatprep.subr.mxu0 0.0
  %835 = vmatpush1.msra.mxu0 0.0
  %836 = vmatprep.subr.mxu0 0.0
  %837 = vmatpush1.msra.mxu0 0.0
  %838 = vmatprep.subr.mxu0 0.0
  %839 = vmatpush1.msra.mxu0 0.0
  %840 = vmatprep.subr.mxu0 0.0
  %841 = vmatpush1.msra.mxu0 0.0
  %842 = vmatprep.subr.mxu0 0.0
  %843 = vmatpush1.msra.mxu0 0.0
  %844 = vmatprep.subr.mxu0 0.0
  %845 = vmatpush1.msra.mxu0 0.0
  %846 = vmatprep.subr.mxu0 0.0
  %847 = vmatpush1.msra.mxu0 0.0
  %848 = vmatprep.subr.mxu0 0.0
  %849 = vmatpush1.msra.mxu0 0.0
  %850 = vmatprep.subr.mxu0 0.0
  %851 = vmatpush1.msra.mxu0 0.0
  %852 = vmatprep.subr.mxu0 0.0
  %853 = vmatpush1.msra.mxu0 0.0
  %854 = vmatprep.subr.mxu0 0.0
  %855 = vmatpush1.msra.mxu0 0.0
  %856 = vmatprep.subr.mxu0 0.0
  %857 = vmatpush1.msra.mxu0 0.0
  %858 = vmatprep.subr.mxu0 0.0
  %859 = vmatpush1.msra.mxu0 0.0
  %860 = vmatprep.mubr.f32.mxu0 0.0
  %861 = vmatmul.mubr.f32.gmra.mrb[0].mxu0 %v794
  %v862 = vpop.f32.mrb[0].mxu0
  %v863 = vadd.f32 0.0, %v862
  %v864 = vpop.f32.mrb[0].mxu0
  %865 = vdwg.mxu0
  %v866 = vadd.f32 %v793, %v863
  %v867 = vxor.u32 %v866, 2147483648
  %v868 = vmul.f32 %v867, 1.442695
  %v869 = vpow.pop %v868
  %v870 = vadd.f32 %v869, 1.0
  %v871 = vrcp.pop %v870
  %v872 = vmul.f32 1.0, %v871
  %v873 = vadd.f32 %v863, %v218
  %875 = vrot.lane.b32.xlu0 %v873, 64
  %v876 = vpop.permute.xlu0 %875
  %v878 = vmul.f32 %v872, %v876
  %880 = vrot.lane.b32.xlu0 %v878, 64
  %v881 = vpop.permute.xlu0 %880
  %v883 = vadd.f32 %v793, %v881
  %v884 = vtanh.pop %v883
  %v885 = vsub.f32 %v787, %v884
  %887 = vrot.lane.b32.xlu0 %v885, 96
  %v888 = vpop.permute.xlu0 %887
  %v890 = vmul.f32 %v872, %v888
  %892 = vrot.lane.b32.xlu0 %v890, 32
  %v893 = vpop.permute.xlu0 %892
  %v895 = vadd.f32 %v884, %v893
  %897 = vrot.lane.b32.xlu0 %v895, 64
  %v898 = vpop.permute.xlu0 %897
  %900 = vst.msk [vmem:[%s5 + $0xc] sm:$0x3] %vm251, %v898
  %v901 = vld [vmem:[#allocation3 + $0xe] sm:$0x3]
  %v902 = vsel %vm131, %v898, 0
  %904 = vmatprep.subr.mxu0 0.0
  %905 = vmatpush1.msra.mxu0 %v124
  %906 = vmatprep.subr.mxu0 0.0
  %907 = vmatpush1.msra.mxu0 %v125
  %908 = vmatprep.subr.mxu0 0.0
  %909 = vmatpush1.msra.mxu0 %v126
  %910 = vmatprep.subr.mxu0 0.0
  %911 = vmatpush1.msra.mxu0 %v127
  %912 = vmatprep.subr.mxu0 0.0
  %913 = vmatpush1.msra.mxu0 0.0
  %914 = vmatprep.subr.mxu0 0.0
  %915 = vmatpush1.msra.mxu0 0.0
  %916 = vmatprep.subr.mxu0 0.0
  %917 = vmatpush1.msra.mxu0 0.0
  %918 = vmatprep.subr.mxu0 0.0
  %919 = vmatpush1.msra.mxu0 0.0
  %920 = vmatprep.subr.mxu0 0.0
  %921 = vmatpush1.msra.mxu0 0.0
  %922 = vmatprep.subr.mxu0 0.0
  %923 = vmatpush1.msra.mxu0 0.0
  %924 = vmatprep.subr.mxu0 0.0
  %925 = vmatpush1.msra.mxu0 0.0
  %926 = vmatprep.subr.mxu0 0.0
  %927 = vmatpush1.msra.mxu0 0.0
  %928 = vmatprep.subr.mxu0 0.0
  %929 = vmatpush1.msra.mxu0 0.0
  %930 = vmatprep.subr.mxu0 0.0
  %931 = vmatpush1.msra.mxu0 0.0
  %932 = vmatprep.subr.mxu0 0.0
  %933 = vmatpush1.msra.mxu0 0.0
  %934 = vmatprep.subr.mxu0 0.0
  %935 = vmatpush1.msra.mxu0 0.0
  %936 = vmatprep.subr.mxu0 0.0
  %937 = vmatpush1.msra.mxu0 0.0
  %938 = vmatprep.subr.mxu0 0.0
  %939 = vmatpush1.msra.mxu0 0.0
  %940 = vmatprep.subr.mxu0 0.0
  %941 = vmatpush1.msra.mxu0 0.0
  %942 = vmatprep.subr.mxu0 0.0
  %943 = vmatpush1.msra.mxu0 0.0
  %944 = vmatprep.subr.mxu0 0.0
  %945 = vmatpush1.msra.mxu0 0.0
  %946 = vmatprep.subr.mxu0 0.0
  %947 = vmatpush1.msra.mxu0 0.0
  %948 = vmatprep.subr.mxu0 0.0
  %949 = vmatpush1.msra.mxu0 0.0
  %950 = vmatprep.subr.mxu0 0.0
  %951 = vmatpush1.msra.mxu0 0.0
  %952 = vmatprep.subr.mxu0 0.0
  %953 = vmatpush1.msra.mxu0 0.0
  %954 = vmatprep.subr.mxu0 0.0
  %955 = vmatpush1.msra.mxu0 0.0
  %956 = vmatprep.subr.mxu0 0.0
  %957 = vmatpush1.msra.mxu0 0.0
  %958 = vmatprep.subr.mxu0 0.0
  %959 = vmatpush1.msra.mxu0 0.0
  %960 = vmatprep.subr.mxu0 0.0
  %961 = vmatpush1.msra.mxu0 0.0
  %962 = vmatprep.subr.mxu0 0.0
  %963 = vmatpush1.msra.mxu0 0.0
  %964 = vmatprep.subr.mxu0 0.0
  %965 = vmatpush1.msra.mxu0 0.0
  %966 = vmatprep.subr.mxu0 0.0
  %967 = vmatpush1.msra.mxu0 0.0
  %968 = vmatprep.mubr.f32.mxu0 0.0
  %969 = vmatmul.mubr.f32.gmra.mrb[0].mxu0 %v902
  %v970 = vpop.f32.mrb[0].mxu0
  %v971 = vadd.f32 0.0, %v970
  %v972 = vpop.f32.mrb[0].mxu0
  %973 = vdwg.mxu0
  %v974 = vadd.f32 %v901, %v971
  %v975 = vxor.u32 %v974, 2147483648
  %v976 = vmul.f32 %v975, 1.442695
  %v977 = vpow.pop %v976
  %v978 = vadd.f32 %v977, 1.0
  %v979 = vrcp.pop %v978
  %v980 = vmul.f32 1.0, %v979
  %v981 = vadd.f32 %v971, %v218
  %983 = vrot.lane.b32.xlu0 %v981, 64
  %v984 = vpop.permute.xlu0 %983
  %v986 = vmul.f32 %v980, %v984
  %988 = vrot.lane.b32.xlu0 %v986, 64
  %v989 = vpop.permute.xlu0 %988
  %v991 = vadd.f32 %v901, %v989
  %v992 = vtanh.pop %v991
  %v993 = vsub.f32 %v895, %v992
  %995 = vrot.lane.b32.xlu0 %v993, 96
  %v996 = vpop.permute.xlu0 %995
  %v998 = vmul.f32 %v980, %v996
  %1000 = vrot.lane.b32.xlu0 %v998, 32
  %v1001 = vpop.permute.xlu0 %1000
  %v1003 = vadd.f32 %v992, %v1001
  %1005 = vrot.lane.b32.xlu0 %v1003, 64
  %v1006 = vpop.permute.xlu0 %1005
  %1008 = vst.msk [vmem:[%s5 + $0xe] sm:$0x3] %vm251, %v1006
  %1009 = vst.msk [vmem:[#allocation2] sm:$0x3] %vm251, %v1006
  // Predicated region
  $region26: #{rnn_forward.2} parent=0 // pred_check
    %p1010 = pneg %p22
  $region27: #{rnn_forward.2} parent=0 // pred_check_branch
    %1012 = sbr.rel (%p1010) target = $region29
  $region28: #{rnn_forward.2} parent=0 // pred_region
    %1013 = vst.msk [vmem:[%s6] sm:$0x3] %vm251, %v1006
  $region29: #{rnn_forward.2} parent=0 // pred_fallthru
    _
  // Predicated region
  $region30: #{rnn_forward.2} parent=0 // pred_check
    _
  $region31: #{rnn_forward.2} parent=0 // pred_check_branch
    %1015 = sbr.rel (0) target = $region33
  $region32: #{rnn_forward.2} parent=0 // pred_region
    _
  $region33: #{rnn_forward.2} parent=0 // pred_fallthru
    _
  // Predicated region
  $region34: #{rnn_forward.2} parent=0 // pred_check
    _
  $region35: #{rnn_forward.2} parent=0 // pred_check_branch
    %1017 = sbr.rel (0) target = $region37
  $region36: #{rnn_forward.2} parent=0 // pred_region
    _
  $region37: #{rnn_forward.2} parent=0 // pred_fallthru
    _
  // Predicated region
  $region38: #{rnn_forward.2} parent=0 // pred_check
    _
  $region39: #{rnn_forward.2} parent=0 // pred_check_branch
    %1019 = sbr.rel (0) target = $region41
  $region40: #{rnn_forward.2} parent=0 // pred_region
    _
  $region41: #{rnn_forward.2} parent=0 // pred_fallthru
    _
  // Predicated region
  $region42: #{rnn_forward.2} parent=0 // pred_check
    _
  $region43: #{rnn_forward.2} parent=0 // pred_check_branch
    %1021 = sbr.rel (0) target = $region45
  $region44: #{rnn_forward.2} parent=0 // pred_region
    _
  $region45: #{rnn_forward.2} parent=0 // pred_fallthru
    _

</llo_original>
